<compile_context>
chip_gen: v7x
topology: tpu7x:2x2x1
jax: 0.10.0
libtpu: 0.0.40
codegen_flags: <defaults>
</compile_context>

<pallas_src>
import jax
import jax.numpy as jnp
from jax.experimental import pallas as pl
from jax.experimental.pallas import tpu as pltpu


def _round_up(x, m):
    return ((x + m - 1) // m) * m


# ---------------------------------------------------------------------------
# Fused 2-layer SAGEConv kernel
# ---------------------------------------------------------------------------
def _fused_sage_kernel(a_ref, x_ref, w1l_ref, w1r_ref, b1_ref,
                       w2l_ref, w2r_ref, b2_ref, degc_ref, o_ref, hbuf):
    # grid = (2, n_k): axis 0 = phase (0: layer-1 hop, 1: layer-2 hop),
    #                  axis 1 = reduction over source-node tiles of A.
    # a_ref   : (N_pad, tk)     contiguous pre-tiled slab of raw edge COUNTS (bf16/f32)
    # x_ref   : (tk, F_in)      row tile k of node features (pinned during phase 1)
    # w*_ref  : transposed, lane-padded weights (resident blocks)
    # degc_ref: (N_pad, 1) f32  max(deg, 1), exact integers
    # o_ref   : (N_pad, c_pad)  VMEM-resident output; doubles as root-term stash / accumulator
    # hbuf    : (N_pad, c_pad)  scratch; layer-1 accumulator, then reused for H @ W2_l^T
    phase = pl.program_id(0)
    k = pl.program_id(1)
    n_k = pl.num_programs(1)
    tk = x_ref.shape[0]
    row0 = pl.multiple_of(k * tk, tk)

    n_pad = o_ref.shape[0]
    chunk = 128                       # row-chunked epilogue (bounds vreg pressure)
    n_chunks = n_pad // chunk

    # ---------------- phase 0: layer-1 hop (project-first) ----------------
    @pl.when(phase == 0)
    def _():
        @pl.when(k == 0)
        def _():
            hbuf[...] = jnp.zeros_like(hbuf)

        x_tile = x_ref[...]                                              # (tk, F_in) f32
        # project-first: A_counts @ (X @ W1_l^T) == (A_counts @ X) @ W1_l^T (linear agg)
        xproj = jnp.dot(x_tile, w1l_ref[...], preferred_element_type=jnp.float32)
        hbuf[...] += jnp.dot(a_ref[...], xproj.astype(a_ref.dtype),
                             preferred_element_type=jnp.float32)
        # stash layer-1 root term for this tile's nodes in the resident output block
        o_ref[pl.ds(row0, tk), :] = jnp.dot(x_tile, w1r_ref[...],
                                            preferred_element_type=jnp.float32)

        # ------- layer-1 finalize + layer-2 projections (row-chunked) -------
        @pl.when(k == n_k - 1)
        def _():
            @pl.loop(0, n_chunks)
            def _(c):
                rows = pl.ds(pl.multiple_of(c * chunk, chunk), chunk)
                degc = degc_ref[rows, :]                                 # exact f32 integers
                inv = 1.0 / degc                                         # exact mean scale
                h = jnp.maximum(hbuf[rows, :] * inv + o_ref[rows, :] + b1_ref[...], 0.0)
                # reuse hbuf rows in place for the layer-2 aggregation operand
                hbuf[rows, :] = jnp.dot(h, w2l_ref[...],
                                        preferred_element_type=jnp.float32)
                # layer-2 root + bias, pre-multiplied by degc so phase 1 can accumulate
                # raw (unnormalized) neighbor sums straight into o_ref.
                o_ref[rows, :] = (jnp.dot(h, w2r_ref[...],
                                          preferred_element_type=jnp.float32)
                                  + b2_ref[...]) * degc

    # ---------------- phase 1: layer-2 hop, accumulate into o_ref ----------
    @pl.when(phase == 1)
    def _():
        hp_tile = hbuf[pl.ds(row0, tk), :]
        o_ref[...] += jnp.dot(a_ref[...], hp_tile.astype(a_ref.dtype),
                              preferred_element_type=jnp.float32)

        @pl.when(k == n_k - 1)
        def _():
            @pl.loop(0, n_chunks)
            def _(c):
                rows = pl.ds(pl.multiple_of(c * chunk, chunk), chunk)
                o_ref[rows, :] = o_ref[rows, :] * (1.0 / degc_ref[rows, :])


# ---------------------------------------------------------------------------
# GNNEncoder forward (wrapper)
# ---------------------------------------------------------------------------
def gnn_encoder_forward(x, edge_index, params, *, a_dtype=jnp.bfloat16, tk=256):
    n, f_in = x.shape
    hidden = params["w1_l"].shape[0]
    f_out = params["w2_l"].shape[0]
    assert tk % 128 == 0, "tk must be a multiple of 128"

    n_pad = _round_up(n, tk)                           # node axis: multiple of tk (and 128)
    c_pad = max(_round_up(hidden, 128), _round_up(f_out, 128))   # common lane-dense width
    n_k = n_pad // tk

    # Dense adjacency as EXACT multi-edge counts (bf16 is exact for counts <= 256);
    # mean normalization applied inside the kernel with an f32 per-row 1/deg scale.
    # NOTE: correctness relies on padded rows/cols of A being all-zero (padded h rows are
    # relu(b1) != 0 but never reach real outputs because their A columns are zero).
    src, dst = edge_index[0], edge_index[1]
    a = jnp.zeros((n_pad, n_pad), jnp.float32).at[dst, src].add(1.0)
    deg = a.sum(axis=1, keepdims=True)
    degc = jnp.maximum(deg, 1.0)                       # (n_pad, 1) f32, exact integers
    # pre-tile so each grid step DMAs one contiguous (n_pad, tk) slab
    a_tiled = a.reshape(n_pad, n_k, tk).transpose(1, 0, 2).astype(a_dtype)

    x_p = jnp.zeros((n_pad, f_in), jnp.float32).at[:n, :].set(x.astype(jnp.float32))

    def pad_cols(w_t, rows):
        out = jnp.zeros((rows, c_pad), jnp.float32)
        return out.at[:w_t.shape[0], :w_t.shape[1]].set(w_t)

    w1l = pad_cols(params["w1_l"].astype(jnp.float32).T, f_in)        # (f_in, c_pad)
    w1r = pad_cols(params["w1_r"].astype(jnp.float32).T, f_in)
    b1 = jnp.zeros((1, c_pad), jnp.float32).at[0, :hidden].set(
        params["b1_l"].astype(jnp.float32))
    w2l = pad_cols(params["w2_l"].astype(jnp.float32).T, c_pad)       # (c_pad, c_pad)
    w2r = pad_cols(params["w2_r"].astype(jnp.float32).T, c_pad)
    b2 = jnp.zeros((1, c_pad), jnp.float32).at[0, :f_out].set(
        params["b2_l"].astype(jnp.float32))

    # ---- explicit VMEM budget (double-buffered tiles + resident blocks + scratch) ----
    a_bytes = jnp.dtype(a_dtype).itemsize

    def _pad2(r, c, b):
        return _round_up(r, 8) * _round_up(c, 128) * b

    vmem_est = (2 * _pad2(n_pad, tk, a_bytes)                 # A (double-buffered)
                + 2 * _pad2(tk, f_in, 4)                      # X (double-buffered)
                + 2 * (2 * _pad2(f_in, c_pad, 4)              # W1_l, W1_r
                       + 2 * _pad2(c_pad, c_pad, 4)           # W2_l, W2_r
                       + 2 * _pad2(1, c_pad, 4)               # b1, b2
                       + _pad2(n_pad, 1, 4))                  # degc
                + 2 * _pad2(n_pad, c_pad, 4)                  # resident output (slack)
                + _pad2(n_pad, c_pad, 4))                     # hbuf scratch
    vmem_limit = max(32 << 20, min(128 << 20, int(vmem_est * 1.5) + (2 << 20)))

    flops = int(4 * n_pad * n_pad * c_pad                     # two N^2 aggregations
                + 4 * n_pad * f_in * c_pad                    # X projections
                + 4 * n_pad * c_pad * c_pad)                  # H @ W2_l^T, H @ W2_r^T
    bytes_accessed = int(2 * n_pad * n_pad * a_bytes          # A streamed in both phases
                         + n_pad * f_in * 4 + n_pad * c_pad * 4 + n_pad * 4
                         + 4 * (2 * f_in * c_pad + 2 * c_pad * c_pad + 2 * c_pad))

    out = pl.pallas_call(
        _fused_sage_kernel,
        out_shape=jax.ShapeDtypeStruct((n_pad, c_pad), jnp.float32),
        grid_spec=pltpu.PrefetchScalarGridSpec(
            num_scalar_prefetch=0,
            grid=(2, n_k),
            in_specs=[
                # contiguous A slab for step k (leading pre-tile axis squeezed)
                pl.BlockSpec((None, n_pad, tk), lambda p, k: (k, 0, 0)),
                # X row tile; pinned to block 0 during phase 1 (no pointless re-fetch)
                pl.BlockSpec((tk, f_in), lambda p, k: (k * (1 - p), 0)),
                pl.BlockSpec((f_in, c_pad), lambda p, k: (0, 0)),        # W1_l^T (resident)
                pl.BlockSpec((f_in, c_pad), lambda p, k: (0, 0)),        # W1_r^T
                pl.BlockSpec((1, c_pad), lambda p, k: (0, 0)),           # b1
                pl.BlockSpec((c_pad, c_pad), lambda p, k: (0, 0)),       # W2_l^T
                pl.BlockSpec((c_pad, c_pad), lambda p, k: (0, 0)),       # W2_r^T
                pl.BlockSpec((1, c_pad), lambda p, k: (0, 0)),           # b2
                pl.BlockSpec((n_pad, 1), lambda p, k: (0, 0)),           # degc (f32, exact)
            ],
            out_specs=pl.BlockSpec((n_pad, c_pad), lambda p, k: (0, 0)),
            scratch_shapes=[
                pltpu.VMEM((n_pad, c_pad), jnp.float32),   # hbuf: layer-1 acc, reused as Hproj
            ]),
        compiler_params=pltpu.CompilerParams(
            # both grid axes carry the VMEM-resident accumulator/output -> sequential
            dimension_semantics=("arbitrary", "arbitrary"),
            vmem_limit_bytes=vmem_limit),
        cost_estimate=pl.CostEstimate(flops=flops, transcendentals=0,
                                      bytes_accessed=bytes_accessed),
    )(a_tiled, x_p, w1l, w1r, b1, w2l, w2r, b2, degc)

    return out[:n, :f_out]


# ---------------------------------------------------------------------------
# Pure-JAX reference (module semantics) for the sanity check
# ---------------------------------------------------------------------------
def gnn_encoder_ref(x, edge_index, params):
    n = x.shape[0]
    src, dst = edge_index[0], edge_index[1]
    a = jnp.zeros((n, n), jnp.float32).at[dst, src].add(1.0)
    deg = a.sum(axis=1, keepdims=True)
    a = a / jnp.maximum(deg, 1.0)
    prec = jax.lax.Precision.HIGHEST

    def layer(h, wl, wr, bl):
        agg = jnp.dot(a, h, precision=prec)
        return (jnp.dot(agg, wl.T, precision=prec)
                + jnp.dot(h, wr.T, precision=prec) + bl[None, :])

    h = jnp.maximum(layer(x, params["w1_l"], params["w1_r"], params["b1_l"]), 0.0)
    return layer(h, params["w2_l"], params["w2_r"], params["b2_l"])


if __name__ == "__main__":
    key = jax.random.PRNGKey(0)

    # Small synthetic graph (pads to 512 nodes with tk=256 -> 2 K-tiles, exercising the grid)
    num_nodes = 300
    in_channels = 8
    hidden_channels = 32
    out_channels = 16
    num_edges = 1200

    k_x, k_e1, k_e2, k1, k2, k3, k4, k5, k6 = jax.random.split(key, 9)

    x = jax.random.normal(k_x, (num_nodes, in_channels), dtype=jnp.float32)
    src = jax.random.randint(k_e1, (num_edges,), 0, num_nodes, dtype=jnp.int32)
    dst = jax.random.randint(k_e2, (num_edges,), 0, num_nodes, dtype=jnp.int32)
    edge_index = jnp.stack([src, dst], axis=0)  # [2, E]

    def init_w(k, shape, fan_in):
        lim = 1.0 / (fan_in ** 0.5)
        return jax.random.uniform(k, shape, jnp.float32, -lim, lim)

    params = {
        # SAGEConv 1: lin_l (with bias) on aggregated messages, lin_r (no bias) on root
        "w1_l": init_w(k1, (hidden_channels, in_channels), in_channels),
        "w1_r": init_w(k2, (hidden_channels, in_channels), in_channels),
        "b1_l": init_w(k3, (hidden_channels,), in_channels),
        # SAGEConv 2
        "w2_l": init_w(k4, (out_channels, hidden_channels), hidden_channels),
        "w2_r": init_w(k5, (out_channels, hidden_channels), hidden_channels),
        "b2_l": init_w(k6, (out_channels,), hidden_channels),
    }

    ref = gnn_encoder_ref(x, edge_index, params)

    # Default path: bf16 exact edge counts + in-kernel f32 1/deg rescale.
    out = jax.block_until_ready(gnn_encoder_forward(x, edge_index, params))
    assert out.shape == (num_nodes, out_channels)
    assert jnp.allclose(out, ref, atol=3e-2, rtol=3e-2), \
        float(jnp.max(jnp.abs(out - ref)))

    # f32 adjacency path: tight check.
    out_f32 = jax.block_until_ready(
        gnn_encoder_forward(x, edge_index, params, a_dtype=jnp.float32))
    assert jnp.allclose(out_f32, ref, atol=5e-3, rtol=5e-3), \
        float(jnp.max(jnp.abs(out_f32 - ref)))

    print("KERNEL_OK")
</pallas_src>

<mosaic_0001>
module attributes {stable_mosaic.version = 11 : i64} {
  func.func @_fused_sage_kernel(%arg0: i32, %arg1: i32, %arg2: memref<1x512x256xbf16, #tpu.memory_space<vmem>>, %arg3: memref<256x8xf32, #tpu.memory_space<vmem>>, %arg4: memref<8x128xf32, #tpu.memory_space<vmem>>, %arg5: memref<8x128xf32, #tpu.memory_space<vmem>>, %arg6: memref<1x128xf32, #tpu.memory_space<vmem>>, %arg7: memref<128x128xf32, #tpu.memory_space<vmem>>, %arg8: memref<128x128xf32, #tpu.memory_space<vmem>>, %arg9: memref<1x128xf32, #tpu.memory_space<vmem>>, %arg10: memref<512x1xf32, #tpu.memory_space<vmem>>, %arg11: memref<512x128xf32, #tpu.memory_space<vmem>>, %arg12: memref<512x128xf32, #tpu.memory_space<vmem>>) attributes {dimension_semantics = [#tpu.dimension_semantics<arbitrary>, #tpu.dimension_semantics<arbitrary>], iteration_bounds = array<i64: 2, 2>, scalar_prefetch = 0 : i64, scratch_operands = 1 : i64, tpu.core_type = #tpu.core_type<tc>, window_params = [{transform_indices = @transform_0, window_bounds = array<i64: 1, 512, 256>}, {transform_indices = @transform_1, window_bounds = array<i64: 256, 8>}, {pipeline_mode = #tpu.pipeline_mode<synchronous>, transform_indices = @transform_2, window_bounds = array<i64: 8, 128>}, {pipeline_mode = #tpu.pipeline_mode<synchronous>, transform_indices = @transform_3, window_bounds = array<i64: 8, 128>}, {pipeline_mode = #tpu.pipeline_mode<synchronous>, transform_indices = @transform_4, window_bounds = array<i64: 1, 128>}, {pipeline_mode = #tpu.pipeline_mode<synchronous>, transform_indices = @transform_5, window_bounds = array<i64: 128, 128>}, {pipeline_mode = #tpu.pipeline_mode<synchronous>, transform_indices = @transform_6, window_bounds = array<i64: 128, 128>}, {pipeline_mode = #tpu.pipeline_mode<synchronous>, transform_indices = @transform_7, window_bounds = array<i64: 1, 128>}, {pipeline_mode = #tpu.pipeline_mode<synchronous>, transform_indices = @transform_8, window_bounds = array<i64: 512, 1>}, {pipeline_mode = #tpu.pipeline_mode<synchronous>, transform_indices = @transform_9, window_bounds = array<i64: 512, 128>}]} {
    %c256_i32 = arith.constant 256 : i32
    %0 = arith.muli %arg1, %c256_i32 : i32
    %1 = tpu.assume_multiple %0, 256 : i32
    %c0_i32 = arith.constant 0 : i32
    %2 = arith.cmpi eq, %arg0, %c0_i32 : i32
    %3 = arith.extui %2 : i1 to i32
    %c0_i32_0 = arith.constant 0 : i32
    %4 = arith.cmpi ne, %3, %c0_i32_0 : i32
    scf.if %4 {
      %c0_i32_2 = arith.constant 0 : i32
      %8 = arith.cmpi eq, %arg1, %c0_i32_2 : i32
      %9 = arith.extui %8 : i1 to i32
      %c0_i32_3 = arith.constant 0 : i32
      %10 = arith.cmpi ne, %9, %c0_i32_3 : i32
      scf.if %10 {
        %cst_21 = arith.constant 0.000000e+00 : f32
        %28 = vector.broadcast %cst_21 : f32 to vector<512x128xf32>
        %c0_22 = arith.constant 0 : index
        %c0_23 = arith.constant 0 : index
        %29 = vector.load %arg12[%c0_22, %c0_23] : memref<512x128xf32, #tpu.memory_space<vmem>>, vector<512x128xf32>
        tpu.vector_store %arg12[%c0_22, %c0_23], %28 {strides = array<i32>} : memref<512x128xf32, #tpu.memory_space<vmem>>, vector<512x128xf32>,
      } else {
      }
      %c0 = arith.constant 0 : index
      %c0_4 = arith.constant 0 : index
      %11 = vector.load %arg3[%c0, %c0_4] : memref<256x8xf32, #tpu.memory_space<vmem>>, vector<256x8xf32>
      %c0_5 = arith.constant 0 : index
      %c0_6 = arith.constant 0 : index
      %12 = vector.load %arg4[%c0_5, %c0_6] : memref<8x128xf32, #tpu.memory_space<vmem>>, vector<8x128xf32>
      %cst = arith.constant dense<0.000000e+00> : vector<256x128xf32>
      %13 = tpu.matmul %11, %12, %cst {dimension_numbers = #tpu.dot_dimension_numbers<[1], [0], [0], [1], [0, 0, 1, 1], [], []>} : vector<256x8xf32>, vector<8x128xf32>, vector<256x128xf32> -> vector<256x128xf32>
      %c0_7 = arith.constant 0 : index
      %c0_8 = arith.constant 0 : index
      %14 = vector.load %arg12[%c0_7, %c0_8] : memref<512x128xf32, #tpu.memory_space<vmem>>, vector<512x128xf32>
      %c0_9 = arith.constant 0 : index
      %c0_10 = arith.constant 0 : index
      %c0_11 = arith.constant 0 : index
      %15 = vector.load %arg2[%c0_9, %c0_10, %c0_11] : memref<1x512x256xbf16, #tpu.memory_space<vmem>>, vector<1x512x256xbf16>
      %16 = vector.shape_cast %15 : vector<1x512x256xbf16> to vector<512x256xbf16>
      %17 = arith.truncf %13 : vector<256x128xf32> to vector<256x128xbf16>
      %cst_12 = arith.constant dense<0.000000e+00> : vector<512x128xf32>
      %18 = tpu.matmul %16, %17, %cst_12 {dimension_numbers = #tpu.dot_dimension_numbers<[1], [0], [0], [1], [0, 0, 1, 1], [], []>} : vector<512x256xbf16>, vector<256x128xbf16>, vector<512x128xf32> -> vector<512x128xf32>
      %19 = arith.addf %14, %18 : vector<512x128xf32>
      %c0_13 = arith.constant 0 : index
      %c0_14 = arith.constant 0 : index
      %20 = vector.load %arg12[%c0_13, %c0_14] : memref<512x128xf32, #tpu.memory_space<vmem>>, vector<512x128xf32>
      tpu.vector_store %arg12[%c0_13, %c0_14], %19 {strides = array<i32>} : memref<512x128xf32, #tpu.memory_space<vmem>>, vector<512x128xf32>,
      %c0_15 = arith.constant 0 : index
      %c0_16 = arith.constant 0 : index
      %21 = vector.load %arg5[%c0_15, %c0_16] : memref<8x128xf32, #tpu.memory_space<vmem>>, vector<8x128xf32>
      %cst_17 = arith.constant dense<0.000000e+00> : vector<256x128xf32>
      %22 = tpu.matmul %11, %21, %cst_17 {dimension_numbers = #tpu.dot_dimension_numbers<[1], [0], [0], [1], [0, 0, 1, 1], [], []>} : vector<256x8xf32>, vector<8x128xf32>, vector<256x128xf32> -> vector<256x128xf32>
      %23 = arith.index_cast %1 : i32 to index
      %c0_18 = arith.constant 0 : index
      %24 = vector.load %arg11[%23, %c0_18] : memref<512x128xf32, #tpu.memory_space<vmem>>, vector<256x128xf32>
      tpu.vector_store %arg11[%23, %c0_18], %22 {strides = array<i32>} : memref<512x128xf32, #tpu.memory_space<vmem>>, vector<256x128xf32>,
      %c1_i32_19 = arith.constant 1 : i32
      %25 = arith.cmpi eq, %arg1, %c1_i32_19 : i32
      %26 = arith.extui %25 : i1 to i32
      %c0_i32_20 = arith.constant 0 : i32
      %27 = arith.cmpi ne, %26, %c0_i32_20 : i32
      scf.if %27 {
        %c0_i32_21 = arith.constant 0 : i32
        %c4_i32 = arith.constant 4 : i32
        %28 = arith.addi %c0_i32_21, %c4_i32 : i32
        %c1_i32_22 = arith.constant 1 : i32
        scf.for %arg13 = %c0_i32_21 to %28 step %c1_i32_22  : i32 {
          %c1_i32_24 = arith.constant 1 : i32
          %29 = arith.muli %arg13, %c1_i32_24 : i32
          %c0_i32_25 = arith.constant 0 : i32
          %30 = arith.addi %c0_i32_25, %29 : i32
          %c128_i32 = arith.constant 128 : i32
          %31 = arith.muli %30, %c128_i32 : i32
          %32 = tpu.assume_multiple %31, 128 : i32
          %33 = arith.index_cast %32 : i32 to index
          %c0_26 = arith.constant 0 : index
          %34 = vector.load %arg10[%33, %c0_26] : memref<512x1xf32, #tpu.memory_space<vmem>>, vector<128x1xf32>
          %cst_27 = arith.constant 1.000000e+00 : f32
          %35 = vector.broadcast %cst_27 : f32 to vector<128x1xf32>
          %36 = arith.divf %35, %34 : vector<128x1xf32>
          %37 = arith.index_cast %32 : i32 to index
          %c0_28 = arith.constant 0 : index
          %38 = vector.load %arg12[%37, %c0_28] : memref<512x128xf32, #tpu.memory_space<vmem>>, vector<128x128xf32>
          %39 = vector.broadcast %36 : vector<128x1xf32> to vector<128x128xf32>
          %40 = arith.mulf %38, %39 : vector<128x128xf32>
          %41 = arith.index_cast %32 : i32 to index
          %c0_29 = arith.constant 0 : index
          %42 = vector.load %arg11[%41, %c0_29] : memref<512x128xf32, #tpu.memory_space<vmem>>, vector<128x128xf32>
          %43 = arith.addf %40, %42 : vector<128x128xf32>
          %c0_30 = arith.constant 0 : index
          %c0_31 = arith.constant 0 : index
          %44 = vector.load %arg6[%c0_30, %c0_31] : memref<1x128xf32, #tpu.memory_space<vmem>>, vector<1x128xf32>
          %45 = vector.broadcast %44 : vector<1x128xf32> to vector<128x128xf32>
          %46 = arith.addf %43, %45 : vector<128x128xf32>
          %cst_32 = arith.constant 0.000000e+00 : f32
          %47 = vector.broadcast %cst_32 : f32 to vector<128x128xf32>
          %48 = arith.maximumf %46, %47 : vector<128x128xf32>
          %c0_33 = arith.constant 0 : index
          %c0_34 = arith.constant 0 : index
          %49 = vector.load %arg7[%c0_33, %c0_34] : memref<128x128xf32, #tpu.memory_space<vmem>>, vector<128x128xf32>
          %cst_35 = arith.constant dense<0.000000e+00> : vector<128x128xf32>
          %50 = tpu.matmul %48, %49, %cst_35 {dimension_numbers = #tpu.dot_dimension_numbers<[1], [0], [0], [1], [0, 0, 1, 1], [], []>} : vector<128x128xf32>, vector<128x128xf32>, vector<128x128xf32> -> vector<128x128xf32>
          %51 = arith.index_cast %32 : i32 to index
          %c0_36 = arith.constant 0 : index
          %52 = vector.load %arg12[%51, %c0_36] : memref<512x128xf32, #tpu.memory_space<vmem>>, vector<128x128xf32>
          tpu.vector_store %arg12[%51, %c0_36], %50 {strides = array<i32>} : memref<512x128xf32, #tpu.memory_space<vmem>>, vector<128x128xf32>,
          %c0_37 = arith.constant 0 : index
          %c0_38 = arith.constant 0 : index
          %53 = vector.load %arg8[%c0_37, %c0_38] : memref<128x128xf32, #tpu.memory_space<vmem>>, vector<128x128xf32>
          %cst_39 = arith.constant dense<0.000000e+00> : vector<128x128xf32>
          %54 = tpu.matmul %48, %53, %cst_39 {dimension_numbers = #tpu.dot_dimension_numbers<[1], [0], [0], [1], [0, 0, 1, 1], [], []>} : vector<128x128xf32>, vector<128x128xf32>, vector<128x128xf32> -> vector<128x128xf32>
          %c0_40 = arith.constant 0 : index
          %c0_41 = arith.constant 0 : index
          %55 = vector.load %arg9[%c0_40, %c0_41] : memref<1x128xf32, #tpu.memory_space<vmem>>, vector<1x128xf32>
          %56 = vector.broadcast %55 : vector<1x128xf32> to vector<128x128xf32>
          %57 = arith.addf %54, %56 : vector<128x128xf32>
          %58 = vector.broadcast %34 : vector<128x1xf32> to vector<128x128xf32>
          %59 = arith.mulf %57, %58 : vector<128x128xf32>
          %60 = arith.index_cast %32 : i32 to index
          %c0_42 = arith.constant 0 : index
          %61 = vector.load %arg11[%60, %c0_42] : memref<512x128xf32, #tpu.memory_space<vmem>>, vector<128x128xf32>
          tpu.vector_store %arg11[%60, %c0_42], %59 {strides = array<i32>} : memref<512x128xf32, #tpu.memory_space<vmem>>, vector<128x128xf32>,
        }
        %c4_i32_23 = arith.constant 4 : i32
      } else {
      }
    } else {
    }
    %c1_i32 = arith.constant 1 : i32
    %5 = arith.cmpi eq, %arg0, %c1_i32 : i32
    %6 = arith.extui %5 : i1 to i32
    %c0_i32_1 = arith.constant 0 : i32
    %7 = arith.cmpi ne, %6, %c0_i32_1 : i32
    scf.if %7 {
      %8 = arith.index_cast %1 : i32 to index
      %c0 = arith.constant 0 : index
      %9 = vector.load %arg12[%8, %c0] : memref<512x128xf32, #tpu.memory_space<vmem>>, vector<256x128xf32>
      %c0_2 = arith.constant 0 : index
      %c0_3 = arith.constant 0 : index
      %10 = vector.load %arg11[%c0_2, %c0_3] : memref<512x128xf32, #tpu.memory_space<vmem>>, vector<512x128xf32>
      %c0_4 = arith.constant 0 : index
      %c0_5 = arith.constant 0 : index
      %c0_6 = arith.constant 0 : index
      %11 = vector.load %arg2[%c0_4, %c0_5, %c0_6] : memref<1x512x256xbf16, #tpu.memory_space<vmem>>, vector<1x512x256xbf16>
      %12 = vector.shape_cast %11 : vector<1x512x256xbf16> to vector<512x256xbf16>
      %13 = arith.truncf %9 : vector<256x128xf32> to vector<256x128xbf16>
      %cst = arith.constant dense<0.000000e+00> : vector<512x128xf32>
      %14 = tpu.matmul %12, %13, %cst {dimension_numbers = #tpu.dot_dimension_numbers<[1], [0], [0], [1], [0, 0, 1, 1], [], []>} : vector<512x256xbf16>, vector<256x128xbf16>, vector<512x128xf32> -> vector<512x128xf32>
      %15 = arith.addf %10, %14 : vector<512x128xf32>
      %c0_7 = arith.constant 0 : index
      %c0_8 = arith.constant 0 : index
      %16 = vector.load %arg11[%c0_7, %c0_8] : memref<512x128xf32, #tpu.memory_space<vmem>>, vector<512x128xf32>
      tpu.vector_store %arg11[%c0_7, %c0_8], %15 {strides = array<i32>} : memref<512x128xf32, #tpu.memory_space<vmem>>, vector<512x128xf32>,
      %c1_i32_9 = arith.constant 1 : i32
      %17 = arith.cmpi eq, %arg1, %c1_i32_9 : i32
      %18 = arith.extui %17 : i1 to i32
      %c0_i32_10 = arith.constant 0 : i32
      %19 = arith.cmpi ne, %18, %c0_i32_10 : i32
      scf.if %19 {
        %c0_i32_11 = arith.constant 0 : i32
        %c4_i32 = arith.constant 4 : i32
        %20 = arith.addi %c0_i32_11, %c4_i32 : i32
        %c1_i32_12 = arith.constant 1 : i32
        scf.for %arg13 = %c0_i32_11 to %20 step %c1_i32_12  : i32 {
          %c1_i32_14 = arith.constant 1 : i32
          %21 = arith.muli %arg13, %c1_i32_14 : i32
          %c0_i32_15 = arith.constant 0 : i32
          %22 = arith.addi %c0_i32_15, %21 : i32
          %c128_i32 = arith.constant 128 : i32
          %23 = arith.muli %22, %c128_i32 : i32
          %24 = tpu.assume_multiple %23, 128 : i32
          %25 = arith.index_cast %24 : i32 to index
          %c0_16 = arith.constant 0 : index
          %26 = vector.load %arg11[%25, %c0_16] : memref<512x128xf32, #tpu.memory_space<vmem>>, vector<128x128xf32>
          %27 = arith.index_cast %24 : i32 to index
          %c0_17 = arith.constant 0 : index
          %28 = vector.load %arg10[%27, %c0_17] : memref<512x1xf32, #tpu.memory_space<vmem>>, vector<128x1xf32>
          %cst_18 = arith.constant 1.000000e+00 : f32
          %29 = vector.broadcast %cst_18 : f32 to vector<128x1xf32>
          %30 = arith.divf %29, %28 : vector<128x1xf32>
          %31 = vector.broadcast %30 : vector<128x1xf32> to vector<128x128xf32>
          %32 = arith.mulf %26, %31 : vector<128x128xf32>
          %33 = arith.index_cast %24 : i32 to index
          %c0_19 = arith.constant 0 : index
          %34 = vector.load %arg11[%33, %c0_19] : memref<512x128xf32, #tpu.memory_space<vmem>>, vector<128x128xf32>
          tpu.vector_store %arg11[%33, %c0_19], %32 {strides = array<i32>} : memref<512x128xf32, #tpu.memory_space<vmem>>, vector<128x128xf32>,
        }
        %c4_i32_13 = arith.constant 4 : i32
      } else {
      }
    } else {
    }
    return
  }
  func.func @transform_0(%arg0: i32, %arg1: i32) -> (i32, i32, i32) {
    %c0_i32 = arith.constant 0 : i32
    %c0_i32_0 = arith.constant 0 : i32
    %c0_i32_1 = arith.constant 0 : i32
    return %arg1, %c0_i32, %c0_i32_0 : i32, i32, i32
  }
  func.func @transform_1(%arg0: i32, %arg1: i32) -> (i32, i32) {
    %c1_i32 = arith.constant 1 : i32
    %0 = arith.subi %c1_i32, %arg0 : i32
    %1 = arith.muli %arg1, %0 : i32
    %c0_i32 = arith.constant 0 : i32
    %c0_i32_0 = arith.constant 0 : i32
    return %1, %c0_i32 : i32, i32
  }
  func.func @transform_2(%arg0: i32, %arg1: i32) -> (i32, i32) {
    %c0_i32 = arith.constant 0 : i32
    %c0_i32_0 = arith.constant 0 : i32
    %c0_i32_1 = arith.constant 0 : i32
    return %c0_i32, %c0_i32_0 : i32, i32
  }
  func.func @transform_3(%arg0: i32, %arg1: i32) -> (i32, i32) {
    %c0_i32 = arith.constant 0 : i32
    %c0_i32_0 = arith.constant 0 : i32
    %c0_i32_1 = arith.constant 0 : i32
    return %c0_i32, %c0_i32_0 : i32, i32
  }
  func.func @transform_4(%arg0: i32, %arg1: i32) -> (i32, i32) {
    %c0_i32 = arith.constant 0 : i32
    %c0_i32_0 = arith.constant 0 : i32
    %c0_i32_1 = arith.constant 0 : i32
    return %c0_i32, %c0_i32_0 : i32, i32
  }
  func.func @transform_5(%arg0: i32, %arg1: i32) -> (i32, i32) {
    %c0_i32 = arith.constant 0 : i32
    %c0_i32_0 = arith.constant 0 : i32
    %c0_i32_1 = arith.constant 0 : i32
    return %c0_i32, %c0_i32_0 : i32, i32
  }
  func.func @transform_6(%arg0: i32, %arg1: i32) -> (i32, i32) {
    %c0_i32 = arith.constant 0 : i32
    %c0_i32_0 = arith.constant 0 : i32
    %c0_i32_1 = arith.constant 0 : i32
    return %c0_i32, %c0_i32_0 : i32, i32
  }
  func.func @transform_7(%arg0: i32, %arg1: i32) -> (i32, i32) {
    %c0_i32 = arith.constant 0 : i32
    %c0_i32_0 = arith.constant 0 : i32
    %c0_i32_1 = arith.constant 0 : i32
    return %c0_i32, %c0_i32_0 : i32, i32
  }
  func.func @transform_8(%arg0: i32, %arg1: i32) -> (i32, i32) {
    %c0_i32 = arith.constant 0 : i32
    %c0_i32_0 = arith.constant 0 : i32
    %c0_i32_1 = arith.constant 0 : i32
    return %c0_i32, %c0_i32_0 : i32, i32
  }
  func.func @transform_9(%arg0: i32, %arg1: i32) -> (i32, i32) {
    %c0_i32 = arith.constant 0 : i32
    %c0_i32_0 = arith.constant 0 : i32
    %c0_i32_1 = arith.constant 0 : i32
    return %c0_i32, %c0_i32_0 : i32, i32
  }
}

</mosaic_0001>

<llo_original>
// kernel: tpu_custom_call.1
$region0: #{tpu_custom_call.1}
  #allocation0 [shape = 'u32[]', space=smem, size = 0x4, offset = 0x4, fixed_abs, tag = 'smem constant byte address 0x4 - core index']
  #allocation1 [shape = 'u32[144,128]{1,0:T(1,128)}', space=vmem, size = 0x12000, scoped, tag = 'internal scratch']
  #allocation2 [shape = 'f32[512,128]{1,0:T(8,128)}', space=vmem, size = 0x40000, scoped, tag = 'scratch operand']
  %s0 = inlined_call_operand.vmem [shape: bf16[2,512,256], index: 0, kind: input, shape index: {}]
  %s1 = inlined_call_operand.vmem [shape: f32[512,8], index: 1, kind: input, shape index: {}]
  %s2 = inlined_call_operand.vmem [shape: f32[8,128], index: 2, kind: input, shape index: {}]
  %s3 = inlined_call_operand.vmem [shape: f32[8,128], index: 3, kind: input, shape index: {}]
  %s4 = inlined_call_operand.vmem [shape: f32[1,128], index: 4, kind: input, shape index: {}]
  %s5 = inlined_call_operand.hbm [shape: f32[128,128], index: 5, kind: input, shape index: {}]
  %s6 = inlined_call_operand.hbm [shape: f32[128,128], index: 6, kind: input, shape index: {}]
  %s7 = inlined_call_operand.vmem [shape: f32[1,128], index: 7, kind: input, shape index: {}]
  %s8 = inlined_call_operand.vmem [shape: f32[512,1], index: 8, kind: input, shape index: {}]
  %s9 = inlined_call_operand.hbm [shape: f32[512,128], index: 9, kind: output, shape index: {}]
  %s10 = sld [smem:[#allocation0]]
  $region111: #{tpu_custom_call.1} parent=0
    _
  %s12 = ssub.s32 1, %s10
  %s13 = scalar_select 0, %s12, %s10
  $region1: #{tpu_custom_call.1} parent=0
    #allocation3 [shape = 'u8[65536]{0}', space=vmem, size = 0x10000, scoped, tag = 'input window, operand 5, single buffered']
    #allocation4 [shape = 's32[2]{0}', space=sflag, size = 0x8, scoped, tag = 'scoped memory for tpu_custom_call.1']
    #allocation5 [shape = 's32[2]{0}', space=sflag, size = 0x8, scoped, tag = 'scoped memory for tpu_custom_call.1']
    #allocation6 [shape = 'u8[65536]{0}', space=vmem, size = 0x10000, scoped, tag = 'input window, operand 6, single buffered']
    #allocation7 [shape = 's32[1]{0}', space=sflag, size = 0x4, scoped, tag = 'scoped memory for tpu_custom_call.1']
    #allocation8 [shape = 'u8[262144]{0}', space=vmem, size = 0x40000, scoped, tag = 'output window, operand 0, single buffered']
    %14 = vsyncpa [#allocation4], 0
    %15 = vsyncpa [#allocation7], 0
    %16 = vsyncpa [#allocation5], 0
    loop: start=0, step=1, limit=6
    $region2: #{tpu_custom_call.1} parent=1 // loop_pre_header
      _
    $region3: #{tpu_custom_call.1} parent=1 // loop_header
      %s18 = sphi 0, %s22
      %p19 = scmp.ge.s32.totalorder %s18, 6
      %s25 = sphi 0, %s37
      %s26 = sphi 0, %s33
      %s27 = sphi 0, %s25
      %s28 = sphi 0, %s26
      %s29 = sphi 0, %s27
      %s30 = sphi 0, %s28
      %s40 = sphi 0, %s42
      %s43 = sphi 0, %s40
      %s44 = sphi 0, %s43
      %s60 = sphi 0, %s44
      %s70 = sphi 0, %s72
      %s73 = sphi 0, %s70
      %s74 = sphi 0, %s73
      %s90 = sphi 0, %s74
      %s94 = sphi 0, %s94
      %s96 = sphi 0, %s94
      %s97 = sphi 0, %s96
      %s111 = sphi 0, %s97
      %s115 = sphi 0, %s115
      %s117 = sphi 0, %s115
      %s118 = sphi 0, %s117
      %s132 = sphi 0, %s118
      %s136 = sphi 0, %s136
      %s138 = sphi 0, %s136
      %s139 = sphi 0, %s138
      %s153 = sphi 0, %s139
      %s157 = sphi 0, %s157
      %s159 = sphi 0, %s157
      %s160 = sphi 0, %s159
      %s174 = sphi 0, %s160
      %s178 = sphi 0, %s178
      %s180 = sphi 0, %s178
      %s181 = sphi 0, %s180
      %s195 = sphi 0, %s181
      %s199 = sphi 0, %s199
      %s201 = sphi 0, %s199
      %s202 = sphi 0, %s201
      %s216 = sphi 0, %s202
      %s220 = sphi 0, %s220
      %s222 = sphi 0, %s220
      %s223 = sphi 0, %s222
      %s237 = sphi 0, %s223
      %s241 = sphi 0, %s241
      %s243 = sphi 0, %s241
      %s244 = sphi 0, %s243
      %s258 = sphi 0, %s244
    $region4: #{tpu_custom_call.1} parent=1 // loop_header_branch
      %21 = sbr.rel (%p19) target = $region8
    $region5: #{tpu_custom_call.1} parent=1 // loop_body
      %s23 = ssub.s32 %s18, 1
      %s24 = ssub.s32 %s18, 2
      %s31 = sadd.s32 1, %s26
      %p32 = scmp.ge.s32.totalorder %s31, 2
      %s33 = scalar_select %p32, 0, %s31
      %s34 = sadd.s32 1, %s25
      %s35 = scalar_select %p32, %s34, %s25
      %p36 = scmp.ge.s32.totalorder %s35, 2
      %s37 = scalar_select %p36, 0, %s35
      %s38 = ssub.s32 %s26, %s33
      %p39 = scmp.eq.s32.totalorder %s38, 0
      %s41 = sadd.s32 %s40, 1
      %s42 = scalar_select %p39, %s40, %s41
      %p45 = pneg %p39
      %p46 = scmp.eq.s32.totalorder %s18, 3
      %p47 = por %p45, %p46
      %p48 = scmp.ne.s32.totalorder %s40, %s43
      %p49 = scmp.eq.s32.totalorder %s18, 0
      %p50 = por %p48, %p49
      %p51 = scmp.ne.s32.totalorder %s40, %s43
      %p52 = scmp.eq.s32.totalorder %s23, 3
      %p53 = por %p51, %p52
      %p54 = scmp.ne.s32.totalorder %s43, %s44
      %p55 = scmp.eq.s32.totalorder %s23, 0
      %p56 = por %p54, %p55
      %p57 = scmp.ne.s32.totalorder %s43, %s44
      %p58 = scmp.eq.s32.totalorder %s24, 3
      %p59 = por %p57, %p58
      %p61 = scmp.ne.s32.totalorder %s44, %s60
      %p62 = scmp.eq.s32.totalorder %s24, 0
      %p63 = por %p61, %p62
      %s64 = ssub.s32 1, %s25
      %s65 = smul.u32 %s26, %s64
      %s66 = ssub.s32 1, %s37
      %s67 = smul.u32 %s33, %s66
      %s68 = ssub.s32 %s65, %s67
      %p69 = scmp.eq.s32.totalorder %s68, 0
      %s71 = sadd.s32 %s70, 1
      %s72 = scalar_select %p69, %s70, %s71
      %p75 = pneg %p69
      %p76 = scmp.eq.s32.totalorder %s18, 3
      %p77 = por %p75, %p76
      %p78 = scmp.ne.s32.totalorder %s70, %s73
      %p79 = scmp.eq.s32.totalorder %s18, 0
      %p80 = por %p78, %p79
      %p81 = scmp.ne.s32.totalorder %s70, %s73
      %p82 = scmp.eq.s32.totalorder %s23, 3
      %p83 = por %p81, %p82
      %p84 = scmp.ne.s32.totalorder %s73, %s74
      %p85 = scmp.eq.s32.totalorder %s23, 0
      %p86 = por %p84, %p85
      %p87 = scmp.ne.s32.totalorder %s73, %s74
      %p88 = scmp.eq.s32.totalorder %s24, 3
      %p89 = por %p87, %p88
      %p91 = scmp.ne.s32.totalorder %s74, %s90
      %p92 = scmp.eq.s32.totalorder %s24, 0
      %p93 = por %p91, %p92
      %s95 = sadd.s32 %s94, 1
      %p98 = scmp.eq.s32.totalorder %s18, 3
      %p99 = scmp.ne.s32.totalorder %s94, %s96
      %p100 = scmp.eq.s32.totalorder %s18, 0
      %p101 = por %p99, %p100
      %p102 = scmp.ne.s32.totalorder %s94, %s96
      %p103 = scmp.eq.s32.totalorder %s23, 3
      %p104 = por %p102, %p103
      %p105 = scmp.ne.s32.totalorder %s96, %s97
      %p106 = scmp.eq.s32.totalorder %s23, 0
      %p107 = por %p105, %p106
      %p108 = scmp.ne.s32.totalorder %s96, %s97
      %p109 = scmp.eq.s32.totalorder %s24, 3
      %p110 = por %p108, %p109
      %p112 = scmp.ne.s32.totalorder %s97, %s111
      %p113 = scmp.eq.s32.totalorder %s24, 0
      %p114 = por %p112, %p113
      %s116 = sadd.s32 %s115, 1
      %p119 = scmp.eq.s32.totalorder %s18, 3
      %p120 = scmp.ne.s32.totalorder %s115, %s117
      %p121 = scmp.eq.s32.totalorder %s18, 0
      %p122 = por %p120, %p121
      %p123 = scmp.ne.s32.totalorder %s115, %s117
      %p124 = scmp.eq.s32.totalorder %s23, 3
      %p125 = por %p123, %p124
      %p126 = scmp.ne.s32.totalorder %s117, %s118
      %p127 = scmp.eq.s32.totalorder %s23, 0
      %p128 = por %p126, %p127
      %p129 = scmp.ne.s32.totalorder %s117, %s118
      %p130 = scmp.eq.s32.totalorder %s24, 3
      %p131 = por %p129, %p130
      %p133 = scmp.ne.s32.totalorder %s118, %s132
      %p134 = scmp.eq.s32.totalorder %s24, 0
      %p135 = por %p133, %p134
      %s137 = sadd.s32 %s136, 1
      %p140 = scmp.eq.s32.totalorder %s18, 3
      %p141 = scmp.ne.s32.totalorder %s136, %s138
      %p142 = scmp.eq.s32.totalorder %s18, 0
      %p143 = por %p141, %p142
      %p144 = scmp.ne.s32.totalorder %s136, %s138
      %p145 = scmp.eq.s32.totalorder %s23, 3
      %p146 = por %p144, %p145
      %p147 = scmp.ne.s32.totalorder %s138, %s139
      %p148 = scmp.eq.s32.totalorder %s23, 0
      %p149 = por %p147, %p148
      %p150 = scmp.ne.s32.totalorder %s138, %s139
      %p151 = scmp.eq.s32.totalorder %s24, 3
      %p152 = por %p150, %p151
      %p154 = scmp.ne.s32.totalorder %s139, %s153
      %p155 = scmp.eq.s32.totalorder %s24, 0
      %p156 = por %p154, %p155
      %s158 = sadd.s32 %s157, 1
      %p161 = scmp.eq.s32.totalorder %s18, 3
      %p162 = scmp.ne.s32.totalorder %s157, %s159
      %p163 = scmp.eq.s32.totalorder %s18, 0
      %p164 = por %p162, %p163
      %p165 = scmp.ne.s32.totalorder %s157, %s159
      %p166 = scmp.eq.s32.totalorder %s23, 3
      %p167 = por %p165, %p166
      %p168 = scmp.ne.s32.totalorder %s159, %s160
      %p169 = scmp.eq.s32.totalorder %s23, 0
      %p170 = por %p168, %p169
      %p171 = scmp.ne.s32.totalorder %s159, %s160
      %p172 = scmp.eq.s32.totalorder %s24, 3
      %p173 = por %p171, %p172
      %p175 = scmp.ne.s32.totalorder %s160, %s174
      %p176 = scmp.eq.s32.totalorder %s24, 0
      %p177 = por %p175, %p176
      %s179 = sadd.s32 %s178, 1
      %p182 = scmp.eq.s32.totalorder %s18, 3
      %p183 = scmp.ne.s32.totalorder %s178, %s180
      %p184 = scmp.eq.s32.totalorder %s18, 0
      %p185 = por %p183, %p184
      %p186 = scmp.ne.s32.totalorder %s178, %s180
      %p187 = scmp.eq.s32.totalorder %s23, 3
      %p188 = por %p186, %p187
      %p189 = scmp.ne.s32.totalorder %s180, %s181
      %p190 = scmp.eq.s32.totalorder %s23, 0
      %p191 = por %p189, %p190
      %p192 = scmp.ne.s32.totalorder %s180, %s181
      %p193 = scmp.eq.s32.totalorder %s24, 3
      %p194 = por %p192, %p193
      %p196 = scmp.ne.s32.totalorder %s181, %s195
      %p197 = scmp.eq.s32.totalorder %s24, 0
      %p198 = por %p196, %p197
      %s200 = sadd.s32 %s199, 1
      %p203 = scmp.eq.s32.totalorder %s18, 3
      %p204 = scmp.ne.s32.totalorder %s199, %s201
      %p205 = scmp.eq.s32.totalorder %s18, 0
      %p206 = por %p204, %p205
      %p207 = scmp.ne.s32.totalorder %s199, %s201
      %p208 = scmp.eq.s32.totalorder %s23, 3
      %p209 = por %p207, %p208
      %p210 = scmp.ne.s32.totalorder %s201, %s202
      %p211 = scmp.eq.s32.totalorder %s23, 0
      %p212 = por %p210, %p211
      %p213 = scmp.ne.s32.totalorder %s201, %s202
      %p214 = scmp.eq.s32.totalorder %s24, 3
      %p215 = por %p213, %p214
      %p217 = scmp.ne.s32.totalorder %s202, %s216
      %p218 = scmp.eq.s32.totalorder %s24, 0
      %p219 = por %p217, %p218
      %s221 = sadd.s32 %s220, 1
      %p224 = scmp.eq.s32.totalorder %s18, 3
      %p225 = scmp.ne.s32.totalorder %s220, %s222
      %p226 = scmp.eq.s32.totalorder %s18, 0
      %p227 = por %p225, %p226
      %p228 = scmp.ne.s32.totalorder %s220, %s222
      %p229 = scmp.eq.s32.totalorder %s23, 3
      %p230 = por %p228, %p229
      %p231 = scmp.ne.s32.totalorder %s222, %s223
      %p232 = scmp.eq.s32.totalorder %s23, 0
      %p233 = por %p231, %p232
      %p234 = scmp.ne.s32.totalorder %s222, %s223
      %p235 = scmp.eq.s32.totalorder %s24, 3
      %p236 = por %p234, %p235
      %p238 = scmp.ne.s32.totalorder %s223, %s237
      %p239 = scmp.eq.s32.totalorder %s24, 0
      %p240 = por %p238, %p239
      %s242 = sadd.s32 %s241, 1
      %p245 = scmp.eq.s32.totalorder %s18, 3
      %p246 = scmp.ne.s32.totalorder %s241, %s243
      %p247 = scmp.eq.s32.totalorder %s18, 0
      %p248 = por %p246, %p247
      %p249 = scmp.ne.s32.totalorder %s241, %s243
      %p250 = scmp.eq.s32.totalorder %s23, 3
      %p251 = por %p249, %p250
      %p252 = scmp.ne.s32.totalorder %s243, %s244
      %p253 = scmp.eq.s32.totalorder %s23, 0
      %p254 = por %p252, %p253
      %p255 = scmp.ne.s32.totalorder %s243, %s244
      %p256 = scmp.eq.s32.totalorder %s24, 3
      %p257 = por %p255, %p256
      %p259 = scmp.ne.s32.totalorder %s244, %s258
      %p260 = scmp.eq.s32.totalorder %s24, 0
      %p261 = por %p259, %p260
      %p262 = scmp.le.s32.totalorder 1, %s18
      %p263 = scmp.lt.s32.totalorder %s18, 5
      %p264 = pnand %p262, %p263
      %p265 = pneg %p264
      // Predicated region
      $region9: #{tpu_custom_call.1} parent=5 // pred_check
        _
      $region10: #{tpu_custom_call.1} parent=5 // pred_check_branch
        %267 = sbr.rel (%p264) target = $region12
      $region11: #{tpu_custom_call.1} parent=5 // pred_region
        %s268 = ssub.s32 %s18, 1
        // Predicated region
        $region13: #{tpu_custom_call.1} parent=11 // pred_check
          %p269 = pneg %p107
        $region14: #{tpu_custom_call.1} parent=11 // pred_check_branch
          %271 = sbr.rel (%p269) target = $region16
        $region15: #{tpu_custom_call.1} parent=11 // pred_region
          _
        $region16: #{tpu_custom_call.1} parent=11 // pred_fallthru
          _
        // Predicated region
        $region17: #{tpu_custom_call.1} parent=11 // pred_check
          %p272 = pneg %p128
        $region18: #{tpu_custom_call.1} parent=11 // pred_check_branch
          %274 = sbr.rel (%p272) target = $region20
        $region19: #{tpu_custom_call.1} parent=11 // pred_region
          _
        $region20: #{tpu_custom_call.1} parent=11 // pred_fallthru
          _
        // Predicated region
        $region21: #{tpu_custom_call.1} parent=11 // pred_check
          %p275 = pneg %p149
        $region22: #{tpu_custom_call.1} parent=11 // pred_check_branch
          %277 = sbr.rel (%p275) target = $region24
        $region23: #{tpu_custom_call.1} parent=11 // pred_region
          _
        $region24: #{tpu_custom_call.1} parent=11 // pred_fallthru
          _
        // Predicated region
        $region25: #{tpu_custom_call.1} parent=11 // pred_check
          %p278 = pneg %p170
        $region26: #{tpu_custom_call.1} parent=11 // pred_check_branch
          %280 = sbr.rel (%p278) target = $region28
        $region27: #{tpu_custom_call.1} parent=11 // pred_region
          %s282 = ssub.s32 2048, 2048
          %283 = vsyncadd [#allocation4], %s282
          %s284 = sshll.u32 [#allocation3], 4
          %s285 = int_to_ptr.vmem [resolvable:$true] %s284
          %290 = dma.hbm_to_vmem [thread:$0]  %s5, 2048, %s285, [#allocation4], 128, 128, 8
        $region28: #{tpu_custom_call.1} parent=11 // pred_fallthru
          _
        // Predicated region
        $region29: #{tpu_custom_call.1} parent=11 // pred_check
          %p291 = pneg %p191
        $region30: #{tpu_custom_call.1} parent=11 // pred_check_branch
          %293 = sbr.rel (%p291) target = $region32
        $region31: #{tpu_custom_call.1} parent=11 // pred_region
          %s295 = ssub.s32 2048, 2048
          %296 = vsyncadd [#allocation7], %s295
          %s297 = sshll.u32 [#allocation6], 4
          %s298 = int_to_ptr.vmem [resolvable:$true] %s297
          %303 = dma.hbm_to_vmem [thread:$0]  %s6, 2048, %s298, [#allocation7], 128, 128, 8
        $region32: #{tpu_custom_call.1} parent=11 // pred_fallthru
          _
        // Predicated region
        $region33: #{tpu_custom_call.1} parent=11 // pred_check
          %p304 = pneg %p212
        $region34: #{tpu_custom_call.1} parent=11 // pred_check_branch
          %306 = sbr.rel (%p304) target = $region36
        $region35: #{tpu_custom_call.1} parent=11 // pred_region
          _
        $region36: #{tpu_custom_call.1} parent=11 // pred_fallthru
          _
        // Predicated region
        $region37: #{tpu_custom_call.1} parent=11 // pred_check
          %p307 = pneg %p233
        $region38: #{tpu_custom_call.1} parent=11 // pred_check_branch
          %309 = sbr.rel (%p307) target = $region40
        $region39: #{tpu_custom_call.1} parent=11 // pred_region
          _
        $region40: #{tpu_custom_call.1} parent=11 // pred_fallthru
          _
      $region12: #{tpu_custom_call.1} parent=5 // pred_fallthru
        _
      %p310 = scmp.lt.s32.totalorder %s18, 4
      // Predicated region
      $region41: #{tpu_custom_call.1} parent=5 // pred_check
        %p311 = pneg %p310
      $region42: #{tpu_custom_call.1} parent=5 // pred_check_branch
        %313 = sbr.rel (%p311) target = $region44
      $region43: #{tpu_custom_call.1} parent=5 // pred_region
        // Predicated region
        $region45: #{tpu_custom_call.1} parent=43 // pred_check
          %p314 = pneg %p50
        $region46: #{tpu_custom_call.1} parent=43 // pred_check_branch
          %316 = sbr.rel (%p314) target = $region48
        $region47: #{tpu_custom_call.1} parent=43 // pred_region
          %p317 = scmp.lt.s32.totalorder %s26, 1
          %s318 = scalar_select %p317, %s26, 1
          %s319 = smul.addr %s318, 128
          %s320 = smul.addr %s319, 4
          %s321 = scalar_lea.vmem %s0, %s320
        $region48: #{tpu_custom_call.1} parent=43 // pred_fallthru
          _
        // Predicated region
        $region49: #{tpu_custom_call.1} parent=43 // pred_check
          %p322 = pneg %p80
        $region50: #{tpu_custom_call.1} parent=43 // pred_check_branch
          %324 = sbr.rel (%p322) target = $region52
        $region51: #{tpu_custom_call.1} parent=43 // pred_region
          %s325 = ssub.s32 1, %s25
          %s326 = smul.u32 %s26, %s325
          %s327 = smul.u32 32, %s326
          %p328 = scmp.lt.s32.totalorder %s327, 63
          %s329 = scalar_select %p328, %s327, 63
          %s330 = smul.addr %s329, 8
          %s331 = scalar_lea.vmem %s1, %s330
          %s332 = ssub.s32 1, %s25
          %s333 = smul.u32 %s26, %s332
          %s334 = smul.u32 32, %s333
        $region52: #{tpu_custom_call.1} parent=43 // pred_fallthru
          _
      $region44: #{tpu_custom_call.1} parent=5 // pred_fallthru
        _
      %p335 = scmp.le.s32.totalorder 1, %s18
      %p336 = scmp.lt.s32.totalorder %s18, 5
      %p337 = pnand %p335, %p336
      %p338 = pneg %p337
      // Predicated region
      $region53: #{tpu_custom_call.1} parent=5 // pred_check
        _
      $region54: #{tpu_custom_call.1} parent=5 // pred_check_branch
        %340 = sbr.rel (%p337) target = $region56
      $region55: #{tpu_custom_call.1} parent=5 // pred_region
        %s341 = ssub.s32 %s18, 1
        // Predicated region
        $region57: #{tpu_custom_call.1} parent=55 // pred_check
          %p342 = pneg %p170
        $region58: #{tpu_custom_call.1} parent=55 // pred_check_branch
          %344 = sbr.rel (%p342) target = $region60
        $region59: #{tpu_custom_call.1} parent=55 // pred_region
          %345 = dma.done [#allocation4], 2048
        $region60: #{tpu_custom_call.1} parent=55 // pred_fallthru
          _
        // Predicated region
        $region61: #{tpu_custom_call.1} parent=55 // pred_check
          %p346 = pneg %p191
        $region62: #{tpu_custom_call.1} parent=55 // pred_check_branch
          %348 = sbr.rel (%p346) target = $region64
        $region63: #{tpu_custom_call.1} parent=55 // pred_region
          %349 = dma.done [#allocation7], 2048
        $region64: #{tpu_custom_call.1} parent=55 // pred_fallthru
          _
        %p350 = scmp.lt.s32.totalorder %s28, 1
        %s351 = scalar_select %p350, %s28, 1
        %s352 = smul.addr %s351, 128
        %s353 = smul.addr %s352, 4
        %s354 = scalar_lea.vmem %s0, %s353
        %p355 = pneg %p56
        %p356 = pneg %p53
        %s357 = ssub.s32 1, %s27
        %s358 = smul.u32 %s28, %s357
        %s359 = smul.u32 32, %s358
        %p360 = scmp.lt.s32.totalorder %s359, 63
        %s361 = scalar_select %p360, %s359, 63
        %s362 = smul.addr %s361, 8
        %s363 = scalar_lea.vmem %s1, %s362
        %p364 = pneg %p86
        %p365 = pneg %p83
        %p366 = pneg %p107
        %p367 = pneg %p104
        %p368 = pneg %p128
        %p369 = pneg %p125
        %p370 = pneg %p149
        %p371 = pneg %p146
        %p372 = pneg %p170
        %p373 = pneg %p167
        %p374 = pneg %p191
        %p375 = pneg %p188
        %p376 = pneg %p212
        %p377 = pneg %p209
        %p378 = pneg %p233
        %p379 = pneg %p230
        %p380 = pneg %p254
        %p381 = pneg %p251
        %p382 = scmp.lt.s32.totalorder %s28, 1
        %s383 = scalar_select %p382, %s28, 1
        %s384 = smul.addr %s383, 128
        %s385 = smul.addr %s384, 4
        %s386 = scalar_lea.vmem %s0, %s385
        %s387 = ssub.s32 1, %s27
        %s388 = smul.u32 %s28, %s387
        %s389 = smul.u32 32, %s388
        %p390 = scmp.lt.s32.totalorder %s389, 63
        %s391 = scalar_select %p390, %s389, 63
        %s392 = smul.addr %s391, 8
        %s393 = scalar_lea.vmem %s1, %s392
        %s394 = ssub.s32 1, %s27
        %s395 = smul.u32 %s28, %s394
        %s396 = smul.u32 32, %s395
        %s398 = smul.u32 %s28, 256
        %p399 = scmp.eq.s32.totalorder %s27, 0
        // Predicated region
        $region65: #{tpu_custom_call.1} parent=55 // pred_check
          %p400 = pneg %p399
        $region66: #{tpu_custom_call.1} parent=55 // pred_check_branch
          %402 = sbr.rel (%p400) target = $region68
        $region67: #{tpu_custom_call.1} parent=55 // pred_region
          %p403 = scmp.eq.s32.totalorder %s28, 0
          // Predicated region
          $region69: #{tpu_custom_call.1} parent=67 // pred_check
            %p404 = pneg %p403
          $region70: #{tpu_custom_call.1} parent=67 // pred_check_branch
            %406 = sbr.rel (%p404) target = $region72
          $region71: #{tpu_custom_call.1} parent=67 // pred_region
            %407 = vst [vmem:[#allocation2] sm:$0xff] 0.0
            %408 = vst [vmem:[#allocation2 + $0x8] sm:$0xff] 0.0
            %409 = vst [vmem:[#allocation2 + $0x10] sm:$0xff] 0.0
            %410 = vst [vmem:[#allocation2 + $0x18] sm:$0xff] 0.0
            %411 = vst [vmem:[#allocation2 + $0x20] sm:$0xff] 0.0
            %412 = vst [vmem:[#allocation2 + $0x28] sm:$0xff] 0.0
            %413 = vst [vmem:[#allocation2 + $0x30] sm:$0xff] 0.0
            %414 = vst [vmem:[#allocation2 + $0x38] sm:$0xff] 0.0
            %415 = vst [vmem:[#allocation2 + $0x40] sm:$0xff] 0.0
            %416 = vst [vmem:[#allocation2 + $0x48] sm:$0xff] 0.0
            %417 = vst [vmem:[#allocation2 + $0x50] sm:$0xff] 0.0
            %418 = vst [vmem:[#allocation2 + $0x58] sm:$0xff] 0.0
            %419 = vst [vmem:[#allocation2 + $0x60] sm:$0xff] 0.0
            %420 = vst [vmem:[#allocation2 + $0x68] sm:$0xff] 0.0
            %421 = vst [vmem:[#allocation2 + $0x70] sm:$0xff] 0.0
            %422 = vst [vmem:[#allocation2 + $0x78] sm:$0xff] 0.0
            %423 = vst [vmem:[#allocation2 + $0x80] sm:$0xff] 0.0
            %424 = vst [vmem:[#allocation2 + $0x88] sm:$0xff] 0.0
            %425 = vst [vmem:[#allocation2 + $0x90] sm:$0xff] 0.0
            %426 = vst [vmem:[#allocation2 + $0x98] sm:$0xff] 0.0
            %427 = vst [vmem:[#allocation2 + $0xa0] sm:$0xff] 0.0
            %428 = vst [vmem:[#allocation2 + $0xa8] sm:$0xff] 0.0
            %429 = vst [vmem:[#allocation2 + $0xb0] sm:$0xff] 0.0
            %430 = vst [vmem:[#allocation2 + $0xb8] sm:$0xff] 0.0
            %431 = vst [vmem:[#allocation2 + $0xc0] sm:$0xff] 0.0
            %432 = vst [vmem:[#allocation2 + $0xc8] sm:$0xff] 0.0
            %433 = vst [vmem:[#allocation2 + $0xd0] sm:$0xff] 0.0
            %434 = vst [vmem:[#allocation2 + $0xd8] sm:$0xff] 0.0
            %435 = vst [vmem:[#allocation2 + $0xe0] sm:$0xff] 0.0
            %436 = vst [vmem:[#allocation2 + $0xe8] sm:$0xff] 0.0
            %437 = vst [vmem:[#allocation2 + $0xf0] sm:$0xff] 0.0
            %438 = vst [vmem:[#allocation2 + $0xf8] sm:$0xff] 0.0
            %439 = vst [vmem:[#allocation2 + $0x100] sm:$0xff] 0.0
            %440 = vst [vmem:[#allocation2 + $0x108] sm:$0xff] 0.0
            %441 = vst [vmem:[#allocation2 + $0x110] sm:$0xff] 0.0
            %442 = vst [vmem:[#allocation2 + $0x118] sm:$0xff] 0.0
            %443 = vst [vmem:[#allocation2 + $0x120] sm:$0xff] 0.0
            %444 = vst [vmem:[#allocation2 + $0x128] sm:$0xff] 0.0
            %445 = vst [vmem:[#allocation2 + $0x130] sm:$0xff] 0.0
            %446 = vst [vmem:[#allocation2 + $0x138] sm:$0xff] 0.0
            %447 = vst [vmem:[#allocation2 + $0x140] sm:$0xff] 0.0
            %448 = vst [vmem:[#allocation2 + $0x148] sm:$0xff] 0.0
            %449 = vst [vmem:[#allocation2 + $0x150] sm:$0xff] 0.0
            %450 = vst [vmem:[#allocation2 + $0x158] sm:$0xff] 0.0
            %451 = vst [vmem:[#allocation2 + $0x160] sm:$0xff] 0.0
            %452 = vst [vmem:[#allocation2 + $0x168] sm:$0xff] 0.0
            %453 = vst [vmem:[#allocation2 + $0x170] sm:$0xff] 0.0
            %454 = vst [vmem:[#allocation2 + $0x178] sm:$0xff] 0.0
            %455 = vst [vmem:[#allocation2 + $0x180] sm:$0xff] 0.0
            %456 = vst [vmem:[#allocation2 + $0x188] sm:$0xff] 0.0
            %457 = vst [vmem:[#allocation2 + $0x190] sm:$0xff] 0.0
            %458 = vst [vmem:[#allocation2 + $0x198] sm:$0xff] 0.0
            %459 = vst [vmem:[#allocation2 + $0x1a0] sm:$0xff] 0.0
            %460 = vst [vmem:[#allocation2 + $0x1a8] sm:$0xff] 0.0
            %461 = vst [vmem:[#allocation2 + $0x1b0] sm:$0xff] 0.0
            %462 = vst [vmem:[#allocation2 + $0x1b8] sm:$0xff] 0.0
            %463 = vst [vmem:[#allocation2 + $0x1c0] sm:$0xff] 0.0
            %464 = vst [vmem:[#allocation2 + $0x1c8] sm:$0xff] 0.0
            %465 = vst [vmem:[#allocation2 + $0x1d0] sm:$0xff] 0.0
            %466 = vst [vmem:[#allocation2 + $0x1d8] sm:$0xff] 0.0
            %467 = vst [vmem:[#allocation2 + $0x1e0] sm:$0xff] 0.0
            %468 = vst [vmem:[#allocation2 + $0x1e8] sm:$0xff] 0.0
            %469 = vst [vmem:[#allocation2 + $0x1f0] sm:$0xff] 0.0
            %470 = vst [vmem:[#allocation2 + $0x1f8] sm:$0xff] 0.0
          $region72: #{tpu_custom_call.1} parent=67 // pred_fallthru
            _
          %v471 = vld [vmem:[%s393] sm:$0xff]
          %v472 = vld [vmem:[%s393 + $0x8] sm:$0xff]
          %v473 = vld [vmem:[%s393 + $0x10] sm:$0xff]
          %v474 = vld [vmem:[%s393 + $0x18] sm:$0xff]
          %v475 = vld [vmem:[%s393 + $0x20] sm:$0xff]
          %v476 = vld [vmem:[%s393 + $0x28] sm:$0xff]
          %v477 = vld [vmem:[%s393 + $0x30] sm:$0xff]
          %v478 = vld [vmem:[%s393 + $0x38] sm:$0xff]
          %v479 = vld [vmem:[%s393 + $0x40] sm:$0xff]
          %v480 = vld [vmem:[%s393 + $0x48] sm:$0xff]
          %v481 = vld [vmem:[%s393 + $0x50] sm:$0xff]
          %v482 = vld [vmem:[%s393 + $0x58] sm:$0xff]
          %v483 = vld [vmem:[%s393 + $0x60] sm:$0xff]
          %v484 = vld [vmem:[%s393 + $0x68] sm:$0xff]
          %v485 = vld [vmem:[%s393 + $0x70] sm:$0xff]
          %v486 = vld [vmem:[%s393 + $0x78] sm:$0xff]
          %v487 = vld [vmem:[%s393 + $0x80] sm:$0xff]
          %v488 = vld [vmem:[%s393 + $0x88] sm:$0xff]
          %v489 = vld [vmem:[%s393 + $0x90] sm:$0xff]
          %v490 = vld [vmem:[%s393 + $0x98] sm:$0xff]
          %v491 = vld [vmem:[%s393 + $0xa0] sm:$0xff]
          %v492 = vld [vmem:[%s393 + $0xa8] sm:$0xff]
          %v493 = vld [vmem:[%s393 + $0xb0] sm:$0xff]
          %v494 = vld [vmem:[%s393 + $0xb8] sm:$0xff]
          %v495 = vld [vmem:[%s393 + $0xc0] sm:$0xff]
          %v496 = vld [vmem:[%s393 + $0xc8] sm:$0xff]
          %v497 = vld [vmem:[%s393 + $0xd0] sm:$0xff]
          %v498 = vld [vmem:[%s393 + $0xd8] sm:$0xff]
          %v499 = vld [vmem:[%s393 + $0xe0] sm:$0xff]
          %v500 = vld [vmem:[%s393 + $0xe8] sm:$0xff]
          %v501 = vld [vmem:[%s393 + $0xf0] sm:$0xff]
          %v502 = vld [vmem:[%s393 + $0xf8] sm:$0xff]
          %v503 = vld [vmem:[%s2] sm:$0xff]
          %vm504 = vcmask 64512
          %v506 = vsel %vm504, %v471, 0
          %v509 = vsel %vm504, %v472, 0
          %v512 = vsel %vm504, %v473, 0
          %v515 = vsel %vm504, %v474, 0
          %v518 = vsel %vm504, %v475, 0
          %v521 = vsel %vm504, %v476, 0
          %v524 = vsel %vm504, %v477, 0
          %v527 = vsel %vm504, %v478, 0
          %v530 = vsel %vm504, %v479, 0
          %v533 = vsel %vm504, %v480, 0
          %v536 = vsel %vm504, %v481, 0
          %v539 = vsel %vm504, %v482, 0
          %v542 = vsel %vm504, %v483, 0
          %v545 = vsel %vm504, %v484, 0
          %v548 = vsel %vm504, %v485, 0
          %v551 = vsel %vm504, %v486, 0
          %v554 = vsel %vm504, %v487, 0
          %v557 = vsel %vm504, %v488, 0
          %v560 = vsel %vm504, %v489, 0
          %v563 = vsel %vm504, %v490, 0
          %v566 = vsel %vm504, %v491, 0
          %v569 = vsel %vm504, %v492, 0
          %v572 = vsel %vm504, %v493, 0
          %v575 = vsel %vm504, %v494, 0
          %v578 = vsel %vm504, %v495, 0
          %v581 = vsel %vm504, %v496, 0
          %v584 = vsel %vm504, %v497, 0
          %v587 = vsel %vm504, %v498, 0
          %v590 = vsel %vm504, %v499, 0
          %v593 = vsel %vm504, %v500, 0
          %v596 = vsel %vm504, %v501, 0
          %v599 = vsel %vm504, %v502, 0
          %601 = vmatprep.subr.mxu0 0.0
          %602 = vmatpush1.msra.mxu0 %v503
          %603 = vmatprep.subr.mxu0 0.0
          %604 = vmatpush1.msra.mxu0 0.0
          %605 = vmatprep.subr.mxu0 0.0
          %606 = vmatpush1.msra.mxu0 0.0
          %607 = vmatprep.subr.mxu0 0.0
          %608 = vmatpush1.msra.mxu0 0.0
          %609 = vmatprep.subr.mxu0 0.0
          %610 = vmatpush1.msra.mxu0 0.0
          %611 = vmatprep.subr.mxu0 0.0
          %612 = vmatpush1.msra.mxu0 0.0
          %613 = vmatprep.subr.mxu0 0.0
          %614 = vmatpush1.msra.mxu0 0.0
          %615 = vmatprep.subr.mxu0 0.0
          %616 = vmatpush1.msra.mxu0 0.0
          %617 = vmatprep.subr.mxu0 0.0
          %618 = vmatpush1.msra.mxu0 0.0
          %619 = vmatprep.subr.mxu0 0.0
          %620 = vmatpush1.msra.mxu0 0.0
          %621 = vmatprep.subr.mxu0 0.0
          %622 = vmatpush1.msra.mxu0 0.0
          %623 = vmatprep.subr.mxu0 0.0
          %624 = vmatpush1.msra.mxu0 0.0
          %625 = vmatprep.subr.mxu0 0.0
          %626 = vmatpush1.msra.mxu0 0.0
          %627 = vmatprep.subr.mxu0 0.0
          %628 = vmatpush1.msra.mxu0 0.0
          %629 = vmatprep.subr.mxu0 0.0
          %630 = vmatpush1.msra.mxu0 0.0
          %631 = vmatprep.subr.mxu0 0.0
          %632 = vmatpush1.msra.mxu0 0.0
          %633 = vmatprep.subr.mxu0 0.0
          %634 = vmatpush1.msra.mxu0 0.0
          %635 = vmatprep.subr.mxu0 0.0
          %636 = vmatpush1.msra.mxu0 0.0
          %637 = vmatprep.subr.mxu0 0.0
          %638 = vmatpush1.msra.mxu0 0.0
          %639 = vmatprep.subr.mxu0 0.0
          %640 = vmatpush1.msra.mxu0 0.0
          %641 = vmatprep.subr.mxu0 0.0
          %642 = vmatpush1.msra.mxu0 0.0
          %643 = vmatprep.subr.mxu0 0.0
          %644 = vmatpush1.msra.mxu0 0.0
          %645 = vmatprep.subr.mxu0 0.0
          %646 = vmatpush1.msra.mxu0 0.0
          %647 = vmatprep.subr.mxu0 0.0
          %648 = vmatpush1.msra.mxu0 0.0
          %649 = vmatprep.subr.mxu0 0.0
          %650 = vmatpush1.msra.mxu0 0.0
          %651 = vmatprep.subr.mxu0 0.0
          %652 = vmatpush1.msra.mxu0 0.0
          %653 = vmatprep.subr.mxu0 0.0
          %654 = vmatpush1.msra.mxu0 0.0
          %655 = vmatprep.subr.mxu0 0.0
          %656 = vmatpush1.msra.mxu0 0.0
          %657 = vmatprep.subr.mxu0 0.0
          %658 = vmatpush1.msra.mxu0 0.0
          %659 = vmatprep.subr.mxu0 0.0
          %660 = vmatpush1.msra.mxu0 0.0
          %661 = vmatprep.subr.mxu0 0.0
          %662 = vmatpush1.msra.mxu0 0.0
          %663 = vmatprep.subr.mxu0 0.0
          %664 = vmatpush1.msra.mxu0 0.0
          %665 = vmatprep.mubr.f32.mxu0 0.0
          %666 = vmatmul.mubr.f32.gmra.mrb[0].mxu0 %v506
          %v667 = vpop.f32.mrb[0].mxu0
          %v668 = vadd.f32 0.0, %v667
          %v669 = vpop.f32.mrb[0].mxu0
          %670 = vmatprep.mubr.f32.mxu0 0.0
          %671 = vmatmul.mubr.f32.gmra.mrb[0].mxu0 %v509
          %v672 = vpop.f32.mrb[0].mxu0
          %v673 = vadd.f32 0.0, %v672
          %v674 = vpop.f32.mrb[0].mxu0
          %675 = vmatprep.mubr.f32.mxu0 0.0
          %676 = vmatmul.mubr.f32.gmra.mrb[0].mxu0 %v512
          %v677 = vpop.f32.mrb[0].mxu0
          %v678 = vadd.f32 0.0, %v677
          %v679 = vpop.f32.mrb[0].mxu0
          %680 = vmatprep.mubr.f32.mxu0 0.0
          %681 = vmatmul.mubr.f32.gmra.mrb[0].mxu0 %v515
          %v682 = vpop.f32.mrb[0].mxu0
          %v683 = vadd.f32 0.0, %v682
          %v684 = vpop.f32.mrb[0].mxu0
          %685 = vmatprep.mubr.f32.mxu0 0.0
          %686 = vmatmul.mubr.f32.gmra.mrb[0].mxu0 %v518
          %v687 = vpop.f32.mrb[0].mxu0
          %v688 = vadd.f32 0.0, %v687
          %v689 = vpop.f32.mrb[0].mxu0
          %690 = vmatprep.mubr.f32.mxu0 0.0
          %691 = vmatmul.mubr.f32.gmra.mrb[0].mxu0 %v521
          %v692 = vpop.f32.mrb[0].mxu0
          %v693 = vadd.f32 0.0, %v692
          %v694 = vpop.f32.mrb[0].mxu0
          %695 = vmatprep.mubr.f32.mxu0 0.0
          %696 = vmatmul.mubr.f32.gmra.mrb[0].mxu0 %v524
          %v697 = vpop.f32.mrb[0].mxu0
          %v698 = vadd.f32 0.0, %v697
          %v699 = vpop.f32.mrb[0].mxu0
          %700 = vmatprep.mubr.f32.mxu0 0.0
          %701 = vmatmul.mubr.f32.gmra.mrb[0].mxu0 %v527
          %v702 = vpop.f32.mrb[0].mxu0
          %v703 = vadd.f32 0.0, %v702
          %v704 = vpop.f32.mrb[0].mxu0
          %705 = vmatprep.mubr.f32.mxu0 0.0
          %706 = vmatmul.mubr.f32.gmra.mrb[0].mxu0 %v530
          %v707 = vpop.f32.mrb[0].mxu0
          %v708 = vadd.f32 0.0, %v707
          %v709 = vpop.f32.mrb[0].mxu0
          %710 = vmatprep.mubr.f32.mxu0 0.0
          %711 = vmatmul.mubr.f32.gmra.mrb[0].mxu0 %v533
          %v712 = vpop.f32.mrb[0].mxu0
          %v713 = vadd.f32 0.0, %v712
          %v714 = vpop.f32.mrb[0].mxu0
          %715 = vmatprep.mubr.f32.mxu0 0.0
          %716 = vmatmul.mubr.f32.gmra.mrb[0].mxu0 %v536
          %v717 = vpop.f32.mrb[0].mxu0
          %v718 = vadd.f32 0.0, %v717
          %v719 = vpop.f32.mrb[0].mxu0
          %720 = vmatprep.mubr.f32.mxu0 0.0
          %721 = vmatmul.mubr.f32.gmra.mrb[0].mxu0 %v539
          %v722 = vpop.f32.mrb[0].mxu0
          %v723 = vadd.f32 0.0, %v722
          %v724 = vpop.f32.mrb[0].mxu0
          %725 = vmatprep.mubr.f32.mxu0 0.0
          %726 = vmatmul.mubr.f32.gmra.mrb[0].mxu0 %v542
          %v727 = vpop.f32.mrb[0].mxu0
          %v728 = vadd.f32 0.0, %v727
          %v729 = vpop.f32.mrb[0].mxu0
          %730 = vmatprep.mubr.f32.mxu0 0.0
          %731 = vmatmul.mubr.f32.gmra.mrb[0].mxu0 %v545
          %v732 = vpop.f32.mrb[0].mxu0
          %v733 = vadd.f32 0.0, %v732
          %v734 = vpop.f32.mrb[0].mxu0
          %735 = vmatprep.mubr.f32.mxu0 0.0
          %736 = vmatmul.mubr.f32.gmra.mrb[0].mxu0 %v548
          %v737 = vpop.f32.mrb[0].mxu0
          %v738 = vadd.f32 0.0, %v737
          %v739 = vpop.f32.mrb[0].mxu0
          %740 = vmatprep.mubr.f32.mxu0 0.0
          %741 = vmatmul.mubr.f32.gmra.mrb[0].mxu0 %v551
          %v742 = vpop.f32.mrb[0].mxu0
          %v743 = vadd.f32 0.0, %v742
          %v744 = vpop.f32.mrb[0].mxu0
          %745 = vmatprep.mubr.f32.mxu0 0.0
          %746 = vmatmul.mubr.f32.gmra.mrb[0].mxu0 %v554
          %v747 = vpop.f32.mrb[0].mxu0
          %v748 = vadd.f32 0.0, %v747
          %v749 = vpop.f32.mrb[0].mxu0
          %750 = vmatprep.mubr.f32.mxu0 0.0
          %751 = vmatmul.mubr.f32.gmra.mrb[0].mxu0 %v557
          %v752 = vpop.f32.mrb[0].mxu0
          %v753 = vadd.f32 0.0, %v752
          %v754 = vpop.f32.mrb[0].mxu0
          %755 = vmatprep.mubr.f32.mxu0 0.0
          %756 = vmatmul.mubr.f32.gmra.mrb[0].mxu0 %v560
          %v757 = vpop.f32.mrb[0].mxu0
          %v758 = vadd.f32 0.0, %v757
          %v759 = vpop.f32.mrb[0].mxu0
          %760 = vmatprep.mubr.f32.mxu0 0.0
          %761 = vmatmul.mubr.f32.gmra.mrb[0].mxu0 %v563
          %v762 = vpop.f32.mrb[0].mxu0
          %v763 = vadd.f32 0.0, %v762
          %v764 = vpop.f32.mrb[0].mxu0
          %765 = vmatprep.mubr.f32.mxu0 0.0
          %766 = vmatmul.mubr.f32.gmra.mrb[0].mxu0 %v566
          %v767 = vpop.f32.mrb[0].mxu0
          %v768 = vadd.f32 0.0, %v767
          %v769 = vpop.f32.mrb[0].mxu0
          %770 = vmatprep.mubr.f32.mxu0 0.0
          %771 = vmatmul.mubr.f32.gmra.mrb[0].mxu0 %v569
          %v772 = vpop.f32.mrb[0].mxu0
          %v773 = vadd.f32 0.0, %v772
          %v774 = vpop.f32.mrb[0].mxu0
          %775 = vmatprep.mubr.f32.mxu0 0.0
          %776 = vmatmul.mubr.f32.gmra.mrb[0].mxu0 %v572
          %v777 = vpop.f32.mrb[0].mxu0
          %v778 = vadd.f32 0.0, %v777
          %v779 = vpop.f32.mrb[0].mxu0
          %780 = vmatprep.mubr.f32.mxu0 0.0
          %781 = vmatmul.mubr.f32.gmra.mrb[0].mxu0 %v575
          %v782 = vpop.f32.mrb[0].mxu0
          %v783 = vadd.f32 0.0, %v782
          %v784 = vpop.f32.mrb[0].mxu0
          %785 = vmatprep.mubr.f32.mxu0 0.0
          %786 = vmatmul.mubr.f32.gmra.mrb[0].mxu0 %v578
          %v787 = vpop.f32.mrb[0].mxu0
          %v788 = vadd.f32 0.0, %v787
          %v789 = vpop.f32.mrb[0].mxu0
          %790 = vmatprep.mubr.f32.mxu0 0.0
          %791 = vmatmul.mubr.f32.gmra.mrb[0].mxu0 %v581
          %v792 = vpop.f32.mrb[0].mxu0
          %v793 = vadd.f32 0.0, %v792
          %v794 = vpop.f32.mrb[0].mxu0
          %795 = vmatprep.mubr.f32.mxu0 0.0
          %796 = vmatmul.mubr.f32.gmra.mrb[0].mxu0 %v584
          %v797 = vpop.f32.mrb[0].mxu0
          %v798 = vadd.f32 0.0, %v797
          %v799 = vpop.f32.mrb[0].mxu0
          %800 = vmatprep.mubr.f32.mxu0 0.0
          %801 = vmatmul.mubr.f32.gmra.mrb[0].mxu0 %v587
          %v802 = vpop.f32.mrb[0].mxu0
          %v803 = vadd.f32 0.0, %v802
          %v804 = vpop.f32.mrb[0].mxu0
          %805 = vmatprep.mubr.f32.mxu0 0.0
          %806 = vmatmul.mubr.f32.gmra.mrb[0].mxu0 %v590
          %v807 = vpop.f32.mrb[0].mxu0
          %v808 = vadd.f32 0.0, %v807
          %v809 = vpop.f32.mrb[0].mxu0
          %810 = vmatprep.mubr.f32.mxu0 0.0
          %811 = vmatmul.mubr.f32.gmra.mrb[0].mxu0 %v593
          %v812 = vpop.f32.mrb[0].mxu0
          %v813 = vadd.f32 0.0, %v812
          %v814 = vpop.f32.mrb[0].mxu0
          %815 = vmatprep.mubr.f32.mxu0 0.0
          %816 = vmatmul.mubr.f32.gmra.mrb[0].mxu0 %v596
          %v817 = vpop.f32.mrb[0].mxu0
          %v818 = vadd.f32 0.0, %v817
          %v819 = vpop.f32.mrb[0].mxu0
          %820 = vmatprep.mubr.f32.mxu0 0.0
          %821 = vmatmul.mubr.f32.gmra.mrb[0].mxu0 %v599
          %v822 = vpop.f32.mrb[0].mxu0
          %v823 = vadd.f32 0.0, %v822
          %v824 = vpop.f32.mrb[0].mxu0
          %825 = vdwg.mxu0
          %v826 = vld [vmem:[#allocation2] sm:$0xff]
          %v827 = vld [vmem:[#allocation2 + $0x8] sm:$0xff]
          %v828 = vld [vmem:[#allocation2 + $0x10] sm:$0xff]
          %v829 = vld [vmem:[#allocation2 + $0x18] sm:$0xff]
          %v830 = vld [vmem:[#allocation2 + $0x20] sm:$0xff]
          %v831 = vld [vmem:[#allocation2 + $0x28] sm:$0xff]
          %v832 = vld [vmem:[#allocation2 + $0x30] sm:$0xff]
          %v833 = vld [vmem:[#allocation2 + $0x38] sm:$0xff]
          %v834 = vld [vmem:[#allocation2 + $0x40] sm:$0xff]
          %v835 = vld [vmem:[#allocation2 + $0x48] sm:$0xff]
          %v836 = vld [vmem:[#allocation2 + $0x50] sm:$0xff]
          %v837 = vld [vmem:[#allocation2 + $0x58] sm:$0xff]
          %v838 = vld [vmem:[#allocation2 + $0x60] sm:$0xff]
          %v839 = vld [vmem:[#allocation2 + $0x68] sm:$0xff]
          %v840 = vld [vmem:[#allocation2 + $0x70] sm:$0xff]
          %v841 = vld [vmem:[#allocation2 + $0x78] sm:$0xff]
          %v842 = vld [vmem:[#allocation2 + $0x80] sm:$0xff]
          %v843 = vld [vmem:[#allocation2 + $0x88] sm:$0xff]
          %v844 = vld [vmem:[#allocation2 + $0x90] sm:$0xff]
          %v845 = vld [vmem:[#allocation2 + $0x98] sm:$0xff]
          %v846 = vld [vmem:[#allocation2 + $0xa0] sm:$0xff]
          %v847 = vld [vmem:[#allocation2 + $0xa8] sm:$0xff]
          %v848 = vld [vmem:[#allocation2 + $0xb0] sm:$0xff]
          %v849 = vld [vmem:[#allocation2 + $0xb8] sm:$0xff]
          %v850 = vld [vmem:[#allocation2 + $0xc0] sm:$0xff]
          %v851 = vld [vmem:[#allocation2 + $0xc8] sm:$0xff]
          %v852 = vld [vmem:[#allocation2 + $0xd0] sm:$0xff]
          %v853 = vld [vmem:[#allocation2 + $0xd8] sm:$0xff]
          %v854 = vld [vmem:[#allocation2 + $0xe0] sm:$0xff]
          %v855 = vld [vmem:[#allocation2 + $0xe8] sm:$0xff]
          %v856 = vld [vmem:[#allocation2 + $0xf0] sm:$0xff]
          %v857 = vld [vmem:[#allocation2 + $0xf8] sm:$0xff]
          %v858 = vld [vmem:[#allocation2 + $0x100] sm:$0xff]
          %v859 = vld [vmem:[#allocation2 + $0x108] sm:$0xff]
          %v860 = vld [vmem:[#allocation2 + $0x110] sm:$0xff]
          %v861 = vld [vmem:[#allocation2 + $0x118] sm:$0xff]
          %v862 = vld [vmem:[#allocation2 + $0x120] sm:$0xff]
          %v863 = vld [vmem:[#allocation2 + $0x128] sm:$0xff]
          %v864 = vld [vmem:[#allocation2 + $0x130] sm:$0xff]
          %v865 = vld [vmem:[#allocation2 + $0x138] sm:$0xff]
          %v866 = vld [vmem:[#allocation2 + $0x140] sm:$0xff]
          %v867 = vld [vmem:[#allocation2 + $0x148] sm:$0xff]
          %v868 = vld [vmem:[#allocation2 + $0x150] sm:$0xff]
          %v869 = vld [vmem:[#allocation2 + $0x158] sm:$0xff]
          %v870 = vld [vmem:[#allocation2 + $0x160] sm:$0xff]
          %v871 = vld [vmem:[#allocation2 + $0x168] sm:$0xff]
          %v872 = vld [vmem:[#allocation2 + $0x170] sm:$0xff]
          %v873 = vld [vmem:[#allocation2 + $0x178] sm:$0xff]
          %v874 = vld [vmem:[#allocation2 + $0x180] sm:$0xff]
          %v875 = vld [vmem:[#allocation2 + $0x188] sm:$0xff]
          %v876 = vld [vmem:[#allocation2 + $0x190] sm:$0xff]
          %v877 = vld [vmem:[#allocation2 + $0x198] sm:$0xff]
          %v878 = vld [vmem:[#allocation2 + $0x1a0] sm:$0xff]
          %v879 = vld [vmem:[#allocation2 + $0x1a8] sm:$0xff]
          %v880 = vld [vmem:[#allocation2 + $0x1b0] sm:$0xff]
          %v881 = vld [vmem:[#allocation2 + $0x1b8] sm:$0xff]
          %v882 = vld [vmem:[#allocation2 + $0x1c0] sm:$0xff]
          %v883 = vld [vmem:[#allocation2 + $0x1c8] sm:$0xff]
          %v884 = vld [vmem:[#allocation2 + $0x1d0] sm:$0xff]
          %v885 = vld [vmem:[#allocation2 + $0x1d8] sm:$0xff]
          %v886 = vld [vmem:[#allocation2 + $0x1e0] sm:$0xff]
          %v887 = vld [vmem:[#allocation2 + $0x1e8] sm:$0xff]
          %v888 = vld [vmem:[#allocation2 + $0x1f0] sm:$0xff]
          %v889 = vld [vmem:[#allocation2 + $0x1f8] sm:$0xff]
          %v890 = vld [vmem:[%s386] sm:$0xff]
          %v891 = vld [vmem:[%s386 + $0x8] sm:$0xff]
          %v892 = vld [vmem:[%s386 + $0x10] sm:$0xff]
          %v893 = vld [vmem:[%s386 + $0x18] sm:$0xff]
          %v894 = vld [vmem:[%s386 + $0x20] sm:$0xff]
          %v895 = vld [vmem:[%s386 + $0x28] sm:$0xff]
          %v896 = vld [vmem:[%s386 + $0x30] sm:$0xff]
          %v897 = vld [vmem:[%s386 + $0x38] sm:$0xff]
          %v898 = vld [vmem:[%s386 + $0x40] sm:$0xff]
          %v899 = vld [vmem:[%s386 + $0x48] sm:$0xff]
          %v900 = vld [vmem:[%s386 + $0x50] sm:$0xff]
          %v901 = vld [vmem:[%s386 + $0x58] sm:$0xff]
          %v902 = vld [vmem:[%s386 + $0x60] sm:$0xff]
          %v903 = vld [vmem:[%s386 + $0x68] sm:$0xff]
          %v904 = vld [vmem:[%s386 + $0x70] sm:$0xff]
          %v905 = vld [vmem:[%s386 + $0x78] sm:$0xff]
          %v906 = vld [vmem:[%s386 + $0x80] sm:$0xff]
          %v907 = vld [vmem:[%s386 + $0x88] sm:$0xff]
          %v908 = vld [vmem:[%s386 + $0x90] sm:$0xff]
          %v909 = vld [vmem:[%s386 + $0x98] sm:$0xff]
          %v910 = vld [vmem:[%s386 + $0xa0] sm:$0xff]
          %v911 = vld [vmem:[%s386 + $0xa8] sm:$0xff]
          %v912 = vld [vmem:[%s386 + $0xb0] sm:$0xff]
          %v913 = vld [vmem:[%s386 + $0xb8] sm:$0xff]
          %v914 = vld [vmem:[%s386 + $0xc0] sm:$0xff]
          %v915 = vld [vmem:[%s386 + $0xc8] sm:$0xff]
          %v916 = vld [vmem:[%s386 + $0xd0] sm:$0xff]
          %v917 = vld [vmem:[%s386 + $0xd8] sm:$0xff]
          %v918 = vld [vmem:[%s386 + $0xe0] sm:$0xff]
          %v919 = vld [vmem:[%s386 + $0xe8] sm:$0xff]
          %v920 = vld [vmem:[%s386 + $0xf0] sm:$0xff]
          %v921 = vld [vmem:[%s386 + $0xf8] sm:$0xff]
          %v922 = vld [vmem:[%s386 + $0x100] sm:$0xff]
          %v923 = vld [vmem:[%s386 + $0x108] sm:$0xff]
          %v924 = vld [vmem:[%s386 + $0x110] sm:$0xff]
          %v925 = vld [vmem:[%s386 + $0x118] sm:$0xff]
          %v926 = vld [vmem:[%s386 + $0x120] sm:$0xff]
          %v927 = vld [vmem:[%s386 + $0x128] sm:$0xff]
          %v928 = vld [vmem:[%s386 + $0x130] sm:$0xff]
          %v929 = vld [vmem:[%s386 + $0x138] sm:$0xff]
          %v930 = vld [vmem:[%s386 + $0x140] sm:$0xff]
          %v931 = vld [vmem:[%s386 + $0x148] sm:$0xff]
          %v932 = vld [vmem:[%s386 + $0x150] sm:$0xff]
          %v933 = vld [vmem:[%s386 + $0x158] sm:$0xff]
          %v934 = vld [vmem:[%s386 + $0x160] sm:$0xff]
          %v935 = vld [vmem:[%s386 + $0x168] sm:$0xff]
          %v936 = vld [vmem:[%s386 + $0x170] sm:$0xff]
          %v937 = vld [vmem:[%s386 + $0x178] sm:$0xff]
          %v938 = vld [vmem:[%s386 + $0x180] sm:$0xff]
          %v939 = vld [vmem:[%s386 + $0x188] sm:$0xff]
          %v940 = vld [vmem:[%s386 + $0x190] sm:$0xff]
          %v941 = vld [vmem:[%s386 + $0x198] sm:$0xff]
          %v942 = vld [vmem:[%s386 + $0x1a0] sm:$0xff]
          %v943 = vld [vmem:[%s386 + $0x1a8] sm:$0xff]
          %v944 = vld [vmem:[%s386 + $0x1b0] sm:$0xff]
          %v945 = vld [vmem:[%s386 + $0x1b8] sm:$0xff]
          %v946 = vld [vmem:[%s386 + $0x1c0] sm:$0xff]
          %v947 = vld [vmem:[%s386 + $0x1c8] sm:$0xff]
          %v948 = vld [vmem:[%s386 + $0x1d0] sm:$0xff]
          %v949 = vld [vmem:[%s386 + $0x1d8] sm:$0xff]
          %v950 = vld [vmem:[%s386 + $0x1e0] sm:$0xff]
          %v951 = vld [vmem:[%s386 + $0x1e8] sm:$0xff]
          %v952 = vld [vmem:[%s386 + $0x1f0] sm:$0xff]
          %v953 = vld [vmem:[%s386 + $0x1f8] sm:$0xff]
          %v954 = vpack.c.bf16 %v673, %v668
          %v955 = vpack.c.bf16 %v683, %v678
          %v956 = vpack.c.bf16 %v693, %v688
          %v957 = vpack.c.bf16 %v703, %v698
          %v958 = vpack.c.bf16 %v713, %v708
          %v959 = vpack.c.bf16 %v723, %v718
          %v960 = vpack.c.bf16 %v733, %v728
          %v961 = vpack.c.bf16 %v743, %v738
          %v962 = vpack.c.bf16 %v753, %v748
          %v963 = vpack.c.bf16 %v763, %v758
          %v964 = vpack.c.bf16 %v773, %v768
          %v965 = vpack.c.bf16 %v783, %v778
          %v966 = vpack.c.bf16 %v793, %v788
          %v967 = vpack.c.bf16 %v803, %v798
          %v968 = vpack.c.bf16 %v813, %v808
          %v969 = vpack.c.bf16 %v823, %v818
          %v1034 = vunpack.c.l.b16 %v890
          %v1035 = vunpack.c.h.b16 %v890
          %v1036 = vunpack.c.l.b16 %v891
          %v1037 = vunpack.c.h.b16 %v891
          %v1038 = vunpack.c.l.b16 %v892
          %v1039 = vunpack.c.h.b16 %v892
          %v1040 = vunpack.c.l.b16 %v893
          %v1041 = vunpack.c.h.b16 %v893
          %v1042 = vunpack.c.l.b16 %v894
          %v1043 = vunpack.c.h.b16 %v894
          %v1044 = vunpack.c.l.b16 %v895
          %v1045 = vunpack.c.h.b16 %v895
          %v1046 = vunpack.c.l.b16 %v896
          %v1047 = vunpack.c.h.b16 %v896
          %v1048 = vunpack.c.l.b16 %v897
          %v1049 = vunpack.c.h.b16 %v897
          %v1050 = vunpack.c.l.b16 %v898
          %v1051 = vunpack.c.h.b16 %v898
          %v1052 = vunpack.c.l.b16 %v899
          %v1053 = vunpack.c.h.b16 %v899
          %v1054 = vunpack.c.l.b16 %v900
          %v1055 = vunpack.c.h.b16 %v900
          %v1056 = vunpack.c.l.b16 %v901
          %v1057 = vunpack.c.h.b16 %v901
          %v1058 = vunpack.c.l.b16 %v902
          %v1059 = vunpack.c.h.b16 %v902
          %v1060 = vunpack.c.l.b16 %v903
          %v1061 = vunpack.c.h.b16 %v903
          %v1062 = vunpack.c.l.b16 %v904
          %v1063 = vunpack.c.h.b16 %v904
          %v1064 = vunpack.c.l.b16 %v905
          %v1065 = vunpack.c.h.b16 %v905
          %v1066 = vunpack.c.l.b16 %v906
          %v1067 = vunpack.c.h.b16 %v906
          %v1068 = vunpack.c.l.b16 %v907
          %v1069 = vunpack.c.h.b16 %v907
          %v1070 = vunpack.c.l.b16 %v908
          %v1071 = vunpack.c.h.b16 %v908
          %v1072 = vunpack.c.l.b16 %v909
          %v1073 = vunpack.c.h.b16 %v909
          %v1074 = vunpack.c.l.b16 %v910
          %v1075 = vunpack.c.h.b16 %v910
          %v1076 = vunpack.c.l.b16 %v911
          %v1077 = vunpack.c.h.b16 %v911
          %v1078 = vunpack.c.l.b16 %v912
          %v1079 = vunpack.c.h.b16 %v912
          %v1080 = vunpack.c.l.b16 %v913
          %v1081 = vunpack.c.h.b16 %v913
          %v1082 = vunpack.c.l.b16 %v914
          %v1083 = vunpack.c.h.b16 %v914
          %v1084 = vunpack.c.l.b16 %v915
          %v1085 = vunpack.c.h.b16 %v915
          %v1086 = vunpack.c.l.b16 %v916
          %v1087 = vunpack.c.h.b16 %v916
          %v1088 = vunpack.c.l.b16 %v917
          %v1089 = vunpack.c.h.b16 %v917
          %v1090 = vunpack.c.l.b16 %v918
          %v1091 = vunpack.c.h.b16 %v918
          %v1092 = vunpack.c.l.b16 %v919
          %v1093 = vunpack.c.h.b16 %v919
          %v1094 = vunpack.c.l.b16 %v920
          %v1095 = vunpack.c.h.b16 %v920
          %v1096 = vunpack.c.l.b16 %v921
          %v1097 = vunpack.c.h.b16 %v921
          %v1098 = vunpack.c.l.b16 %v922
          %v1099 = vunpack.c.h.b16 %v922
          %v1100 = vunpack.c.l.b16 %v923
          %v1101 = vunpack.c.h.b16 %v923
          %v1102 = vunpack.c.l.b16 %v924
          %v1103 = vunpack.c.h.b16 %v924
          %v1104 = vunpack.c.l.b16 %v925
          %v1105 = vunpack.c.h.b16 %v925
          %v1106 = vunpack.c.l.b16 %v926
          %v1107 = vunpack.c.h.b16 %v926
          %v1108 = vunpack.c.l.b16 %v927
          %v1109 = vunpack.c.h.b16 %v927
          %v1110 = vunpack.c.l.b16 %v928
          %v1111 = vunpack.c.h.b16 %v928
          %v1112 = vunpack.c.l.b16 %v929
          %v1113 = vunpack.c.h.b16 %v929
          %v1114 = vunpack.c.l.b16 %v930
          %v1115 = vunpack.c.h.b16 %v930
          %v1116 = vunpack.c.l.b16 %v931
          %v1117 = vunpack.c.h.b16 %v931
          %v1118 = vunpack.c.l.b16 %v932
          %v1119 = vunpack.c.h.b16 %v932
          %v1120 = vunpack.c.l.b16 %v933
          %v1121 = vunpack.c.h.b16 %v933
          %v1122 = vunpack.c.l.b16 %v934
          %v1123 = vunpack.c.h.b16 %v934
          %v1124 = vunpack.c.l.b16 %v935
          %v1125 = vunpack.c.h.b16 %v935
          %v1126 = vunpack.c.l.b16 %v936
          %v1127 = vunpack.c.h.b16 %v936
          %v1128 = vunpack.c.l.b16 %v937
          %v1129 = vunpack.c.h.b16 %v937
          %v1130 = vunpack.c.l.b16 %v938
          %v1131 = vunpack.c.h.b16 %v938
          %v1132 = vunpack.c.l.b16 %v939
          %v1133 = vunpack.c.h.b16 %v939
          %v1134 = vunpack.c.l.b16 %v940
          %v1135 = vunpack.c.h.b16 %v940
          %v1136 = vunpack.c.l.b16 %v941
          %v1137 = vunpack.c.h.b16 %v941
          %v1138 = vunpack.c.l.b16 %v942
          %v1139 = vunpack.c.h.b16 %v942
          %v1140 = vunpack.c.l.b16 %v943
          %v1141 = vunpack.c.h.b16 %v943
          %v1142 = vunpack.c.l.b16 %v944
          %v1143 = vunpack.c.h.b16 %v944
          %v1144 = vunpack.c.l.b16 %v945
          %v1145 = vunpack.c.h.b16 %v945
          %v1146 = vunpack.c.l.b16 %v946
          %v1147 = vunpack.c.h.b16 %v946
          %v1148 = vunpack.c.l.b16 %v947
          %v1149 = vunpack.c.h.b16 %v947
          %v1150 = vunpack.c.l.b16 %v948
          %v1151 = vunpack.c.h.b16 %v948
          %v1152 = vunpack.c.l.b16 %v949
          %v1153 = vunpack.c.h.b16 %v949
          %v1154 = vunpack.c.l.b16 %v950
          %v1155 = vunpack.c.h.b16 %v950
          %v1156 = vunpack.c.l.b16 %v951
          %v1157 = vunpack.c.h.b16 %v951
          %v1158 = vunpack.c.l.b16 %v952
          %v1159 = vunpack.c.h.b16 %v952
          %v1160 = vunpack.c.l.b16 %v953
          %v1161 = vunpack.c.h.b16 %v953
          %v1162 = vpack.c.b16 %v1036, %v1034
          %v1163 = vpack.c.b16 %v1037, %v1035
          %v1164 = vpack.c.b16 %v1040, %v1038
          %v1165 = vpack.c.b16 %v1041, %v1039
          %v1166 = vpack.c.b16 %v1044, %v1042
          %v1167 = vpack.c.b16 %v1045, %v1043
          %v1168 = vpack.c.b16 %v1048, %v1046
          %v1169 = vpack.c.b16 %v1049, %v1047
          %v1170 = vpack.c.b16 %v1052, %v1050
          %v1171 = vpack.c.b16 %v1053, %v1051
          %v1172 = vpack.c.b16 %v1056, %v1054
          %v1173 = vpack.c.b16 %v1057, %v1055
          %v1174 = vpack.c.b16 %v1060, %v1058
          %v1175 = vpack.c.b16 %v1061, %v1059
          %v1176 = vpack.c.b16 %v1064, %v1062
          %v1177 = vpack.c.b16 %v1065, %v1063
          %v1178 = vpack.c.b16 %v1068, %v1066
          %v1179 = vpack.c.b16 %v1069, %v1067
          %v1180 = vpack.c.b16 %v1072, %v1070
          %v1181 = vpack.c.b16 %v1073, %v1071
          %v1182 = vpack.c.b16 %v1076, %v1074
          %v1183 = vpack.c.b16 %v1077, %v1075
          %v1184 = vpack.c.b16 %v1080, %v1078
          %v1185 = vpack.c.b16 %v1081, %v1079
          %v1186 = vpack.c.b16 %v1084, %v1082
          %v1187 = vpack.c.b16 %v1085, %v1083
          %v1188 = vpack.c.b16 %v1088, %v1086
          %v1189 = vpack.c.b16 %v1089, %v1087
          %v1190 = vpack.c.b16 %v1092, %v1090
          %v1191 = vpack.c.b16 %v1093, %v1091
          %v1192 = vpack.c.b16 %v1096, %v1094
          %v1193 = vpack.c.b16 %v1097, %v1095
          %v1194 = vpack.c.b16 %v1100, %v1098
          %v1195 = vpack.c.b16 %v1101, %v1099
          %v1196 = vpack.c.b16 %v1104, %v1102
          %v1197 = vpack.c.b16 %v1105, %v1103
          %v1198 = vpack.c.b16 %v1108, %v1106
          %v1199 = vpack.c.b16 %v1109, %v1107
          %v1200 = vpack.c.b16 %v1112, %v1110
          %v1201 = vpack.c.b16 %v1113, %v1111
          %v1202 = vpack.c.b16 %v1116, %v1114
          %v1203 = vpack.c.b16 %v1117, %v1115
          %v1204 = vpack.c.b16 %v1120, %v1118
          %v1205 = vpack.c.b16 %v1121, %v1119
          %v1206 = vpack.c.b16 %v1124, %v1122
          %v1207 = vpack.c.b16 %v1125, %v1123
          %v1208 = vpack.c.b16 %v1128, %v1126
          %v1209 = vpack.c.b16 %v1129, %v1127
          %v1210 = vpack.c.b16 %v1132, %v1130
          %v1211 = vpack.c.b16 %v1133, %v1131
          %v1212 = vpack.c.b16 %v1136, %v1134
          %v1213 = vpack.c.b16 %v1137, %v1135
          %v1214 = vpack.c.b16 %v1140, %v1138
          %v1215 = vpack.c.b16 %v1141, %v1139
          %v1216 = vpack.c.b16 %v1144, %v1142
          %v1217 = vpack.c.b16 %v1145, %v1143
          %v1218 = vpack.c.b16 %v1148, %v1146
          %v1219 = vpack.c.b16 %v1149, %v1147
          %v1220 = vpack.c.b16 %v1152, %v1150
          %v1221 = vpack.c.b16 %v1153, %v1151
          %v1222 = vpack.c.b16 %v1156, %v1154
          %v1223 = vpack.c.b16 %v1157, %v1155
          %v1224 = vpack.c.b16 %v1160, %v1158
          %v1225 = vpack.c.b16 %v1161, %v1159
          %1290 = vmatprep.subr.bf16.mxu0 0
          %1291 = vmatpush1.bf16.msra.mxu0 %v954
          %1292 = vmatprep.subr.bf16.mxu0 0
          %1293 = vmatpush1.bf16.msra.mxu0 %v955
          %1294 = vmatprep.subr.bf16.mxu0 0
          %1295 = vmatpush1.bf16.msra.mxu0 %v956
          %1296 = vmatprep.subr.bf16.mxu0 0
          %1297 = vmatpush1.bf16.msra.mxu0 %v957
          %1298 = vmatprep.subr.bf16.mxu0 0
          %1299 = vmatpush1.bf16.msra.mxu0 %v958
          %1300 = vmatprep.subr.bf16.mxu0 0
          %1301 = vmatpush1.bf16.msra.mxu0 %v959
          %1302 = vmatprep.subr.bf16.mxu0 0
          %1303 = vmatpush1.bf16.msra.mxu0 %v960
          %1304 = vmatprep.subr.bf16.mxu0 0
          %1305 = vmatpush1.bf16.msra.mxu0 %v961
          %1306 = vmatprep.subr.bf16.mxu0 0
          %1307 = vmatpush1.bf16.msra.mxu0 %v962
          %1308 = vmatprep.subr.bf16.mxu0 0
          %1309 = vmatpush1.bf16.msra.mxu0 %v963
          %1310 = vmatprep.subr.bf16.mxu0 0
          %1311 = vmatpush1.bf16.msra.mxu0 %v964
          %1312 = vmatprep.subr.bf16.mxu0 0
          %1313 = vmatpush1.bf16.msra.mxu0 %v965
          %1314 = vmatprep.subr.bf16.mxu0 0
          %1315 = vmatpush1.bf16.msra.mxu0 %v966
          %1316 = vmatprep.subr.bf16.mxu0 0
          %1317 = vmatpush1.bf16.msra.mxu0 %v967
          %1318 = vmatprep.subr.bf16.mxu0 0
          %1319 = vmatpush1.bf16.msra.mxu0 %v968
          %1320 = vmatprep.subr.bf16.mxu0 0
          %1321 = vmatpush1.bf16.msra.mxu0 %v969
          %1322 = vmatprep.mubr.bf16.mxu0 %v1163
          %1323 = vmatmul.mubr.bf16.gmra.mrb[0].mxu0 %v1162
          %v1324 = vpop.f32.mrb[0].mxu0
          %v1325 = vadd.f32 0.0, %v1324
          %v1326 = vpop.f32.mrb[0].mxu0
          %v1327 = vpop.f32.mrb[0].mxu0
          %v1328 = vadd.f32 0.0, %v1327
          %v1329 = vpop.f32.mrb[0].mxu0
          %1330 = vmatprep.mubr.bf16.mxu0 %v1165
          %1331 = vmatmul.mubr.bf16.gmra.mrb[0].mxu0 %v1164
          %v1332 = vpop.f32.mrb[0].mxu0
          %v1333 = vadd.f32 0.0, %v1332
          %v1334 = vpop.f32.mrb[0].mxu0
          %v1335 = vpop.f32.mrb[0].mxu0
          %v1336 = vadd.f32 0.0, %v1335
          %v1337 = vpop.f32.mrb[0].mxu0
          %1338 = vmatprep.mubr.bf16.mxu0 %v1167
          %1339 = vmatmul.mubr.bf16.gmra.mrb[0].mxu0 %v1166
          %v1340 = vpop.f32.mrb[0].mxu0
          %v1341 = vadd.f32 0.0, %v1340
          %v1342 = vpop.f32.mrb[0].mxu0
          %v1343 = vpop.f32.mrb[0].mxu0
          %v1344 = vadd.f32 0.0, %v1343
          %v1345 = vpop.f32.mrb[0].mxu0
          %1346 = vmatprep.mubr.bf16.mxu0 %v1169
          %1347 = vmatmul.mubr.bf16.gmra.mrb[0].mxu0 %v1168
          %v1348 = vpop.f32.mrb[0].mxu0
          %v1349 = vadd.f32 0.0, %v1348
          %v1350 = vpop.f32.mrb[0].mxu0
          %v1351 = vpop.f32.mrb[0].mxu0
          %v1352 = vadd.f32 0.0, %v1351
          %v1353 = vpop.f32.mrb[0].mxu0
          %1354 = vmatprep.mubr.bf16.mxu0 %v1171
          %1355 = vmatmul.mubr.bf16.gmra.mrb[0].mxu0 %v1170
          %v1356 = vpop.f32.mrb[0].mxu0
          %v1357 = vadd.f32 0.0, %v1356
          %v1358 = vpop.f32.mrb[0].mxu0
          %v1359 = vpop.f32.mrb[0].mxu0
          %v1360 = vadd.f32 0.0, %v1359
          %v1361 = vpop.f32.mrb[0].mxu0
          %1362 = vmatprep.mubr.bf16.mxu0 %v1173
          %1363 = vmatmul.mubr.bf16.gmra.mrb[0].mxu0 %v1172
          %v1364 = vpop.f32.mrb[0].mxu0
          %v1365 = vadd.f32 0.0, %v1364
          %v1366 = vpop.f32.mrb[0].mxu0
          %v1367 = vpop.f32.mrb[0].mxu0
          %v1368 = vadd.f32 0.0, %v1367
          %v1369 = vpop.f32.mrb[0].mxu0
          %1370 = vmatprep.mubr.bf16.mxu0 %v1175
          %1371 = vmatmul.mubr.bf16.gmra.mrb[0].mxu0 %v1174
          %v1372 = vpop.f32.mrb[0].mxu0
          %v1373 = vadd.f32 0.0, %v1372
          %v1374 = vpop.f32.mrb[0].mxu0
          %v1375 = vpop.f32.mrb[0].mxu0
          %v1376 = vadd.f32 0.0, %v1375
          %v1377 = vpop.f32.mrb[0].mxu0
          %1378 = vmatprep.mubr.bf16.mxu0 %v1177
          %1379 = vmatmul.mubr.bf16.gmra.mrb[0].mxu0 %v1176
          %v1380 = vpop.f32.mrb[0].mxu0
          %v1381 = vadd.f32 0.0, %v1380
          %v1382 = vpop.f32.mrb[0].mxu0
          %v1383 = vpop.f32.mrb[0].mxu0
          %v1384 = vadd.f32 0.0, %v1383
          %v1385 = vpop.f32.mrb[0].mxu0
          %1386 = vmatprep.mubr.bf16.mxu0 %v1179
          %1387 = vmatmul.mubr.bf16.gmra.mrb[0].mxu0 %v1178
          %v1388 = vpop.f32.mrb[0].mxu0
          %v1389 = vadd.f32 0.0, %v1388
          %v1390 = vpop.f32.mrb[0].mxu0
          %v1391 = vpop.f32.mrb[0].mxu0
          %v1392 = vadd.f32 0.0, %v1391
          %v1393 = vpop.f32.mrb[0].mxu0
          %1394 = vmatprep.mubr.bf16.mxu0 %v1181
          %1395 = vmatmul.mubr.bf16.gmra.mrb[0].mxu0 %v1180
          %v1396 = vpop.f32.mrb[0].mxu0
          %v1397 = vadd.f32 0.0, %v1396
          %v1398 = vpop.f32.mrb[0].mxu0
          %v1399 = vpop.f32.mrb[0].mxu0
          %v1400 = vadd.f32 0.0, %v1399
          %v1401 = vpop.f32.mrb[0].mxu0
          %1402 = vmatprep.mubr.bf16.mxu0 %v1183
          %1403 = vmatmul.mubr.bf16.gmra.mrb[0].mxu0 %v1182
          %v1404 = vpop.f32.mrb[0].mxu0
          %v1405 = vadd.f32 0.0, %v1404
          %v1406 = vpop.f32.mrb[0].mxu0
          %v1407 = vpop.f32.mrb[0].mxu0
          %v1408 = vadd.f32 0.0, %v1407
          %v1409 = vpop.f32.mrb[0].mxu0
          %1410 = vmatprep.mubr.bf16.mxu0 %v1185
          %1411 = vmatmul.mubr.bf16.gmra.mrb[0].mxu0 %v1184
          %v1412 = vpop.f32.mrb[0].mxu0
          %v1413 = vadd.f32 0.0, %v1412
          %v1414 = vpop.f32.mrb[0].mxu0
          %v1415 = vpop.f32.mrb[0].mxu0
          %v1416 = vadd.f32 0.0, %v1415
          %v1417 = vpop.f32.mrb[0].mxu0
          %1418 = vmatprep.mubr.bf16.mxu0 %v1187
          %1419 = vmatmul.mubr.bf16.gmra.mrb[0].mxu0 %v1186
          %v1420 = vpop.f32.mrb[0].mxu0
          %v1421 = vadd.f32 0.0, %v1420
          %v1422 = vpop.f32.mrb[0].mxu0
          %v1423 = vpop.f32.mrb[0].mxu0
          %v1424 = vadd.f32 0.0, %v1423
          %v1425 = vpop.f32.mrb[0].mxu0
          %1426 = vmatprep.mubr.bf16.mxu0 %v1189
          %1427 = vmatmul.mubr.bf16.gmra.mrb[0].mxu0 %v1188
          %v1428 = vpop.f32.mrb[0].mxu0
          %v1429 = vadd.f32 0.0, %v1428
          %v1430 = vpop.f32.mrb[0].mxu0
          %v1431 = vpop.f32.mrb[0].mxu0
          %v1432 = vadd.f32 0.0, %v1431
          %v1433 = vpop.f32.mrb[0].mxu0
          %1434 = vmatprep.mubr.bf16.mxu0 %v1191
          %1435 = vmatmul.mubr.bf16.gmra.mrb[0].mxu0 %v1190
          %v1436 = vpop.f32.mrb[0].mxu0
          %v1437 = vadd.f32 0.0, %v1436
          %v1438 = vpop.f32.mrb[0].mxu0
          %v1439 = vpop.f32.mrb[0].mxu0
          %v1440 = vadd.f32 0.0, %v1439
          %v1441 = vpop.f32.mrb[0].mxu0
          %1442 = vmatprep.mubr.bf16.mxu0 %v1193
          %1443 = vmatmul.mubr.bf16.gmra.mrb[0].mxu0 %v1192
          %v1444 = vpop.f32.mrb[0].mxu0
          %v1445 = vadd.f32 0.0, %v1444
          %v1446 = vpop.f32.mrb[0].mxu0
          %v1447 = vpop.f32.mrb[0].mxu0
          %v1448 = vadd.f32 0.0, %v1447
          %v1449 = vpop.f32.mrb[0].mxu0
          %1450 = vmatprep.mubr.bf16.mxu0 %v1195
          %1451 = vmatmul.mubr.bf16.gmra.mrb[0].mxu0 %v1194
          %v1452 = vpop.f32.mrb[0].mxu0
          %v1453 = vadd.f32 0.0, %v1452
          %v1454 = vpop.f32.mrb[0].mxu0
          %v1455 = vpop.f32.mrb[0].mxu0
          %v1456 = vadd.f32 0.0, %v1455
          %v1457 = vpop.f32.mrb[0].mxu0
          %1458 = vmatprep.mubr.bf16.mxu0 %v1197
          %1459 = vmatmul.mubr.bf16.gmra.mrb[0].mxu0 %v1196
          %v1460 = vpop.f32.mrb[0].mxu0
          %v1461 = vadd.f32 0.0, %v1460
          %v1462 = vpop.f32.mrb[0].mxu0
          %v1463 = vpop.f32.mrb[0].mxu0
          %v1464 = vadd.f32 0.0, %v1463
          %v1465 = vpop.f32.mrb[0].mxu0
          %1466 = vmatprep.mubr.bf16.mxu0 %v1199
          %1467 = vmatmul.mubr.bf16.gmra.mrb[0].mxu0 %v1198
          %v1468 = vpop.f32.mrb[0].mxu0
          %v1469 = vadd.f32 0.0, %v1468
          %v1470 = vpop.f32.mrb[0].mxu0
          %v1471 = vpop.f32.mrb[0].mxu0
          %v1472 = vadd.f32 0.0, %v1471
          %v1473 = vpop.f32.mrb[0].mxu0
          %1474 = vmatprep.mubr.bf16.mxu0 %v1201
          %1475 = vmatmul.mubr.bf16.gmra.mrb[0].mxu0 %v1200
          %v1476 = vpop.f32.mrb[0].mxu0
          %v1477 = vadd.f32 0.0, %v1476
          %v1478 = vpop.f32.mrb[0].mxu0
          %v1479 = vpop.f32.mrb[0].mxu0
          %v1480 = vadd.f32 0.0, %v1479
          %v1481 = vpop.f32.mrb[0].mxu0
          %1482 = vmatprep.mubr.bf16.mxu0 %v1203
          %1483 = vmatmul.mubr.bf16.gmra.mrb[0].mxu0 %v1202
          %v1484 = vpop.f32.mrb[0].mxu0
          %v1485 = vadd.f32 0.0, %v1484
          %v1486 = vpop.f32.mrb[0].mxu0
          %v1487 = vpop.f32.mrb[0].mxu0
          %v1488 = vadd.f32 0.0, %v1487
          %v1489 = vpop.f32.mrb[0].mxu0
          %1490 = vmatprep.mubr.bf16.mxu0 %v1205
          %1491 = vmatmul.mubr.bf16.gmra.mrb[0].mxu0 %v1204
          %v1492 = vpop.f32.mrb[0].mxu0
          %v1493 = vadd.f32 0.0, %v1492
          %v1494 = vpop.f32.mrb[0].mxu0
          %v1495 = vpop.f32.mrb[0].mxu0
          %v1496 = vadd.f32 0.0, %v1495
          %v1497 = vpop.f32.mrb[0].mxu0
          %1498 = vmatprep.mubr.bf16.mxu0 %v1207
          %1499 = vmatmul.mubr.bf16.gmra.mrb[0].mxu0 %v1206
          %v1500 = vpop.f32.mrb[0].mxu0
          %v1501 = vadd.f32 0.0, %v1500
          %v1502 = vpop.f32.mrb[0].mxu0
          %v1503 = vpop.f32.mrb[0].mxu0
          %v1504 = vadd.f32 0.0, %v1503
          %v1505 = vpop.f32.mrb[0].mxu0
          %1506 = vmatprep.mubr.bf16.mxu0 %v1209
          %1507 = vmatmul.mubr.bf16.gmra.mrb[0].mxu0 %v1208
          %v1508 = vpop.f32.mrb[0].mxu0
          %v1509 = vadd.f32 0.0, %v1508
          %v1510 = vpop.f32.mrb[0].mxu0
          %v1511 = vpop.f32.mrb[0].mxu0
          %v1512 = vadd.f32 0.0, %v1511
          %v1513 = vpop.f32.mrb[0].mxu0
          %1514 = vmatprep.mubr.bf16.mxu0 %v1211
          %1515 = vmatmul.mubr.bf16.gmra.mrb[0].mxu0 %v1210
          %v1516 = vpop.f32.mrb[0].mxu0
          %v1517 = vadd.f32 0.0, %v1516
          %v1518 = vpop.f32.mrb[0].mxu0
          %v1519 = vpop.f32.mrb[0].mxu0
          %v1520 = vadd.f32 0.0, %v1519
          %v1521 = vpop.f32.mrb[0].mxu0
          %1522 = vmatprep.mubr.bf16.mxu0 %v1213
          %1523 = vmatmul.mubr.bf16.gmra.mrb[0].mxu0 %v1212
          %v1524 = vpop.f32.mrb[0].mxu0
          %v1525 = vadd.f32 0.0, %v1524
          %v1526 = vpop.f32.mrb[0].mxu0
          %v1527 = vpop.f32.mrb[0].mxu0
          %v1528 = vadd.f32 0.0, %v1527
          %v1529 = vpop.f32.mrb[0].mxu0
          %1530 = vmatprep.mubr.bf16.mxu0 %v1215
          %1531 = vmatmul.mubr.bf16.gmra.mrb[0].mxu0 %v1214
          %v1532 = vpop.f32.mrb[0].mxu0
          %v1533 = vadd.f32 0.0, %v1532
          %v1534 = vpop.f32.mrb[0].mxu0
          %v1535 = vpop.f32.mrb[0].mxu0
          %v1536 = vadd.f32 0.0, %v1535
          %v1537 = vpop.f32.mrb[0].mxu0
          %1538 = vmatprep.mubr.bf16.mxu0 %v1217
          %1539 = vmatmul.mubr.bf16.gmra.mrb[0].mxu0 %v1216
          %v1540 = vpop.f32.mrb[0].mxu0
          %v1541 = vadd.f32 0.0, %v1540
          %v1542 = vpop.f32.mrb[0].mxu0
          %v1543 = vpop.f32.mrb[0].mxu0
          %v1544 = vadd.f32 0.0, %v1543
          %v1545 = vpop.f32.mrb[0].mxu0
          %1546 = vmatprep.mubr.bf16.mxu0 %v1219
          %1547 = vmatmul.mubr.bf16.gmra.mrb[0].mxu0 %v1218
          %v1548 = vpop.f32.mrb[0].mxu0
          %v1549 = vadd.f32 0.0, %v1548
          %v1550 = vpop.f32.mrb[0].mxu0
          %v1551 = vpop.f32.mrb[0].mxu0
          %v1552 = vadd.f32 0.0, %v1551
          %v1553 = vpop.f32.mrb[0].mxu0
          %1554 = vmatprep.mubr.bf16.mxu0 %v1221
          %1555 = vmatmul.mubr.bf16.gmra.mrb[0].mxu0 %v1220
          %v1556 = vpop.f32.mrb[0].mxu0
          %v1557 = vadd.f32 0.0, %v1556
          %v1558 = vpop.f32.mrb[0].mxu0
          %v1559 = vpop.f32.mrb[0].mxu0
          %v1560 = vadd.f32 0.0, %v1559
          %v1561 = vpop.f32.mrb[0].mxu0
          %1562 = vmatprep.mubr.bf16.mxu0 %v1223
          %1563 = vmatmul.mubr.bf16.gmra.mrb[0].mxu0 %v1222
          %v1564 = vpop.f32.mrb[0].mxu0
          %v1565 = vadd.f32 0.0, %v1564
          %v1566 = vpop.f32.mrb[0].mxu0
          %v1567 = vpop.f32.mrb[0].mxu0
          %v1568 = vadd.f32 0.0, %v1567
          %v1569 = vpop.f32.mrb[0].mxu0
          %1570 = vmatprep.mubr.bf16.mxu0 %v1225
          %1571 = vmatmul.mubr.bf16.gmra.mrb[0].mxu0 %v1224
          %v1572 = vpop.f32.mrb[0].mxu0
          %v1573 = vadd.f32 0.0, %v1572
          %v1574 = vpop.f32.mrb[0].mxu0
          %v1575 = vpop.f32.mrb[0].mxu0
          %v1576 = vadd.f32 0.0, %v1575
          %v1577 = vpop.f32.mrb[0].mxu0
          %1578 = vdwg.mxu0
          %v1579 = vadd.f32 %v826, %v1325
          %v1580 = vadd.f32 %v827, %v1328
          %v1581 = vadd.f32 %v828, %v1333
          %v1582 = vadd.f32 %v829, %v1336
          %v1583 = vadd.f32 %v830, %v1341
          %v1584 = vadd.f32 %v831, %v1344
          %v1585 = vadd.f32 %v832, %v1349
          %v1586 = vadd.f32 %v833, %v1352
          %v1587 = vadd.f32 %v834, %v1357
          %v1588 = vadd.f32 %v835, %v1360
          %v1589 = vadd.f32 %v836, %v1365
          %v1590 = vadd.f32 %v837, %v1368
          %v1591 = vadd.f32 %v838, %v1373
          %v1592 = vadd.f32 %v839, %v1376
          %v1593 = vadd.f32 %v840, %v1381
          %v1594 = vadd.f32 %v841, %v1384
          %v1595 = vadd.f32 %v842, %v1389
          %v1596 = vadd.f32 %v843, %v1392
          %v1597 = vadd.f32 %v844, %v1397
          %v1598 = vadd.f32 %v845, %v1400
          %v1599 = vadd.f32 %v846, %v1405
          %v1600 = vadd.f32 %v847, %v1408
          %v1601 = vadd.f32 %v848, %v1413
          %v1602 = vadd.f32 %v849, %v1416
          %v1603 = vadd.f32 %v850, %v1421
          %v1604 = vadd.f32 %v851, %v1424
          %v1605 = vadd.f32 %v852, %v1429
          %v1606 = vadd.f32 %v853, %v1432
          %v1607 = vadd.f32 %v854, %v1437
          %v1608 = vadd.f32 %v855, %v1440
          %v1609 = vadd.f32 %v856, %v1445
          %v1610 = vadd.f32 %v857, %v1448
          %v1611 = vadd.f32 %v858, %v1453
          %v1612 = vadd.f32 %v859, %v1456
          %v1613 = vadd.f32 %v860, %v1461
          %v1614 = vadd.f32 %v861, %v1464
          %v1615 = vadd.f32 %v862, %v1469
          %v1616 = vadd.f32 %v863, %v1472
          %v1617 = vadd.f32 %v864, %v1477
          %v1618 = vadd.f32 %v865, %v1480
          %v1619 = vadd.f32 %v866, %v1485
          %v1620 = vadd.f32 %v867, %v1488
          %v1621 = vadd.f32 %v868, %v1493
          %v1622 = vadd.f32 %v869, %v1496
          %v1623 = vadd.f32 %v870, %v1501
          %v1624 = vadd.f32 %v871, %v1504
          %v1625 = vadd.f32 %v872, %v1509
          %v1626 = vadd.f32 %v873, %v1512
          %v1627 = vadd.f32 %v874, %v1517
          %v1628 = vadd.f32 %v875, %v1520
          %v1629 = vadd.f32 %v876, %v1525
          %v1630 = vadd.f32 %v877, %v1528
          %v1631 = vadd.f32 %v878, %v1533
          %v1632 = vadd.f32 %v879, %v1536
          %v1633 = vadd.f32 %v880, %v1541
          %v1634 = vadd.f32 %v881, %v1544
          %v1635 = vadd.f32 %v882, %v1549
          %v1636 = vadd.f32 %v883, %v1552
          %v1637 = vadd.f32 %v884, %v1557
          %v1638 = vadd.f32 %v885, %v1560
          %v1639 = vadd.f32 %v886, %v1565
          %v1640 = vadd.f32 %v887, %v1568
          %v1641 = vadd.f32 %v888, %v1573
          %v1642 = vadd.f32 %v889, %v1576
          %1643 = vst [vmem:[#allocation2] sm:$0xff] %v1579
          %1644 = vst [vmem:[#allocation2 + $0x8] sm:$0xff] %v1580
          %1645 = vst [vmem:[#allocation2 + $0x10] sm:$0xff] %v1581
          %1646 = vst [vmem:[#allocation2 + $0x18] sm:$0xff] %v1582
          %1647 = vst [vmem:[#allocation2 + $0x20] sm:$0xff] %v1583
          %1648 = vst [vmem:[#allocation2 + $0x28] sm:$0xff] %v1584
          %1649 = vst [vmem:[#allocation2 + $0x30] sm:$0xff] %v1585
          %1650 = vst [vmem:[#allocation2 + $0x38] sm:$0xff] %v1586
          %1651 = vst [vmem:[#allocation2 + $0x40] sm:$0xff] %v1587
          %1652 = vst [vmem:[#allocation2 + $0x48] sm:$0xff] %v1588
          %1653 = vst [vmem:[#allocation2 + $0x50] sm:$0xff] %v1589
          %1654 = vst [vmem:[#allocation2 + $0x58] sm:$0xff] %v1590
          %1655 = vst [vmem:[#allocation2 + $0x60] sm:$0xff] %v1591
          %1656 = vst [vmem:[#allocation2 + $0x68] sm:$0xff] %v1592
          %1657 = vst [vmem:[#allocation2 + $0x70] sm:$0xff] %v1593
          %1658 = vst [vmem:[#allocation2 + $0x78] sm:$0xff] %v1594
          %1659 = vst [vmem:[#allocation2 + $0x80] sm:$0xff] %v1595
          %1660 = vst [vmem:[#allocation2 + $0x88] sm:$0xff] %v1596
          %1661 = vst [vmem:[#allocation2 + $0x90] sm:$0xff] %v1597
          %1662 = vst [vmem:[#allocation2 + $0x98] sm:$0xff] %v1598
          %1663 = vst [vmem:[#allocation2 + $0xa0] sm:$0xff] %v1599
          %1664 = vst [vmem:[#allocation2 + $0xa8] sm:$0xff] %v1600
          %1665 = vst [vmem:[#allocation2 + $0xb0] sm:$0xff] %v1601
          %1666 = vst [vmem:[#allocation2 + $0xb8] sm:$0xff] %v1602
          %1667 = vst [vmem:[#allocation2 + $0xc0] sm:$0xff] %v1603
          %1668 = vst [vmem:[#allocation2 + $0xc8] sm:$0xff] %v1604
          %1669 = vst [vmem:[#allocation2 + $0xd0] sm:$0xff] %v1605
          %1670 = vst [vmem:[#allocation2 + $0xd8] sm:$0xff] %v1606
          %1671 = vst [vmem:[#allocation2 + $0xe0] sm:$0xff] %v1607
          %1672 = vst [vmem:[#allocation2 + $0xe8] sm:$0xff] %v1608
          %1673 = vst [vmem:[#allocation2 + $0xf0] sm:$0xff] %v1609
          %1674 = vst [vmem:[#allocation2 + $0xf8] sm:$0xff] %v1610
          %1675 = vst [vmem:[#allocation2 + $0x100] sm:$0xff] %v1611
          %1676 = vst [vmem:[#allocation2 + $0x108] sm:$0xff] %v1612
          %1677 = vst [vmem:[#allocation2 + $0x110] sm:$0xff] %v1613
          %1678 = vst [vmem:[#allocation2 + $0x118] sm:$0xff] %v1614
          %1679 = vst [vmem:[#allocation2 + $0x120] sm:$0xff] %v1615
          %1680 = vst [vmem:[#allocation2 + $0x128] sm:$0xff] %v1616
          %1681 = vst [vmem:[#allocation2 + $0x130] sm:$0xff] %v1617
          %1682 = vst [vmem:[#allocation2 + $0x138] sm:$0xff] %v1618
          %1683 = vst [vmem:[#allocation2 + $0x140] sm:$0xff] %v1619
          %1684 = vst [vmem:[#allocation2 + $0x148] sm:$0xff] %v1620
          %1685 = vst [vmem:[#allocation2 + $0x150] sm:$0xff] %v1621
          %1686 = vst [vmem:[#allocation2 + $0x158] sm:$0xff] %v1622
          %1687 = vst [vmem:[#allocation2 + $0x160] sm:$0xff] %v1623
          %1688 = vst [vmem:[#allocation2 + $0x168] sm:$0xff] %v1624
          %1689 = vst [vmem:[#allocation2 + $0x170] sm:$0xff] %v1625
          %1690 = vst [vmem:[#allocation2 + $0x178] sm:$0xff] %v1626
          %1691 = vst [vmem:[#allocation2 + $0x180] sm:$0xff] %v1627
          %1692 = vst [vmem:[#allocation2 + $0x188] sm:$0xff] %v1628
          %1693 = vst [vmem:[#allocation2 + $0x190] sm:$0xff] %v1629
          %1694 = vst [vmem:[#allocation2 + $0x198] sm:$0xff] %v1630
          %1695 = vst [vmem:[#allocation2 + $0x1a0] sm:$0xff] %v1631
          %1696 = vst [vmem:[#allocation2 + $0x1a8] sm:$0xff] %v1632
          %1697 = vst [vmem:[#allocation2 + $0x1b0] sm:$0xff] %v1633
          %1698 = vst [vmem:[#allocation2 + $0x1b8] sm:$0xff] %v1634
          %1699 = vst [vmem:[#allocation2 + $0x1c0] sm:$0xff] %v1635
          %1700 = vst [vmem:[#allocation2 + $0x1c8] sm:$0xff] %v1636
          %1701 = vst [vmem:[#allocation2 + $0x1d0] sm:$0xff] %v1637
          %1702 = vst [vmem:[#allocation2 + $0x1d8] sm:$0xff] %v1638
          %1703 = vst [vmem:[#allocation2 + $0x1e0] sm:$0xff] %v1639
          %1704 = vst [vmem:[#allocation2 + $0x1e8] sm:$0xff] %v1640
          %1705 = vst [vmem:[#allocation2 + $0x1f0] sm:$0xff] %v1641
          %1706 = vst [vmem:[#allocation2 + $0x1f8] sm:$0xff] %v1642
          %v1707 = vld [vmem:[%s3] sm:$0xff]
          %1708 = vmatprep.subr.mxu0 0.0
          %1709 = vmatpush1.msra.mxu0 %v1707
          %1710 = vmatprep.subr.mxu0 0.0
          %1711 = vmatpush1.msra.mxu0 0.0
          %1712 = vmatprep.subr.mxu0 0.0
          %1713 = vmatpush1.msra.mxu0 0.0
          %1714 = vmatprep.subr.mxu0 0.0
          %1715 = vmatpush1.msra.mxu0 0.0
          %1716 = vmatprep.subr.mxu0 0.0
          %1717 = vmatpush1.msra.mxu0 0.0
          %1718 = vmatprep.subr.mxu0 0.0
          %1719 = vmatpush1.msra.mxu0 0.0
          %1720 = vmatprep.subr.mxu0 0.0
          %1721 = vmatpush1.msra.mxu0 0.0
          %1722 = vmatprep.subr.mxu0 0.0
          %1723 = vmatpush1.msra.mxu0 0.0
          %1724 = vmatprep.subr.mxu0 0.0
          %1725 = vmatpush1.msra.mxu0 0.0
          %1726 = vmatprep.subr.mxu0 0.0
          %1727 = vmatpush1.msra.mxu0 0.0
          %1728 = vmatprep.subr.mxu0 0.0
          %1729 = vmatpush1.msra.mxu0 0.0
          %1730 = vmatprep.subr.mxu0 0.0
          %1731 = vmatpush1.msra.mxu0 0.0
          %1732 = vmatprep.subr.mxu0 0.0
          %1733 = vmatpush1.msra.mxu0 0.0
          %1734 = vmatprep.subr.mxu0 0.0
          %1735 = vmatpush1.msra.mxu0 0.0
          %1736 = vmatprep.subr.mxu0 0.0
          %1737 = vmatpush1.msra.mxu0 0.0
          %1738 = vmatprep.subr.mxu0 0.0
          %1739 = vmatpush1.msra.mxu0 0.0
          %1740 = vmatprep.subr.mxu0 0.0
          %1741 = vmatpush1.msra.mxu0 0.0
          %1742 = vmatprep.subr.mxu0 0.0
          %1743 = vmatpush1.msra.mxu0 0.0
          %1744 = vmatprep.subr.mxu0 0.0
          %1745 = vmatpush1.msra.mxu0 0.0
          %1746 = vmatprep.subr.mxu0 0.0
          %1747 = vmatpush1.msra.mxu0 0.0
          %1748 = vmatprep.subr.mxu0 0.0
          %1749 = vmatpush1.msra.mxu0 0.0
          %1750 = vmatprep.subr.mxu0 0.0
          %1751 = vmatpush1.msra.mxu0 0.0
          %1752 = vmatprep.subr.mxu0 0.0
          %1753 = vmatpush1.msra.mxu0 0.0
          %1754 = vmatprep.subr.mxu0 0.0
          %1755 = vmatpush1.msra.mxu0 0.0
          %1756 = vmatprep.subr.mxu0 0.0
          %1757 = vmatpush1.msra.mxu0 0.0
          %1758 = vmatprep.subr.mxu0 0.0
          %1759 = vmatpush1.msra.mxu0 0.0
          %1760 = vmatprep.subr.mxu0 0.0
          %1761 = vmatpush1.msra.mxu0 0.0
          %1762 = vmatprep.subr.mxu0 0.0
          %1763 = vmatpush1.msra.mxu0 0.0
          %1764 = vmatprep.subr.mxu0 0.0
          %1765 = vmatpush1.msra.mxu0 0.0
          %1766 = vmatprep.subr.mxu0 0.0
          %1767 = vmatpush1.msra.mxu0 0.0
          %1768 = vmatprep.subr.mxu0 0.0
          %1769 = vmatpush1.msra.mxu0 0.0
          %1770 = vmatprep.subr.mxu0 0.0
          %1771 = vmatpush1.msra.mxu0 0.0
          %1772 = vmatprep.mubr.f32.mxu0 0.0
          %1773 = vmatmul.mubr.f32.gmra.mrb[0].mxu0 %v506
          %v1774 = vpop.f32.mrb[0].mxu0
          %v1775 = vadd.f32 0.0, %v1774
          %v1776 = vpop.f32.mrb[0].mxu0
          %1777 = vmatprep.mubr.f32.mxu0 0.0
          %1778 = vmatmul.mubr.f32.gmra.mrb[0].mxu0 %v509
          %v1779 = vpop.f32.mrb[0].mxu0
          %v1780 = vadd.f32 0.0, %v1779
          %v1781 = vpop.f32.mrb[0].mxu0
          %1782 = vmatprep.mubr.f32.mxu0 0.0
          %1783 = vmatmul.mubr.f32.gmra.mrb[0].mxu0 %v512
          %v1784 = vpop.f32.mrb[0].mxu0
          %v1785 = vadd.f32 0.0, %v1784
          %v1786 = vpop.f32.mrb[0].mxu0
          %1787 = vmatprep.mubr.f32.mxu0 0.0
          %1788 = vmatmul.mubr.f32.gmra.mrb[0].mxu0 %v515
          %v1789 = vpop.f32.mrb[0].mxu0
          %v1790 = vadd.f32 0.0, %v1789
          %v1791 = vpop.f32.mrb[0].mxu0
          %1792 = vmatprep.mubr.f32.mxu0 0.0
          %1793 = vmatmul.mubr.f32.gmra.mrb[0].mxu0 %v518
          %v1794 = vpop.f32.mrb[0].mxu0
          %v1795 = vadd.f32 0.0, %v1794
          %v1796 = vpop.f32.mrb[0].mxu0
          %1797 = vmatprep.mubr.f32.mxu0 0.0
          %1798 = vmatmul.mubr.f32.gmra.mrb[0].mxu0 %v521
          %v1799 = vpop.f32.mrb[0].mxu0
          %v1800 = vadd.f32 0.0, %v1799
          %v1801 = vpop.f32.mrb[0].mxu0
          %1802 = vmatprep.mubr.f32.mxu0 0.0
          %1803 = vmatmul.mubr.f32.gmra.mrb[0].mxu0 %v524
          %v1804 = vpop.f32.mrb[0].mxu0
          %v1805 = vadd.f32 0.0, %v1804
          %v1806 = vpop.f32.mrb[0].mxu0
          %1807 = vmatprep.mubr.f32.mxu0 0.0
          %1808 = vmatmul.mubr.f32.gmra.mrb[0].mxu0 %v527
          %v1809 = vpop.f32.mrb[0].mxu0
          %v1810 = vadd.f32 0.0, %v1809
          %v1811 = vpop.f32.mrb[0].mxu0
          %1812 = vmatprep.mubr.f32.mxu0 0.0
          %1813 = vmatmul.mubr.f32.gmra.mrb[0].mxu0 %v530
          %v1814 = vpop.f32.mrb[0].mxu0
          %v1815 = vadd.f32 0.0, %v1814
          %v1816 = vpop.f32.mrb[0].mxu0
          %1817 = vmatprep.mubr.f32.mxu0 0.0
          %1818 = vmatmul.mubr.f32.gmra.mrb[0].mxu0 %v533
          %v1819 = vpop.f32.mrb[0].mxu0
          %v1820 = vadd.f32 0.0, %v1819
          %v1821 = vpop.f32.mrb[0].mxu0
          %1822 = vmatprep.mubr.f32.mxu0 0.0
          %1823 = vmatmul.mubr.f32.gmra.mrb[0].mxu0 %v536
          %v1824 = vpop.f32.mrb[0].mxu0
          %v1825 = vadd.f32 0.0, %v1824
          %v1826 = vpop.f32.mrb[0].mxu0
          %1827 = vmatprep.mubr.f32.mxu0 0.0
          %1828 = vmatmul.mubr.f32.gmra.mrb[0].mxu0 %v539
          %v1829 = vpop.f32.mrb[0].mxu0
          %v1830 = vadd.f32 0.0, %v1829
          %v1831 = vpop.f32.mrb[0].mxu0
          %1832 = vmatprep.mubr.f32.mxu0 0.0
          %1833 = vmatmul.mubr.f32.gmra.mrb[0].mxu0 %v542
          %v1834 = vpop.f32.mrb[0].mxu0
          %v1835 = vadd.f32 0.0, %v1834
          %v1836 = vpop.f32.mrb[0].mxu0
          %1837 = vmatprep.mubr.f32.mxu0 0.0
          %1838 = vmatmul.mubr.f32.gmra.mrb[0].mxu0 %v545
          %v1839 = vpop.f32.mrb[0].mxu0
          %v1840 = vadd.f32 0.0, %v1839
          %v1841 = vpop.f32.mrb[0].mxu0
          %1842 = vmatprep.mubr.f32.mxu0 0.0
          %1843 = vmatmul.mubr.f32.gmra.mrb[0].mxu0 %v548
          %v1844 = vpop.f32.mrb[0].mxu0
          %v1845 = vadd.f32 0.0, %v1844
          %v1846 = vpop.f32.mrb[0].mxu0
          %1847 = vmatprep.mubr.f32.mxu0 0.0
          %1848 = vmatmul.mubr.f32.gmra.mrb[0].mxu0 %v551
          %v1849 = vpop.f32.mrb[0].mxu0
          %v1850 = vadd.f32 0.0, %v1849
          %v1851 = vpop.f32.mrb[0].mxu0
          %1852 = vmatprep.mubr.f32.mxu0 0.0
          %1853 = vmatmul.mubr.f32.gmra.mrb[0].mxu0 %v554
          %v1854 = vpop.f32.mrb[0].mxu0
          %v1855 = vadd.f32 0.0, %v1854
          %v1856 = vpop.f32.mrb[0].mxu0
          %1857 = vmatprep.mubr.f32.mxu0 0.0
          %1858 = vmatmul.mubr.f32.gmra.mrb[0].mxu0 %v557
          %v1859 = vpop.f32.mrb[0].mxu0
          %v1860 = vadd.f32 0.0, %v1859
          %v1861 = vpop.f32.mrb[0].mxu0
          %1862 = vmatprep.mubr.f32.mxu0 0.0
          %1863 = vmatmul.mubr.f32.gmra.mrb[0].mxu0 %v560
          %v1864 = vpop.f32.mrb[0].mxu0
          %v1865 = vadd.f32 0.0, %v1864
          %v1866 = vpop.f32.mrb[0].mxu0
          %1867 = vmatprep.mubr.f32.mxu0 0.0
          %1868 = vmatmul.mubr.f32.gmra.mrb[0].mxu0 %v563
          %v1869 = vpop.f32.mrb[0].mxu0
          %v1870 = vadd.f32 0.0, %v1869
          %v1871 = vpop.f32.mrb[0].mxu0
          %1872 = vmatprep.mubr.f32.mxu0 0.0
          %1873 = vmatmul.mubr.f32.gmra.mrb[0].mxu0 %v566
          %v1874 = vpop.f32.mrb[0].mxu0
          %v1875 = vadd.f32 0.0, %v1874
          %v1876 = vpop.f32.mrb[0].mxu0
          %1877 = vmatprep.mubr.f32.mxu0 0.0
          %1878 = vmatmul.mubr.f32.gmra.mrb[0].mxu0 %v569
          %v1879 = vpop.f32.mrb[0].mxu0
          %v1880 = vadd.f32 0.0, %v1879
          %v1881 = vpop.f32.mrb[0].mxu0
          %1882 = vmatprep.mubr.f32.mxu0 0.0
          %1883 = vmatmul.mubr.f32.gmra.mrb[0].mxu0 %v572
          %v1884 = vpop.f32.mrb[0].mxu0
          %v1885 = vadd.f32 0.0, %v1884
          %v1886 = vpop.f32.mrb[0].mxu0
          %1887 = vmatprep.mubr.f32.mxu0 0.0
          %1888 = vmatmul.mubr.f32.gmra.mrb[0].mxu0 %v575
          %v1889 = vpop.f32.mrb[0].mxu0
          %v1890 = vadd.f32 0.0, %v1889
          %v1891 = vpop.f32.mrb[0].mxu0
          %1892 = vmatprep.mubr.f32.mxu0 0.0
          %1893 = vmatmul.mubr.f32.gmra.mrb[0].mxu0 %v578
          %v1894 = vpop.f32.mrb[0].mxu0
          %v1895 = vadd.f32 0.0, %v1894
          %v1896 = vpop.f32.mrb[0].mxu0
          %1897 = vmatprep.mubr.f32.mxu0 0.0
          %1898 = vmatmul.mubr.f32.gmra.mrb[0].mxu0 %v581
          %v1899 = vpop.f32.mrb[0].mxu0
          %v1900 = vadd.f32 0.0, %v1899
          %v1901 = vpop.f32.mrb[0].mxu0
          %1902 = vmatprep.mubr.f32.mxu0 0.0
          %1903 = vmatmul.mubr.f32.gmra.mrb[0].mxu0 %v584
          %v1904 = vpop.f32.mrb[0].mxu0
          %v1905 = vadd.f32 0.0, %v1904
          %v1906 = vpop.f32.mrb[0].mxu0
          %1907 = vmatprep.mubr.f32.mxu0 0.0
          %1908 = vmatmul.mubr.f32.gmra.mrb[0].mxu0 %v587
          %v1909 = vpop.f32.mrb[0].mxu0
          %v1910 = vadd.f32 0.0, %v1909
          %v1911 = vpop.f32.mrb[0].mxu0
          %1912 = vmatprep.mubr.f32.mxu0 0.0
          %1913 = vmatmul.mubr.f32.gmra.mrb[0].mxu0 %v590
          %v1914 = vpop.f32.mrb[0].mxu0
          %v1915 = vadd.f32 0.0, %v1914
          %v1916 = vpop.f32.mrb[0].mxu0
          %1917 = vmatprep.mubr.f32.mxu0 0.0
          %1918 = vmatmul.mubr.f32.gmra.mrb[0].mxu0 %v593
          %v1919 = vpop.f32.mrb[0].mxu0
          %v1920 = vadd.f32 0.0, %v1919
          %v1921 = vpop.f32.mrb[0].mxu0
          %1922 = vmatprep.mubr.f32.mxu0 0.0
          %1923 = vmatmul.mubr.f32.gmra.mrb[0].mxu0 %v596
          %v1924 = vpop.f32.mrb[0].mxu0
          %v1925 = vadd.f32 0.0, %v1924
          %v1926 = vpop.f32.mrb[0].mxu0
          %1927 = vmatprep.mubr.f32.mxu0 0.0
          %1928 = vmatmul.mubr.f32.gmra.mrb[0].mxu0 %v599
          %v1929 = vpop.f32.mrb[0].mxu0
          %v1930 = vadd.f32 0.0, %v1929
          %v1931 = vpop.f32.mrb[0].mxu0
          %1932 = vdwg.mxu0
          %s1933 = scalar_lea.vmem [#allocation8], %s398
          %1934 = vst [vmem:[%s1933] sm:$0xff] %v1775
          %1935 = vst [vmem:[%s1933 + $0x8] sm:$0xff] %v1780
          %1936 = vst [vmem:[%s1933 + $0x10] sm:$0xff] %v1785
          %1937 = vst [vmem:[%s1933 + $0x18] sm:$0xff] %v1790
          %1938 = vst [vmem:[%s1933 + $0x20] sm:$0xff] %v1795
          %1939 = vst [vmem:[%s1933 + $0x28] sm:$0xff] %v1800
          %1940 = vst [vmem:[%s1933 + $0x30] sm:$0xff] %v1805
          %1941 = vst [vmem:[%s1933 + $0x38] sm:$0xff] %v1810
          %1942 = vst [vmem:[%s1933 + $0x40] sm:$0xff] %v1815
          %1943 = vst [vmem:[%s1933 + $0x48] sm:$0xff] %v1820
          %1944 = vst [vmem:[%s1933 + $0x50] sm:$0xff] %v1825
          %1945 = vst [vmem:[%s1933 + $0x58] sm:$0xff] %v1830
          %1946 = vst [vmem:[%s1933 + $0x60] sm:$0xff] %v1835
          %1947 = vst [vmem:[%s1933 + $0x68] sm:$0xff] %v1840
          %1948 = vst [vmem:[%s1933 + $0x70] sm:$0xff] %v1845
          %1949 = vst [vmem:[%s1933 + $0x78] sm:$0xff] %v1850
          %1950 = vst [vmem:[%s1933 + $0x80] sm:$0xff] %v1855
          %1951 = vst [vmem:[%s1933 + $0x88] sm:$0xff] %v1860
          %1952 = vst [vmem:[%s1933 + $0x90] sm:$0xff] %v1865
          %1953 = vst [vmem:[%s1933 + $0x98] sm:$0xff] %v1870
          %1954 = vst [vmem:[%s1933 + $0xa0] sm:$0xff] %v1875
          %1955 = vst [vmem:[%s1933 + $0xa8] sm:$0xff] %v1880
          %1956 = vst [vmem:[%s1933 + $0xb0] sm:$0xff] %v1885
          %1957 = vst [vmem:[%s1933 + $0xb8] sm:$0xff] %v1890
          %1958 = vst [vmem:[%s1933 + $0xc0] sm:$0xff] %v1895
          %1959 = vst [vmem:[%s1933 + $0xc8] sm:$0xff] %v1900
          %1960 = vst [vmem:[%s1933 + $0xd0] sm:$0xff] %v1905
          %1961 = vst [vmem:[%s1933 + $0xd8] sm:$0xff] %v1910
          %1962 = vst [vmem:[%s1933 + $0xe0] sm:$0xff] %v1915
          %1963 = vst [vmem:[%s1933 + $0xe8] sm:$0xff] %v1920
          %1964 = vst [vmem:[%s1933 + $0xf0] sm:$0xff] %v1925
          %1965 = vst [vmem:[%s1933 + $0xf8] sm:$0xff] %v1930
          %p1966 = scmp.eq.s32.totalorder %s28, 1
          // Predicated region
          $region73: #{tpu_custom_call.1} parent=67 // pred_check
            %p1967 = pneg %p1966
          $region74: #{tpu_custom_call.1} parent=67 // pred_check_branch
            %1969 = sbr.rel (%p1967) target = $region76
          $region75: #{tpu_custom_call.1} parent=67 // pred_region
            loop: start=0, step=1, limit=4
            $region77: #{tpu_custom_call.1} parent=75 // loop_pre_header
              _
            $region78: #{tpu_custom_call.1} parent=75 // loop_header
              %s1971 = sphi 0, %s1975
              %p1972 = scmp.ge.s32.totalorder %s1971, 4
            $region79: #{tpu_custom_call.1} parent=75 // loop_header_branch
              %1974 = sbr.rel (%p1972) target = $region83
            $region80: #{tpu_custom_call.1} parent=75 // loop_body
              %s1976 = smul.u32 %s1971, 128
              %s1977 = scalar_lea.vmem %s8, %s1976
              %v1978 = vld [vmem:[%s1977] sm:$0xff]
              %v1979 = vld [vmem:[%s1977 + $0x8] sm:$0xff]
              %v1980 = vld [vmem:[%s1977 + $0x10] sm:$0xff]
              %v1981 = vld [vmem:[%s1977 + $0x18] sm:$0xff]
              %v1982 = vld [vmem:[%s1977 + $0x20] sm:$0xff]
              %v1983 = vld [vmem:[%s1977 + $0x28] sm:$0xff]
              %v1984 = vld [vmem:[%s1977 + $0x30] sm:$0xff]
              %v1985 = vld [vmem:[%s1977 + $0x38] sm:$0xff]
              %v1986 = vld [vmem:[%s1977 + $0x40] sm:$0xff]
              %v1987 = vld [vmem:[%s1977 + $0x48] sm:$0xff]
              %v1988 = vld [vmem:[%s1977 + $0x50] sm:$0xff]
              %v1989 = vld [vmem:[%s1977 + $0x58] sm:$0xff]
              %v1990 = vld [vmem:[%s1977 + $0x60] sm:$0xff]
              %v1991 = vld [vmem:[%s1977 + $0x68] sm:$0xff]
              %v1992 = vld [vmem:[%s1977 + $0x70] sm:$0xff]
              %v1993 = vld [vmem:[%s1977 + $0x78] sm:$0xff]
              %v1994 = vrcp.pop %v1978
              %v1995 = vmul.f32 1.0, %v1994
              %v1996 = vrcp.pop %v1979
              %v1997 = vmul.f32 1.0, %v1996
              %v1998 = vrcp.pop %v1980
              %v1999 = vmul.f32 1.0, %v1998
              %v2000 = vrcp.pop %v1981
              %v2001 = vmul.f32 1.0, %v2000
              %v2002 = vrcp.pop %v1982
              %v2003 = vmul.f32 1.0, %v2002
              %v2004 = vrcp.pop %v1983
              %v2005 = vmul.f32 1.0, %v2004
              %v2006 = vrcp.pop %v1984
              %v2007 = vmul.f32 1.0, %v2006
              %v2008 = vrcp.pop %v1985
              %v2009 = vmul.f32 1.0, %v2008
              %v2010 = vrcp.pop %v1986
              %v2011 = vmul.f32 1.0, %v2010
              %v2012 = vrcp.pop %v1987
              %v2013 = vmul.f32 1.0, %v2012
              %v2014 = vrcp.pop %v1988
              %v2015 = vmul.f32 1.0, %v2014
              %v2016 = vrcp.pop %v1989
              %v2017 = vmul.f32 1.0, %v2016
              %v2018 = vrcp.pop %v1990
              %v2019 = vmul.f32 1.0, %v2018
              %v2020 = vrcp.pop %v1991
              %v2021 = vmul.f32 1.0, %v2020
              %v2022 = vrcp.pop %v1992
              %v2023 = vmul.f32 1.0, %v2022
              %v2024 = vrcp.pop %v1993
              %v2025 = vmul.f32 1.0, %v2024
              %s2026 = scalar_lea.vmem [#allocation2], %s1976
              %v2027 = vld [vmem:[%s2026] sm:$0xff]
              %v2028 = vld [vmem:[%s2026 + $0x8] sm:$0xff]
              %v2029 = vld [vmem:[%s2026 + $0x10] sm:$0xff]
              %v2030 = vld [vmem:[%s2026 + $0x18] sm:$0xff]
              %v2031 = vld [vmem:[%s2026 + $0x20] sm:$0xff]
              %v2032 = vld [vmem:[%s2026 + $0x28] sm:$0xff]
              %v2033 = vld [vmem:[%s2026 + $0x30] sm:$0xff]
              %v2034 = vld [vmem:[%s2026 + $0x38] sm:$0xff]
              %v2035 = vld [vmem:[%s2026 + $0x40] sm:$0xff]
              %v2036 = vld [vmem:[%s2026 + $0x48] sm:$0xff]
              %v2037 = vld [vmem:[%s2026 + $0x50] sm:$0xff]
              %v2038 = vld [vmem:[%s2026 + $0x58] sm:$0xff]
              %v2039 = vld [vmem:[%s2026 + $0x60] sm:$0xff]
              %v2040 = vld [vmem:[%s2026 + $0x68] sm:$0xff]
              %v2041 = vld [vmem:[%s2026 + $0x70] sm:$0xff]
              %v2042 = vld [vmem:[%s2026 + $0x78] sm:$0xff]
              %2044 = vset.pattern.permute.xlu0 0
              %2045 = vperm.xlu0 %2044, %v1995
              %v2046 = vpop.permute.xlu0 %2045
              %2049 = vset.pattern.permute.xlu0 0
              %2050 = vperm.xlu0 %2049, %v1997
              %v2051 = vpop.permute.xlu0 %2050
              %2054 = vset.pattern.permute.xlu0 0
              %2055 = vperm.xlu0 %2054, %v1999
              %v2056 = vpop.permute.xlu0 %2055
              %2059 = vset.pattern.permute.xlu0 0
              %2060 = vperm.xlu0 %2059, %v2001
              %v2061 = vpop.permute.xlu0 %2060
              %2064 = vset.pattern.permute.xlu0 0
              %2065 = vperm.xlu0 %2064, %v2003
              %v2066 = vpop.permute.xlu0 %2065
              %2069 = vset.pattern.permute.xlu0 0
              %2070 = vperm.xlu0 %2069, %v2005
              %v2071 = vpop.permute.xlu0 %2070
              %2074 = vset.pattern.permute.xlu0 0
              %2075 = vperm.xlu0 %2074, %v2007
              %v2076 = vpop.permute.xlu0 %2075
              %2079 = vset.pattern.permute.xlu0 0
              %2080 = vperm.xlu0 %2079, %v2009
              %v2081 = vpop.permute.xlu0 %2080
              %2084 = vset.pattern.permute.xlu0 0
              %2085 = vperm.xlu0 %2084, %v2011
              %v2086 = vpop.permute.xlu0 %2085
              %2089 = vset.pattern.permute.xlu0 0
              %2090 = vperm.xlu0 %2089, %v2013
              %v2091 = vpop.permute.xlu0 %2090
              %2094 = vset.pattern.permute.xlu0 0
              %2095 = vperm.xlu0 %2094, %v2015
              %v2096 = vpop.permute.xlu0 %2095
              %2099 = vset.pattern.permute.xlu0 0
              %2100 = vperm.xlu0 %2099, %v2017
              %v2101 = vpop.permute.xlu0 %2100
              %2104 = vset.pattern.permute.xlu0 0
              %2105 = vperm.xlu0 %2104, %v2019
              %v2106 = vpop.permute.xlu0 %2105
              %2109 = vset.pattern.permute.xlu0 0
              %2110 = vperm.xlu0 %2109, %v2021
              %v2111 = vpop.permute.xlu0 %2110
              %2114 = vset.pattern.permute.xlu0 0
              %2115 = vperm.xlu0 %2114, %v2023
              %v2116 = vpop.permute.xlu0 %2115
              %2119 = vset.pattern.permute.xlu0 0
              %2120 = vperm.xlu0 %2119, %v2025
              %v2121 = vpop.permute.xlu0 %2120
              %v2123 = vmul.f32 %v2027, %v2046
              %v2124 = vmul.f32 %v2028, %v2051
              %v2125 = vmul.f32 %v2029, %v2056
              %v2126 = vmul.f32 %v2030, %v2061
              %v2127 = vmul.f32 %v2031, %v2066
              %v2128 = vmul.f32 %v2032, %v2071
              %v2129 = vmul.f32 %v2033, %v2076
              %v2130 = vmul.f32 %v2034, %v2081
              %v2131 = vmul.f32 %v2035, %v2086
              %v2132 = vmul.f32 %v2036, %v2091
              %v2133 = vmul.f32 %v2037, %v2096
              %v2134 = vmul.f32 %v2038, %v2101
              %v2135 = vmul.f32 %v2039, %v2106
              %v2136 = vmul.f32 %v2040, %v2111
              %v2137 = vmul.f32 %v2041, %v2116
              %v2138 = vmul.f32 %v2042, %v2121
              %s2139 = scalar_lea.vmem [#allocation8], %s1976
              %v2140 = vld [vmem:[%s2139] sm:$0xff]
              %v2141 = vld [vmem:[%s2139 + $0x8] sm:$0xff]
              %v2142 = vld [vmem:[%s2139 + $0x10] sm:$0xff]
              %v2143 = vld [vmem:[%s2139 + $0x18] sm:$0xff]
              %v2144 = vld [vmem:[%s2139 + $0x20] sm:$0xff]
              %v2145 = vld [vmem:[%s2139 + $0x28] sm:$0xff]
              %v2146 = vld [vmem:[%s2139 + $0x30] sm:$0xff]
              %v2147 = vld [vmem:[%s2139 + $0x38] sm:$0xff]
              %v2148 = vld [vmem:[%s2139 + $0x40] sm:$0xff]
              %v2149 = vld [vmem:[%s2139 + $0x48] sm:$0xff]
              %v2150 = vld [vmem:[%s2139 + $0x50] sm:$0xff]
              %v2151 = vld [vmem:[%s2139 + $0x58] sm:$0xff]
              %v2152 = vld [vmem:[%s2139 + $0x60] sm:$0xff]
              %v2153 = vld [vmem:[%s2139 + $0x68] sm:$0xff]
              %v2154 = vld [vmem:[%s2139 + $0x70] sm:$0xff]
              %v2155 = vld [vmem:[%s2139 + $0x78] sm:$0xff]
              %v2156 = vadd.f32 %v2123, %v2140
              %v2157 = vadd.f32 %v2124, %v2141
              %v2158 = vadd.f32 %v2125, %v2142
              %v2159 = vadd.f32 %v2126, %v2143
              %v2160 = vadd.f32 %v2127, %v2144
              %v2161 = vadd.f32 %v2128, %v2145
              %v2162 = vadd.f32 %v2129, %v2146
              %v2163 = vadd.f32 %v2130, %v2147
              %v2164 = vadd.f32 %v2131, %v2148
              %v2165 = vadd.f32 %v2132, %v2149
              %v2166 = vadd.f32 %v2133, %v2150
              %v2167 = vadd.f32 %v2134, %v2151
              %v2168 = vadd.f32 %v2135, %v2152
              %v2169 = vadd.f32 %v2136, %v2153
              %v2170 = vadd.f32 %v2137, %v2154
              %v2171 = vadd.f32 %v2138, %v2155
              %v2172 = vld [vmem:[%s4] sm:$0x1]
              %v2174 = vlaneseq
              %v2175 = vshrl.u32 %v2174, 7
              %v2176 = vsub.s32 0, %v2175
              %v2177 = vrot.slane %v2172, %v2176
              %v2179 = vadd.f32 %v2156, %v2177
              %v2180 = vadd.f32 %v2157, %v2177
              %v2181 = vadd.f32 %v2158, %v2177
              %v2182 = vadd.f32 %v2159, %v2177
              %v2183 = vadd.f32 %v2160, %v2177
              %v2184 = vadd.f32 %v2161, %v2177
              %v2185 = vadd.f32 %v2162, %v2177
              %v2186 = vadd.f32 %v2163, %v2177
              %v2187 = vadd.f32 %v2164, %v2177
              %v2188 = vadd.f32 %v2165, %v2177
              %v2189 = vadd.f32 %v2166, %v2177
              %v2190 = vadd.f32 %v2167, %v2177
              %v2191 = vadd.f32 %v2168, %v2177
              %v2192 = vadd.f32 %v2169, %v2177
              %v2193 = vadd.f32 %v2170, %v2177
              %v2194 = vadd.f32 %v2171, %v2177
              %v2195 = vmax.f32 %v2179, 0.0
              %v2196 = vmax.f32 %v2180, 0.0
              %v2197 = vmax.f32 %v2181, 0.0
              %v2198 = vmax.f32 %v2182, 0.0
              %v2199 = vmax.f32 %v2183, 0.0
              %v2200 = vmax.f32 %v2184, 0.0
              %v2201 = vmax.f32 %v2185, 0.0
              %v2202 = vmax.f32 %v2186, 0.0
              %v2203 = vmax.f32 %v2187, 0.0
              %v2204 = vmax.f32 %v2188, 0.0
              %v2205 = vmax.f32 %v2189, 0.0
              %v2206 = vmax.f32 %v2190, 0.0
              %v2207 = vmax.f32 %v2191, 0.0
              %v2208 = vmax.f32 %v2192, 0.0
              %v2209 = vmax.f32 %v2193, 0.0
              %v2210 = vmax.f32 %v2194, 0.0
              %v2211 = vld [vmem:[#allocation3] sm:$0xff]
              %v2212 = vld [vmem:[#allocation3 + $0x8] sm:$0xff]
              %v2213 = vld [vmem:[#allocation3 + $0x10] sm:$0xff]
              %v2214 = vld [vmem:[#allocation3 + $0x18] sm:$0xff]
              %v2215 = vld [vmem:[#allocation3 + $0x20] sm:$0xff]
              %v2216 = vld [vmem:[#allocation3 + $0x28] sm:$0xff]
              %v2217 = vld [vmem:[#allocation3 + $0x30] sm:$0xff]
              %v2218 = vld [vmem:[#allocation3 + $0x38] sm:$0xff]
              %v2219 = vld [vmem:[#allocation3 + $0x40] sm:$0xff]
              %v2220 = vld [vmem:[#allocation3 + $0x48] sm:$0xff]
              %v2221 = vld [vmem:[#allocation3 + $0x50] sm:$0xff]
              %v2222 = vld [vmem:[#allocation3 + $0x58] sm:$0xff]
              %v2223 = vld [vmem:[#allocation3 + $0x60] sm:$0xff]
              %v2224 = vld [vmem:[#allocation3 + $0x68] sm:$0xff]
              %v2225 = vld [vmem:[#allocation3 + $0x70] sm:$0xff]
              %v2226 = vld [vmem:[#allocation3 + $0x78] sm:$0xff]
              %2227 = vmatprep.subr.mxu0 0.0
              %2228 = vmatpush1.msra.mxu0 %v2211
              %2229 = vmatprep.subr.mxu0 0.0
              %2230 = vmatpush1.msra.mxu0 %v2212
              %2231 = vmatprep.subr.mxu0 0.0
              %2232 = vmatpush1.msra.mxu0 %v2213
              %2233 = vmatprep.subr.mxu0 0.0
              %2234 = vmatpush1.msra.mxu0 %v2214
              %2235 = vmatprep.subr.mxu0 0.0
              %2236 = vmatpush1.msra.mxu0 %v2215
              %2237 = vmatprep.subr.mxu0 0.0
              %2238 = vmatpush1.msra.mxu0 %v2216
              %2239 = vmatprep.subr.mxu0 0.0
              %2240 = vmatpush1.msra.mxu0 %v2217
              %2241 = vmatprep.subr.mxu0 0.0
              %2242 = vmatpush1.msra.mxu0 %v2218
              %2243 = vmatprep.subr.mxu0 0.0
              %2244 = vmatpush1.msra.mxu0 %v2219
              %2245 = vmatprep.subr.mxu0 0.0
              %2246 = vmatpush1.msra.mxu0 %v2220
              %2247 = vmatprep.subr.mxu0 0.0
              %2248 = vmatpush1.msra.mxu0 %v2221
              %2249 = vmatprep.subr.mxu0 0.0
              %2250 = vmatpush1.msra.mxu0 %v2222
              %2251 = vmatprep.subr.mxu0 0.0
              %2252 = vmatpush1.msra.mxu0 %v2223
              %2253 = vmatprep.subr.mxu0 0.0
              %2254 = vmatpush1.msra.mxu0 %v2224
              %2255 = vmatprep.subr.mxu0 0.0
              %2256 = vmatpush1.msra.mxu0 %v2225
              %2257 = vmatprep.subr.mxu0 0.0
              %2258 = vmatpush1.msra.mxu0 %v2226
              %2259 = vmatprep.subr.mxu0 0.0
              %2260 = vmatpush1.msra.mxu0 0.0
              %2261 = vmatprep.subr.mxu0 0.0
              %2262 = vmatpush1.msra.mxu0 0.0
              %2263 = vmatprep.subr.mxu0 0.0
              %2264 = vmatpush1.msra.mxu0 0.0
              %2265 = vmatprep.subr.mxu0 0.0
              %2266 = vmatpush1.msra.mxu0 0.0
              %2267 = vmatprep.subr.mxu0 0.0
              %2268 = vmatpush1.msra.mxu0 0.0
              %2269 = vmatprep.subr.mxu0 0.0
              %2270 = vmatpush1.msra.mxu0 0.0
              %2271 = vmatprep.subr.mxu0 0.0
              %2272 = vmatpush1.msra.mxu0 0.0
              %2273 = vmatprep.subr.mxu0 0.0
              %2274 = vmatpush1.msra.mxu0 0.0
              %2275 = vmatprep.subr.mxu0 0.0
              %2276 = vmatpush1.msra.mxu0 0.0
              %2277 = vmatprep.subr.mxu0 0.0
              %2278 = vmatpush1.msra.mxu0 0.0
              %2279 = vmatprep.subr.mxu0 0.0
              %2280 = vmatpush1.msra.mxu0 0.0
              %2281 = vmatprep.subr.mxu0 0.0
              %2282 = vmatpush1.msra.mxu0 0.0
              %2283 = vmatprep.subr.mxu0 0.0
              %2284 = vmatpush1.msra.mxu0 0.0
              %2285 = vmatprep.subr.mxu0 0.0
              %2286 = vmatpush1.msra.mxu0 0.0
              %2287 = vmatprep.subr.mxu0 0.0
              %2288 = vmatpush1.msra.mxu0 0.0
              %2289 = vmatprep.subr.mxu0 0.0
              %2290 = vmatpush1.msra.mxu0 0.0
              %2291 = vmatprep.mubr.f32.mxu0 0.0
              %2292 = vmatmul.mubr.f32.gmra.mrb[0].mxu0 %v2195
              %v2293 = vpop.f32.mrb[0].mxu0
              %v2294 = vadd.f32 0.0, %v2293
              %v2295 = vpop.f32.mrb[0].mxu0
              %2296 = vmatprep.mubr.f32.mxu0 0.0
              %2297 = vmatmul.mubr.f32.gmra.mrb[0].mxu0 %v2196
              %v2298 = vpop.f32.mrb[0].mxu0
              %v2299 = vadd.f32 0.0, %v2298
              %v2300 = vpop.f32.mrb[0].mxu0
              %2301 = vmatprep.mubr.f32.mxu0 0.0
              %2302 = vmatmul.mubr.f32.gmra.mrb[0].mxu0 %v2197
              %v2303 = vpop.f32.mrb[0].mxu0
              %v2304 = vadd.f32 0.0, %v2303
              %v2305 = vpop.f32.mrb[0].mxu0
              %2306 = vmatprep.mubr.f32.mxu0 0.0
              %2307 = vmatmul.mubr.f32.gmra.mrb[0].mxu0 %v2198
              %v2308 = vpop.f32.mrb[0].mxu0
              %v2309 = vadd.f32 0.0, %v2308
              %v2310 = vpop.f32.mrb[0].mxu0
              %2311 = vmatprep.mubr.f32.mxu0 0.0
              %2312 = vmatmul.mubr.f32.gmra.mrb[0].mxu0 %v2199
              %v2313 = vpop.f32.mrb[0].mxu0
              %v2314 = vadd.f32 0.0, %v2313
              %v2315 = vpop.f32.mrb[0].mxu0
              %2316 = vmatprep.mubr.f32.mxu0 0.0
              %2317 = vmatmul.mubr.f32.gmra.mrb[0].mxu0 %v2200
              %v2318 = vpop.f32.mrb[0].mxu0
              %v2319 = vadd.f32 0.0, %v2318
              %v2320 = vpop.f32.mrb[0].mxu0
              %2321 = vmatprep.mubr.f32.mxu0 0.0
              %2322 = vmatmul.mubr.f32.gmra.mrb[0].mxu0 %v2201
              %v2323 = vpop.f32.mrb[0].mxu0
              %v2324 = vadd.f32 0.0, %v2323
              %v2325 = vpop.f32.mrb[0].mxu0
              %2326 = vmatprep.mubr.f32.mxu0 0.0
              %2327 = vmatmul.mubr.f32.gmra.mrb[0].mxu0 %v2202
              %v2328 = vpop.f32.mrb[0].mxu0
              %v2329 = vadd.f32 0.0, %v2328
              %v2330 = vpop.f32.mrb[0].mxu0
              %2331 = vmatprep.mubr.f32.mxu0 0.0
              %2332 = vmatmul.mubr.f32.gmra.mrb[0].mxu0 %v2203
              %v2333 = vpop.f32.mrb[0].mxu0
              %v2334 = vadd.f32 0.0, %v2333
              %v2335 = vpop.f32.mrb[0].mxu0
              %2336 = vmatprep.mubr.f32.mxu0 0.0
              %2337 = vmatmul.mubr.f32.gmra.mrb[0].mxu0 %v2204
              %v2338 = vpop.f32.mrb[0].mxu0
              %v2339 = vadd.f32 0.0, %v2338
              %v2340 = vpop.f32.mrb[0].mxu0
              %2341 = vmatprep.mubr.f32.mxu0 0.0
              %2342 = vmatmul.mubr.f32.gmra.mrb[0].mxu0 %v2205
              %v2343 = vpop.f32.mrb[0].mxu0
              %v2344 = vadd.f32 0.0, %v2343
              %v2345 = vpop.f32.mrb[0].mxu0
              %2346 = vmatprep.mubr.f32.mxu0 0.0
              %2347 = vmatmul.mubr.f32.gmra.mrb[0].mxu0 %v2206
              %v2348 = vpop.f32.mrb[0].mxu0
              %v2349 = vadd.f32 0.0, %v2348
              %v2350 = vpop.f32.mrb[0].mxu0
              %2351 = vmatprep.mubr.f32.mxu0 0.0
              %2352 = vmatmul.mubr.f32.gmra.mrb[0].mxu0 %v2207
              %v2353 = vpop.f32.mrb[0].mxu0
              %v2354 = vadd.f32 0.0, %v2353
              %v2355 = vpop.f32.mrb[0].mxu0
              %2356 = vmatprep.mubr.f32.mxu0 0.0
              %2357 = vmatmul.mubr.f32.gmra.mrb[0].mxu0 %v2208
              %v2358 = vpop.f32.mrb[0].mxu0
              %v2359 = vadd.f32 0.0, %v2358
              %v2360 = vpop.f32.mrb[0].mxu0
              %2361 = vmatprep.mubr.f32.mxu0 0.0
              %2362 = vmatmul.mubr.f32.gmra.mrb[0].mxu0 %v2209
              %v2363 = vpop.f32.mrb[0].mxu0
              %v2364 = vadd.f32 0.0, %v2363
              %v2365 = vpop.f32.mrb[0].mxu0
              %2366 = vmatprep.mubr.f32.mxu0 0.0
              %2367 = vmatmul.mubr.f32.gmra.mrb[0].mxu0 %v2210
              %v2368 = vpop.f32.mrb[0].mxu0
              %v2369 = vadd.f32 0.0, %v2368
              %v2370 = vpop.f32.mrb[0].mxu0
              %2371 = vdwg.mxu0
              %2372 = vst [vmem:[%s2026] sm:$0xff] %v2294
              %2373 = vst [vmem:[%s2026 + $0x8] sm:$0xff] %v2299
              %2374 = vst [vmem:[%s2026 + $0x10] sm:$0xff] %v2304
              %2375 = vst [vmem:[%s2026 + $0x18] sm:$0xff] %v2309
              %2376 = vst [vmem:[%s2026 + $0x20] sm:$0xff] %v2314
              %2377 = vst [vmem:[%s2026 + $0x28] sm:$0xff] %v2319
              %2378 = vst [vmem:[%s2026 + $0x30] sm:$0xff] %v2324
              %2379 = vst [vmem:[%s2026 + $0x38] sm:$0xff] %v2329
              %2380 = vst [vmem:[%s2026 + $0x40] sm:$0xff] %v2334
              %2381 = vst [vmem:[%s2026 + $0x48] sm:$0xff] %v2339
              %2382 = vst [vmem:[%s2026 + $0x50] sm:$0xff] %v2344
              %2383 = vst [vmem:[%s2026 + $0x58] sm:$0xff] %v2349
              %2384 = vst [vmem:[%s2026 + $0x60] sm:$0xff] %v2354
              %2385 = vst [vmem:[%s2026 + $0x68] sm:$0xff] %v2359
              %2386 = vst [vmem:[%s2026 + $0x70] sm:$0xff] %v2364
              %2387 = vst [vmem:[%s2026 + $0x78] sm:$0xff] %v2369
              %v2388 = vld [vmem:[#allocation6] sm:$0xff]
              %v2389 = vld [vmem:[#allocation6 + $0x8] sm:$0xff]
              %v2390 = vld [vmem:[#allocation6 + $0x10] sm:$0xff]
              %v2391 = vld [vmem:[#allocation6 + $0x18] sm:$0xff]
              %v2392 = vld [vmem:[#allocation6 + $0x20] sm:$0xff]
              %v2393 = vld [vmem:[#allocation6 + $0x28] sm:$0xff]
              %v2394 = vld [vmem:[#allocation6 + $0x30] sm:$0xff]
              %v2395 = vld [vmem:[#allocation6 + $0x38] sm:$0xff]
              %v2396 = vld [vmem:[#allocation6 + $0x40] sm:$0xff]
              %v2397 = vld [vmem:[#allocation6 + $0x48] sm:$0xff]
              %v2398 = vld [vmem:[#allocation6 + $0x50] sm:$0xff]
              %v2399 = vld [vmem:[#allocation6 + $0x58] sm:$0xff]
              %v2400 = vld [vmem:[#allocation6 + $0x60] sm:$0xff]
              %v2401 = vld [vmem:[#allocation6 + $0x68] sm:$0xff]
              %v2402 = vld [vmem:[#allocation6 + $0x70] sm:$0xff]
              %v2403 = vld [vmem:[#allocation6 + $0x78] sm:$0xff]
              %v2404 = vld [vmem:[%s7] sm:$0x1]
              %v2406 = vlaneseq
              %v2407 = vshrl.u32 %v2406, 7
              %v2408 = vsub.s32 0, %v2407
              %v2409 = vrot.slane %v2404, %v2408
              %2411 = vmatprep.subr.mxu0 0.0
              %2412 = vmatpush1.msra.mxu0 %v2388
              %2413 = vmatprep.subr.mxu0 0.0
              %2414 = vmatpush1.msra.mxu0 %v2389
              %2415 = vmatprep.subr.mxu0 0.0
              %2416 = vmatpush1.msra.mxu0 %v2390
              %2417 = vmatprep.subr.mxu0 0.0
              %2418 = vmatpush1.msra.mxu0 %v2391
              %2419 = vmatprep.subr.mxu0 0.0
              %2420 = vmatpush1.msra.mxu0 %v2392
              %2421 = vmatprep.subr.mxu0 0.0
              %2422 = vmatpush1.msra.mxu0 %v2393
              %2423 = vmatprep.subr.mxu0 0.0
              %2424 = vmatpush1.msra.mxu0 %v2394
              %2425 = vmatprep.subr.mxu0 0.0
              %2426 = vmatpush1.msra.mxu0 %v2395
              %2427 = vmatprep.subr.mxu0 0.0
              %2428 = vmatpush1.msra.mxu0 %v2396
              %2429 = vmatprep.subr.mxu0 0.0
              %2430 = vmatpush1.msra.mxu0 %v2397
              %2431 = vmatprep.subr.mxu0 0.0
              %2432 = vmatpush1.msra.mxu0 %v2398
              %2433 = vmatprep.subr.mxu0 0.0
              %2434 = vmatpush1.msra.mxu0 %v2399
              %2435 = vmatprep.subr.mxu0 0.0
              %2436 = vmatpush1.msra.mxu0 %v2400
              %2437 = vmatprep.subr.mxu0 0.0
              %2438 = vmatpush1.msra.mxu0 %v2401
              %2439 = vmatprep.subr.mxu0 0.0
              %2440 = vmatpush1.msra.mxu0 %v2402
              %2441 = vmatprep.subr.mxu0 0.0
              %2442 = vmatpush1.msra.mxu0 %v2403
              %2443 = vmatprep.subr.mxu0 0.0
              %2444 = vmatpush1.msra.mxu0 0.0
              %2445 = vmatprep.subr.mxu0 0.0
              %2446 = vmatpush1.msra.mxu0 0.0
              %2447 = vmatprep.subr.mxu0 0.0
              %2448 = vmatpush1.msra.mxu0 0.0
              %2449 = vmatprep.subr.mxu0 0.0
              %2450 = vmatpush1.msra.mxu0 0.0
              %2451 = vmatprep.subr.mxu0 0.0
              %2452 = vmatpush1.msra.mxu0 0.0
              %2453 = vmatprep.subr.mxu0 0.0
              %2454 = vmatpush1.msra.mxu0 0.0
              %2455 = vmatprep.subr.mxu0 0.0
              %2456 = vmatpush1.msra.mxu0 0.0
              %2457 = vmatprep.subr.mxu0 0.0
              %2458 = vmatpush1.msra.mxu0 0.0
              %2459 = vmatprep.subr.mxu0 0.0
              %2460 = vmatpush1.msra.mxu0 0.0
              %2461 = vmatprep.subr.mxu0 0.0
              %2462 = vmatpush1.msra.mxu0 0.0
              %2463 = vmatprep.subr.mxu0 0.0
              %2464 = vmatpush1.msra.mxu0 0.0
              %2465 = vmatprep.subr.mxu0 0.0
              %2466 = vmatpush1.msra.mxu0 0.0
              %2467 = vmatprep.subr.mxu0 0.0
              %2468 = vmatpush1.msra.mxu0 0.0
              %2469 = vmatprep.subr.mxu0 0.0
              %2470 = vmatpush1.msra.mxu0 0.0
              %2471 = vmatprep.subr.mxu0 0.0
              %2472 = vmatpush1.msra.mxu0 0.0
              %2473 = vmatprep.subr.mxu0 0.0
              %2474 = vmatpush1.msra.mxu0 0.0
              %2475 = vmatprep.mubr.f32.mxu0 0.0
              %2476 = vmatmul.mubr.f32.gmra.mrb[0].mxu0 %v2195
              %v2477 = vpop.f32.mrb[0].mxu0
              %v2478 = vadd.f32 %v2409, %v2477
              %v2479 = vpop.f32.mrb[0].mxu0
              %2480 = vmatprep.mubr.f32.mxu0 0.0
              %2481 = vmatmul.mubr.f32.gmra.mrb[0].mxu0 %v2196
              %v2482 = vpop.f32.mrb[0].mxu0
              %v2483 = vadd.f32 %v2409, %v2482
              %v2484 = vpop.f32.mrb[0].mxu0
              %2485 = vmatprep.mubr.f32.mxu0 0.0
              %2486 = vmatmul.mubr.f32.gmra.mrb[0].mxu0 %v2197
              %v2487 = vpop.f32.mrb[0].mxu0
              %v2488 = vadd.f32 %v2409, %v2487
              %v2489 = vpop.f32.mrb[0].mxu0
              %2490 = vmatprep.mubr.f32.mxu0 0.0
              %2491 = vmatmul.mubr.f32.gmra.mrb[0].mxu0 %v2198
              %v2492 = vpop.f32.mrb[0].mxu0
              %v2493 = vadd.f32 %v2409, %v2492
              %v2494 = vpop.f32.mrb[0].mxu0
              %2495 = vmatprep.mubr.f32.mxu0 0.0
              %2496 = vmatmul.mubr.f32.gmra.mrb[0].mxu0 %v2199
              %v2497 = vpop.f32.mrb[0].mxu0
              %v2498 = vadd.f32 %v2409, %v2497
              %v2499 = vpop.f32.mrb[0].mxu0
              %2500 = vmatprep.mubr.f32.mxu0 0.0
              %2501 = vmatmul.mubr.f32.gmra.mrb[0].mxu0 %v2200
              %v2502 = vpop.f32.mrb[0].mxu0
              %v2503 = vadd.f32 %v2409, %v2502
              %v2504 = vpop.f32.mrb[0].mxu0
              %2505 = vmatprep.mubr.f32.mxu0 0.0
              %2506 = vmatmul.mubr.f32.gmra.mrb[0].mxu0 %v2201
              %v2507 = vpop.f32.mrb[0].mxu0
              %v2508 = vadd.f32 %v2409, %v2507
              %v2509 = vpop.f32.mrb[0].mxu0
              %2510 = vmatprep.mubr.f32.mxu0 0.0
              %2511 = vmatmul.mubr.f32.gmra.mrb[0].mxu0 %v2202
              %v2512 = vpop.f32.mrb[0].mxu0
              %v2513 = vadd.f32 %v2409, %v2512
              %v2514 = vpop.f32.mrb[0].mxu0
              %2515 = vmatprep.mubr.f32.mxu0 0.0
              %2516 = vmatmul.mubr.f32.gmra.mrb[0].mxu0 %v2203
              %v2517 = vpop.f32.mrb[0].mxu0
              %v2518 = vadd.f32 %v2409, %v2517
              %v2519 = vpop.f32.mrb[0].mxu0
              %2520 = vmatprep.mubr.f32.mxu0 0.0
              %2521 = vmatmul.mubr.f32.gmra.mrb[0].mxu0 %v2204
              %v2522 = vpop.f32.mrb[0].mxu0
              %v2523 = vadd.f32 %v2409, %v2522
              %v2524 = vpop.f32.mrb[0].mxu0
              %2525 = vmatprep.mubr.f32.mxu0 0.0
              %2526 = vmatmul.mubr.f32.gmra.mrb[0].mxu0 %v2205
              %v2527 = vpop.f32.mrb[0].mxu0
              %v2528 = vadd.f32 %v2409, %v2527
              %v2529 = vpop.f32.mrb[0].mxu0
              %2530 = vmatprep.mubr.f32.mxu0 0.0
              %2531 = vmatmul.mubr.f32.gmra.mrb[0].mxu0 %v2206
              %v2532 = vpop.f32.mrb[0].mxu0
              %v2533 = vadd.f32 %v2409, %v2532
              %v2534 = vpop.f32.mrb[0].mxu0
              %2535 = vmatprep.mubr.f32.mxu0 0.0
              %2536 = vmatmul.mubr.f32.gmra.mrb[0].mxu0 %v2207
              %v2537 = vpop.f32.mrb[0].mxu0
              %v2538 = vadd.f32 %v2409, %v2537
              %v2539 = vpop.f32.mrb[0].mxu0
              %2540 = vmatprep.mubr.f32.mxu0 0.0
              %2541 = vmatmul.mubr.f32.gmra.mrb[0].mxu0 %v2208
              %v2542 = vpop.f32.mrb[0].mxu0
              %v2543 = vadd.f32 %v2409, %v2542
              %v2544 = vpop.f32.mrb[0].mxu0
              %2545 = vmatprep.mubr.f32.mxu0 0.0
              %2546 = vmatmul.mubr.f32.gmra.mrb[0].mxu0 %v2209
              %v2547 = vpop.f32.mrb[0].mxu0
              %v2548 = vadd.f32 %v2409, %v2547
              %v2549 = vpop.f32.mrb[0].mxu0
              %2550 = vmatprep.mubr.f32.mxu0 0.0
              %2551 = vmatmul.mubr.f32.gmra.mrb[0].mxu0 %v2210
              %v2552 = vpop.f32.mrb[0].mxu0
              %v2553 = vadd.f32 %v2409, %v2552
              %v2554 = vpop.f32.mrb[0].mxu0
              %2555 = vdwg.mxu0
              %2557 = vset.pattern.permute.xlu0 0
              %2558 = vperm.xlu0 %2557, %v1978
              %v2559 = vpop.permute.xlu0 %2558
              %2562 = vset.pattern.permute.xlu0 0
              %2563 = vperm.xlu0 %2562, %v1979
              %v2564 = vpop.permute.xlu0 %2563
              %2567 = vset.pattern.permute.xlu0 0
              %2568 = vperm.xlu0 %2567, %v1980
              %v2569 = vpop.permute.xlu0 %2568
              %2572 = vset.pattern.permute.xlu0 0
              %2573 = vperm.xlu0 %2572, %v1981
              %v2574 = vpop.permute.xlu0 %2573
              %2577 = vset.pattern.permute.xlu0 0
              %2578 = vperm.xlu0 %2577, %v1982
              %v2579 = vpop.permute.xlu0 %2578
              %2582 = vset.pattern.permute.xlu0 0
              %2583 = vperm.xlu0 %2582, %v1983
              %v2584 = vpop.permute.xlu0 %2583
              %2587 = vset.pattern.permute.xlu0 0
              %2588 = vperm.xlu0 %2587, %v1984
              %v2589 = vpop.permute.xlu0 %2588
              %2592 = vset.pattern.permute.xlu0 0
              %2593 = vperm.xlu0 %2592, %v1985
              %v2594 = vpop.permute.xlu0 %2593
              %2597 = vset.pattern.permute.xlu0 0
              %2598 = vperm.xlu0 %2597, %v1986
              %v2599 = vpop.permute.xlu0 %2598
              %2602 = vset.pattern.permute.xlu0 0
              %2603 = vperm.xlu0 %2602, %v1987
              %v2604 = vpop.permute.xlu0 %2603
              %2607 = vset.pattern.permute.xlu0 0
              %2608 = vperm.xlu0 %2607, %v1988
              %v2609 = vpop.permute.xlu0 %2608
              %2612 = vset.pattern.permute.xlu0 0
              %2613 = vperm.xlu0 %2612, %v1989
              %v2614 = vpop.permute.xlu0 %2613
              %2617 = vset.pattern.permute.xlu0 0
              %2618 = vperm.xlu0 %2617, %v1990
              %v2619 = vpop.permute.xlu0 %2618
              %2622 = vset.pattern.permute.xlu0 0
              %2623 = vperm.xlu0 %2622, %v1991
              %v2624 = vpop.permute.xlu0 %2623
              %2627 = vset.pattern.permute.xlu0 0
              %2628 = vperm.xlu0 %2627, %v1992
              %v2629 = vpop.permute.xlu0 %2628
              %2632 = vset.pattern.permute.xlu0 0
              %2633 = vperm.xlu0 %2632, %v1993
              %v2634 = vpop.permute.xlu0 %2633
              %v2636 = vmul.f32 %v2478, %v2559
              %v2637 = vmul.f32 %v2483, %v2564
              %v2638 = vmul.f32 %v2488, %v2569
              %v2639 = vmul.f32 %v2493, %v2574
              %v2640 = vmul.f32 %v2498, %v2579
              %v2641 = vmul.f32 %v2503, %v2584
              %v2642 = vmul.f32 %v2508, %v2589
              %v2643 = vmul.f32 %v2513, %v2594
              %v2644 = vmul.f32 %v2518, %v2599
              %v2645 = vmul.f32 %v2523, %v2604
              %v2646 = vmul.f32 %v2528, %v2609
              %v2647 = vmul.f32 %v2533, %v2614
              %v2648 = vmul.f32 %v2538, %v2619
              %v2649 = vmul.f32 %v2543, %v2624
              %v2650 = vmul.f32 %v2548, %v2629
              %v2651 = vmul.f32 %v2553, %v2634
              %2652 = vst [vmem:[%s2139] sm:$0xff] %v2636
              %2653 = vst [vmem:[%s2139 + $0x8] sm:$0xff] %v2637
              %2654 = vst [vmem:[%s2139 + $0x10] sm:$0xff] %v2638
              %2655 = vst [vmem:[%s2139 + $0x18] sm:$0xff] %v2639
              %2656 = vst [vmem:[%s2139 + $0x20] sm:$0xff] %v2640
              %2657 = vst [vmem:[%s2139 + $0x28] sm:$0xff] %v2641
              %2658 = vst [vmem:[%s2139 + $0x30] sm:$0xff] %v2642
              %2659 = vst [vmem:[%s2139 + $0x38] sm:$0xff] %v2643
              %2660 = vst [vmem:[%s2139 + $0x40] sm:$0xff] %v2644
              %2661 = vst [vmem:[%s2139 + $0x48] sm:$0xff] %v2645
              %2662 = vst [vmem:[%s2139 + $0x50] sm:$0xff] %v2646
              %2663 = vst [vmem:[%s2139 + $0x58] sm:$0xff] %v2647
              %2664 = vst [vmem:[%s2139 + $0x60] sm:$0xff] %v2648
              %2665 = vst [vmem:[%s2139 + $0x68] sm:$0xff] %v2649
              %2666 = vst [vmem:[%s2139 + $0x70] sm:$0xff] %v2650
              %2667 = vst [vmem:[%s2139 + $0x78] sm:$0xff] %v2651
            $region81: #{tpu_custom_call.1} parent=75 // loop_footer
              %s1975 = sadd.s32 1, %s1971
            $region82: #{tpu_custom_call.1} parent=75 // loop_footer_branch
              %1970 = sbr.rel target = $region78
            $region83: #{tpu_custom_call.1} parent=75 // loop_exit
              _
          $region76: #{tpu_custom_call.1} parent=67 // pred_fallthru
            _
        $region68: #{tpu_custom_call.1} parent=55 // pred_fallthru
          _
        %p2668 = scmp.eq.s32.totalorder %s27, 1
        // Predicated region
        $region84: #{tpu_custom_call.1} parent=55 // pred_check
          %p2669 = pneg %p2668
        $region85: #{tpu_custom_call.1} parent=55 // pred_check_branch
          %2671 = sbr.rel (%p2669) target = $region87
        $region86: #{tpu_custom_call.1} parent=55 // pred_region
          %s2672 = scalar_lea.vmem [#allocation2], %s398
          %v2673 = vld [vmem:[%s2672] sm:$0xff]
          %v2674 = vld [vmem:[%s2672 + $0x8] sm:$0xff]
          %v2675 = vld [vmem:[%s2672 + $0x10] sm:$0xff]
          %v2676 = vld [vmem:[%s2672 + $0x18] sm:$0xff]
          %v2677 = vld [vmem:[%s2672 + $0x20] sm:$0xff]
          %v2678 = vld [vmem:[%s2672 + $0x28] sm:$0xff]
          %v2679 = vld [vmem:[%s2672 + $0x30] sm:$0xff]
          %v2680 = vld [vmem:[%s2672 + $0x38] sm:$0xff]
          %v2681 = vld [vmem:[%s2672 + $0x40] sm:$0xff]
          %v2682 = vld [vmem:[%s2672 + $0x48] sm:$0xff]
          %v2683 = vld [vmem:[%s2672 + $0x50] sm:$0xff]
          %v2684 = vld [vmem:[%s2672 + $0x58] sm:$0xff]
          %v2685 = vld [vmem:[%s2672 + $0x60] sm:$0xff]
          %v2686 = vld [vmem:[%s2672 + $0x68] sm:$0xff]
          %v2687 = vld [vmem:[%s2672 + $0x70] sm:$0xff]
          %v2688 = vld [vmem:[%s2672 + $0x78] sm:$0xff]
          %v2689 = vld [vmem:[%s2672 + $0x80] sm:$0xff]
          %v2690 = vld [vmem:[%s2672 + $0x88] sm:$0xff]
          %v2691 = vld [vmem:[%s2672 + $0x90] sm:$0xff]
          %v2692 = vld [vmem:[%s2672 + $0x98] sm:$0xff]
          %v2693 = vld [vmem:[%s2672 + $0xa0] sm:$0xff]
          %v2694 = vld [vmem:[%s2672 + $0xa8] sm:$0xff]
          %v2695 = vld [vmem:[%s2672 + $0xb0] sm:$0xff]
          %v2696 = vld [vmem:[%s2672 + $0xb8] sm:$0xff]
          %v2697 = vld [vmem:[%s2672 + $0xc0] sm:$0xff]
          %v2698 = vld [vmem:[%s2672 + $0xc8] sm:$0xff]
          %v2699 = vld [vmem:[%s2672 + $0xd0] sm:$0xff]
          %v2700 = vld [vmem:[%s2672 + $0xd8] sm:$0xff]
          %v2701 = vld [vmem:[%s2672 + $0xe0] sm:$0xff]
          %v2702 = vld [vmem:[%s2672 + $0xe8] sm:$0xff]
          %v2703 = vld [vmem:[%s2672 + $0xf0] sm:$0xff]
          %v2704 = vld [vmem:[%s2672 + $0xf8] sm:$0xff]
          %v2705 = vld [vmem:[#allocation8] sm:$0xff]
          %v2706 = vld [vmem:[#allocation8 + $0x8] sm:$0xff]
          %v2707 = vld [vmem:[#allocation8 + $0x10] sm:$0xff]
          %v2708 = vld [vmem:[#allocation8 + $0x18] sm:$0xff]
          %v2709 = vld [vmem:[#allocation8 + $0x20] sm:$0xff]
          %v2710 = vld [vmem:[#allocation8 + $0x28] sm:$0xff]
          %v2711 = vld [vmem:[#allocation8 + $0x30] sm:$0xff]
          %v2712 = vld [vmem:[#allocation8 + $0x38] sm:$0xff]
          %v2713 = vld [vmem:[#allocation8 + $0x40] sm:$0xff]
          %v2714 = vld [vmem:[#allocation8 + $0x48] sm:$0xff]
          %v2715 = vld [vmem:[#allocation8 + $0x50] sm:$0xff]
          %v2716 = vld [vmem:[#allocation8 + $0x58] sm:$0xff]
          %v2717 = vld [vmem:[#allocation8 + $0x60] sm:$0xff]
          %v2718 = vld [vmem:[#allocation8 + $0x68] sm:$0xff]
          %v2719 = vld [vmem:[#allocation8 + $0x70] sm:$0xff]
          %v2720 = vld [vmem:[#allocation8 + $0x78] sm:$0xff]
          %v2721 = vld [vmem:[#allocation8 + $0x80] sm:$0xff]
          %v2722 = vld [vmem:[#allocation8 + $0x88] sm:$0xff]
          %v2723 = vld [vmem:[#allocation8 + $0x90] sm:$0xff]
          %v2724 = vld [vmem:[#allocation8 + $0x98] sm:$0xff]
          %v2725 = vld [vmem:[#allocation8 + $0xa0] sm:$0xff]
          %v2726 = vld [vmem:[#allocation8 + $0xa8] sm:$0xff]
          %v2727 = vld [vmem:[#allocation8 + $0xb0] sm:$0xff]
          %v2728 = vld [vmem:[#allocation8 + $0xb8] sm:$0xff]
          %v2729 = vld [vmem:[#allocation8 + $0xc0] sm:$0xff]
          %v2730 = vld [vmem:[#allocation8 + $0xc8] sm:$0xff]
          %v2731 = vld [vmem:[#allocation8 + $0xd0] sm:$0xff]
          %v2732 = vld [vmem:[#allocation8 + $0xd8] sm:$0xff]
          %v2733 = vld [vmem:[#allocation8 + $0xe0] sm:$0xff]
          %v2734 = vld [vmem:[#allocation8 + $0xe8] sm:$0xff]
          %v2735 = vld [vmem:[#allocation8 + $0xf0] sm:$0xff]
          %v2736 = vld [vmem:[#allocation8 + $0xf8] sm:$0xff]
          %v2737 = vld [vmem:[#allocation8 + $0x100] sm:$0xff]
          %v2738 = vld [vmem:[#allocation8 + $0x108] sm:$0xff]
          %v2739 = vld [vmem:[#allocation8 + $0x110] sm:$0xff]
          %v2740 = vld [vmem:[#allocation8 + $0x118] sm:$0xff]
          %v2741 = vld [vmem:[#allocation8 + $0x120] sm:$0xff]
          %v2742 = vld [vmem:[#allocation8 + $0x128] sm:$0xff]
          %v2743 = vld [vmem:[#allocation8 + $0x130] sm:$0xff]
          %v2744 = vld [vmem:[#allocation8 + $0x138] sm:$0xff]
          %v2745 = vld [vmem:[#allocation8 + $0x140] sm:$0xff]
          %v2746 = vld [vmem:[#allocation8 + $0x148] sm:$0xff]
          %v2747 = vld [vmem:[#allocation8 + $0x150] sm:$0xff]
          %v2748 = vld [vmem:[#allocation8 + $0x158] sm:$0xff]
          %v2749 = vld [vmem:[#allocation8 + $0x160] sm:$0xff]
          %v2750 = vld [vmem:[#allocation8 + $0x168] sm:$0xff]
          %v2751 = vld [vmem:[#allocation8 + $0x170] sm:$0xff]
          %v2752 = vld [vmem:[#allocation8 + $0x178] sm:$0xff]
          %v2753 = vld [vmem:[#allocation8 + $0x180] sm:$0xff]
          %v2754 = vld [vmem:[#allocation8 + $0x188] sm:$0xff]
          %v2755 = vld [vmem:[#allocation8 + $0x190] sm:$0xff]
          %v2756 = vld [vmem:[#allocation8 + $0x198] sm:$0xff]
          %v2757 = vld [vmem:[#allocation8 + $0x1a0] sm:$0xff]
          %v2758 = vld [vmem:[#allocation8 + $0x1a8] sm:$0xff]
          %v2759 = vld [vmem:[#allocation8 + $0x1b0] sm:$0xff]
          %v2760 = vld [vmem:[#allocation8 + $0x1b8] sm:$0xff]
          %v2761 = vld [vmem:[#allocation8 + $0x1c0] sm:$0xff]
          %v2762 = vld [vmem:[#allocation8 + $0x1c8] sm:$0xff]
          %v2763 = vld [vmem:[#allocation8 + $0x1d0] sm:$0xff]
          %v2764 = vld [vmem:[#allocation8 + $0x1d8] sm:$0xff]
          %v2765 = vld [vmem:[#allocation8 + $0x1e0] sm:$0xff]
          %v2766 = vld [vmem:[#allocation8 + $0x1e8] sm:$0xff]
          %v2767 = vld [vmem:[#allocation8 + $0x1f0] sm:$0xff]
          %v2768 = vld [vmem:[#allocation8 + $0x1f8] sm:$0xff]
          %v2769 = vld [vmem:[%s386] sm:$0xff]
          %v2770 = vld [vmem:[%s386 + $0x8] sm:$0xff]
          %v2771 = vld [vmem:[%s386 + $0x10] sm:$0xff]
          %v2772 = vld [vmem:[%s386 + $0x18] sm:$0xff]
          %v2773 = vld [vmem:[%s386 + $0x20] sm:$0xff]
          %v2774 = vld [vmem:[%s386 + $0x28] sm:$0xff]
          %v2775 = vld [vmem:[%s386 + $0x30] sm:$0xff]
          %v2776 = vld [vmem:[%s386 + $0x38] sm:$0xff]
          %v2777 = vld [vmem:[%s386 + $0x40] sm:$0xff]
          %v2778 = vld [vmem:[%s386 + $0x48] sm:$0xff]
          %v2779 = vld [vmem:[%s386 + $0x50] sm:$0xff]
          %v2780 = vld [vmem:[%s386 + $0x58] sm:$0xff]
          %v2781 = vld [vmem:[%s386 + $0x60] sm:$0xff]
          %v2782 = vld [vmem:[%s386 + $0x68] sm:$0xff]
          %v2783 = vld [vmem:[%s386 + $0x70] sm:$0xff]
          %v2784 = vld [vmem:[%s386 + $0x78] sm:$0xff]
          %v2785 = vld [vmem:[%s386 + $0x80] sm:$0xff]
          %v2786 = vld [vmem:[%s386 + $0x88] sm:$0xff]
          %v2787 = vld [vmem:[%s386 + $0x90] sm:$0xff]
          %v2788 = vld [vmem:[%s386 + $0x98] sm:$0xff]
          %v2789 = vld [vmem:[%s386 + $0xa0] sm:$0xff]
          %v2790 = vld [vmem:[%s386 + $0xa8] sm:$0xff]
          %v2791 = vld [vmem:[%s386 + $0xb0] sm:$0xff]
          %v2792 = vld [vmem:[%s386 + $0xb8] sm:$0xff]
          %v2793 = vld [vmem:[%s386 + $0xc0] sm:$0xff]
          %v2794 = vld [vmem:[%s386 + $0xc8] sm:$0xff]
          %v2795 = vld [vmem:[%s386 + $0xd0] sm:$0xff]
          %v2796 = vld [vmem:[%s386 + $0xd8] sm:$0xff]
          %v2797 = vld [vmem:[%s386 + $0xe0] sm:$0xff]
          %v2798 = vld [vmem:[%s386 + $0xe8] sm:$0xff]
          %v2799 = vld [vmem:[%s386 + $0xf0] sm:$0xff]
          %v2800 = vld [vmem:[%s386 + $0xf8] sm:$0xff]
          %v2801 = vld [vmem:[%s386 + $0x100] sm:$0xff]
          %v2802 = vld [vmem:[%s386 + $0x108] sm:$0xff]
          %v2803 = vld [vmem:[%s386 + $0x110] sm:$0xff]
          %v2804 = vld [vmem:[%s386 + $0x118] sm:$0xff]
          %v2805 = vld [vmem:[%s386 + $0x120] sm:$0xff]
          %v2806 = vld [vmem:[%s386 + $0x128] sm:$0xff]
          %v2807 = vld [vmem:[%s386 + $0x130] sm:$0xff]
          %v2808 = vld [vmem:[%s386 + $0x138] sm:$0xff]
          %v2809 = vld [vmem:[%s386 + $0x140] sm:$0xff]
          %v2810 = vld [vmem:[%s386 + $0x148] sm:$0xff]
          %v2811 = vld [vmem:[%s386 + $0x150] sm:$0xff]
          %v2812 = vld [vmem:[%s386 + $0x158] sm:$0xff]
          %v2813 = vld [vmem:[%s386 + $0x160] sm:$0xff]
          %v2814 = vld [vmem:[%s386 + $0x168] sm:$0xff]
          %v2815 = vld [vmem:[%s386 + $0x170] sm:$0xff]
          %v2816 = vld [vmem:[%s386 + $0x178] sm:$0xff]
          %v2817 = vld [vmem:[%s386 + $0x180] sm:$0xff]
          %v2818 = vld [vmem:[%s386 + $0x188] sm:$0xff]
          %v2819 = vld [vmem:[%s386 + $0x190] sm:$0xff]
          %v2820 = vld [vmem:[%s386 + $0x198] sm:$0xff]
          %v2821 = vld [vmem:[%s386 + $0x1a0] sm:$0xff]
          %v2822 = vld [vmem:[%s386 + $0x1a8] sm:$0xff]
          %v2823 = vld [vmem:[%s386 + $0x1b0] sm:$0xff]
          %v2824 = vld [vmem:[%s386 + $0x1b8] sm:$0xff]
          %v2825 = vld [vmem:[%s386 + $0x1c0] sm:$0xff]
          %v2826 = vld [vmem:[%s386 + $0x1c8] sm:$0xff]
          %v2827 = vld [vmem:[%s386 + $0x1d0] sm:$0xff]
          %v2828 = vld [vmem:[%s386 + $0x1d8] sm:$0xff]
          %v2829 = vld [vmem:[%s386 + $0x1e0] sm:$0xff]
          %v2830 = vld [vmem:[%s386 + $0x1e8] sm:$0xff]
          %v2831 = vld [vmem:[%s386 + $0x1f0] sm:$0xff]
          %v2832 = vld [vmem:[%s386 + $0x1f8] sm:$0xff]
          %v2833 = vpack.c.bf16 %v2674, %v2673
          %v2834 = vpack.c.bf16 %v2676, %v2675
          %v2835 = vpack.c.bf16 %v2678, %v2677
          %v2836 = vpack.c.bf16 %v2680, %v2679
          %v2837 = vpack.c.bf16 %v2682, %v2681
          %v2838 = vpack.c.bf16 %v2684, %v2683
          %v2839 = vpack.c.bf16 %v2686, %v2685
          %v2840 = vpack.c.bf16 %v2688, %v2687
          %v2841 = vpack.c.bf16 %v2690, %v2689
          %v2842 = vpack.c.bf16 %v2692, %v2691
          %v2843 = vpack.c.bf16 %v2694, %v2693
          %v2844 = vpack.c.bf16 %v2696, %v2695
          %v2845 = vpack.c.bf16 %v2698, %v2697
          %v2846 = vpack.c.bf16 %v2700, %v2699
          %v2847 = vpack.c.bf16 %v2702, %v2701
          %v2848 = vpack.c.bf16 %v2704, %v2703
          %v2913 = vunpack.c.l.b16 %v2769
          %v2914 = vunpack.c.h.b16 %v2769
          %v2915 = vunpack.c.l.b16 %v2770
          %v2916 = vunpack.c.h.b16 %v2770
          %v2917 = vunpack.c.l.b16 %v2771
          %v2918 = vunpack.c.h.b16 %v2771
          %v2919 = vunpack.c.l.b16 %v2772
          %v2920 = vunpack.c.h.b16 %v2772
          %v2921 = vunpack.c.l.b16 %v2773
          %v2922 = vunpack.c.h.b16 %v2773
          %v2923 = vunpack.c.l.b16 %v2774
          %v2924 = vunpack.c.h.b16 %v2774
          %v2925 = vunpack.c.l.b16 %v2775
          %v2926 = vunpack.c.h.b16 %v2775
          %v2927 = vunpack.c.l.b16 %v2776
          %v2928 = vunpack.c.h.b16 %v2776
          %v2929 = vunpack.c.l.b16 %v2777
          %v2930 = vunpack.c.h.b16 %v2777
          %v2931 = vunpack.c.l.b16 %v2778
          %v2932 = vunpack.c.h.b16 %v2778
          %v2933 = vunpack.c.l.b16 %v2779
          %v2934 = vunpack.c.h.b16 %v2779
          %v2935 = vunpack.c.l.b16 %v2780
          %v2936 = vunpack.c.h.b16 %v2780
          %v2937 = vunpack.c.l.b16 %v2781
          %v2938 = vunpack.c.h.b16 %v2781
          %v2939 = vunpack.c.l.b16 %v2782
          %v2940 = vunpack.c.h.b16 %v2782
          %v2941 = vunpack.c.l.b16 %v2783
          %v2942 = vunpack.c.h.b16 %v2783
          %v2943 = vunpack.c.l.b16 %v2784
          %v2944 = vunpack.c.h.b16 %v2784
          %v2945 = vunpack.c.l.b16 %v2785
          %v2946 = vunpack.c.h.b16 %v2785
          %v2947 = vunpack.c.l.b16 %v2786
          %v2948 = vunpack.c.h.b16 %v2786
          %v2949 = vunpack.c.l.b16 %v2787
          %v2950 = vunpack.c.h.b16 %v2787
          %v2951 = vunpack.c.l.b16 %v2788
          %v2952 = vunpack.c.h.b16 %v2788
          %v2953 = vunpack.c.l.b16 %v2789
          %v2954 = vunpack.c.h.b16 %v2789
          %v2955 = vunpack.c.l.b16 %v2790
          %v2956 = vunpack.c.h.b16 %v2790
          %v2957 = vunpack.c.l.b16 %v2791
          %v2958 = vunpack.c.h.b16 %v2791
          %v2959 = vunpack.c.l.b16 %v2792
          %v2960 = vunpack.c.h.b16 %v2792
          %v2961 = vunpack.c.l.b16 %v2793
          %v2962 = vunpack.c.h.b16 %v2793
          %v2963 = vunpack.c.l.b16 %v2794
          %v2964 = vunpack.c.h.b16 %v2794
          %v2965 = vunpack.c.l.b16 %v2795
          %v2966 = vunpack.c.h.b16 %v2795
          %v2967 = vunpack.c.l.b16 %v2796
          %v2968 = vunpack.c.h.b16 %v2796
          %v2969 = vunpack.c.l.b16 %v2797
          %v2970 = vunpack.c.h.b16 %v2797
          %v2971 = vunpack.c.l.b16 %v2798
          %v2972 = vunpack.c.h.b16 %v2798
          %v2973 = vunpack.c.l.b16 %v2799
          %v2974 = vunpack.c.h.b16 %v2799
          %v2975 = vunpack.c.l.b16 %v2800
          %v2976 = vunpack.c.h.b16 %v2800
          %v2977 = vunpack.c.l.b16 %v2801
          %v2978 = vunpack.c.h.b16 %v2801
          %v2979 = vunpack.c.l.b16 %v2802
          %v2980 = vunpack.c.h.b16 %v2802
          %v2981 = vunpack.c.l.b16 %v2803
          %v2982 = vunpack.c.h.b16 %v2803
          %v2983 = vunpack.c.l.b16 %v2804
          %v2984 = vunpack.c.h.b16 %v2804
          %v2985 = vunpack.c.l.b16 %v2805
          %v2986 = vunpack.c.h.b16 %v2805
          %v2987 = vunpack.c.l.b16 %v2806
          %v2988 = vunpack.c.h.b16 %v2806
          %v2989 = vunpack.c.l.b16 %v2807
          %v2990 = vunpack.c.h.b16 %v2807
          %v2991 = vunpack.c.l.b16 %v2808
          %v2992 = vunpack.c.h.b16 %v2808
          %v2993 = vunpack.c.l.b16 %v2809
          %v2994 = vunpack.c.h.b16 %v2809
          %v2995 = vunpack.c.l.b16 %v2810
          %v2996 = vunpack.c.h.b16 %v2810
          %v2997 = vunpack.c.l.b16 %v2811
          %v2998 = vunpack.c.h.b16 %v2811
          %v2999 = vunpack.c.l.b16 %v2812
          %v3000 = vunpack.c.h.b16 %v2812
          %v3001 = vunpack.c.l.b16 %v2813
          %v3002 = vunpack.c.h.b16 %v2813
          %v3003 = vunpack.c.l.b16 %v2814
          %v3004 = vunpack.c.h.b16 %v2814
          %v3005 = vunpack.c.l.b16 %v2815
          %v3006 = vunpack.c.h.b16 %v2815
          %v3007 = vunpack.c.l.b16 %v2816
          %v3008 = vunpack.c.h.b16 %v2816
          %v3009 = vunpack.c.l.b16 %v2817
          %v3010 = vunpack.c.h.b16 %v2817
          %v3011 = vunpack.c.l.b16 %v2818
          %v3012 = vunpack.c.h.b16 %v2818
          %v3013 = vunpack.c.l.b16 %v2819
          %v3014 = vunpack.c.h.b16 %v2819
          %v3015 = vunpack.c.l.b16 %v2820
          %v3016 = vunpack.c.h.b16 %v2820
          %v3017 = vunpack.c.l.b16 %v2821
          %v3018 = vunpack.c.h.b16 %v2821
          %v3019 = vunpack.c.l.b16 %v2822
          %v3020 = vunpack.c.h.b16 %v2822
          %v3021 = vunpack.c.l.b16 %v2823
          %v3022 = vunpack.c.h.b16 %v2823
          %v3023 = vunpack.c.l.b16 %v2824
          %v3024 = vunpack.c.h.b16 %v2824
          %v3025 = vunpack.c.l.b16 %v2825
          %v3026 = vunpack.c.h.b16 %v2825
          %v3027 = vunpack.c.l.b16 %v2826
          %v3028 = vunpack.c.h.b16 %v2826
          %v3029 = vunpack.c.l.b16 %v2827
          %v3030 = vunpack.c.h.b16 %v2827
          %v3031 = vunpack.c.l.b16 %v2828
          %v3032 = vunpack.c.h.b16 %v2828
          %v3033 = vunpack.c.l.b16 %v2829
          %v3034 = vunpack.c.h.b16 %v2829
          %v3035 = vunpack.c.l.b16 %v2830
          %v3036 = vunpack.c.h.b16 %v2830
          %v3037 = vunpack.c.l.b16 %v2831
          %v3038 = vunpack.c.h.b16 %v2831
          %v3039 = vunpack.c.l.b16 %v2832
          %v3040 = vunpack.c.h.b16 %v2832
          %v3041 = vpack.c.b16 %v2915, %v2913
          %v3042 = vpack.c.b16 %v2916, %v2914
          %v3043 = vpack.c.b16 %v2919, %v2917
          %v3044 = vpack.c.b16 %v2920, %v2918
          %v3045 = vpack.c.b16 %v2923, %v2921
          %v3046 = vpack.c.b16 %v2924, %v2922
          %v3047 = vpack.c.b16 %v2927, %v2925
          %v3048 = vpack.c.b16 %v2928, %v2926
          %v3049 = vpack.c.b16 %v2931, %v2929
          %v3050 = vpack.c.b16 %v2932, %v2930
          %v3051 = vpack.c.b16 %v2935, %v2933
          %v3052 = vpack.c.b16 %v2936, %v2934
          %v3053 = vpack.c.b16 %v2939, %v2937
          %v3054 = vpack.c.b16 %v2940, %v2938
          %v3055 = vpack.c.b16 %v2943, %v2941
          %v3056 = vpack.c.b16 %v2944, %v2942
          %v3057 = vpack.c.b16 %v2947, %v2945
          %v3058 = vpack.c.b16 %v2948, %v2946
          %v3059 = vpack.c.b16 %v2951, %v2949
          %v3060 = vpack.c.b16 %v2952, %v2950
          %v3061 = vpack.c.b16 %v2955, %v2953
          %v3062 = vpack.c.b16 %v2956, %v2954
          %v3063 = vpack.c.b16 %v2959, %v2957
          %v3064 = vpack.c.b16 %v2960, %v2958
          %v3065 = vpack.c.b16 %v2963, %v2961
          %v3066 = vpack.c.b16 %v2964, %v2962
          %v3067 = vpack.c.b16 %v2967, %v2965
          %v3068 = vpack.c.b16 %v2968, %v2966
          %v3069 = vpack.c.b16 %v2971, %v2969
          %v3070 = vpack.c.b16 %v2972, %v2970
          %v3071 = vpack.c.b16 %v2975, %v2973
          %v3072 = vpack.c.b16 %v2976, %v2974
          %v3073 = vpack.c.b16 %v2979, %v2977
          %v3074 = vpack.c.b16 %v2980, %v2978
          %v3075 = vpack.c.b16 %v2983, %v2981
          %v3076 = vpack.c.b16 %v2984, %v2982
          %v3077 = vpack.c.b16 %v2987, %v2985
          %v3078 = vpack.c.b16 %v2988, %v2986
          %v3079 = vpack.c.b16 %v2991, %v2989
          %v3080 = vpack.c.b16 %v2992, %v2990
          %v3081 = vpack.c.b16 %v2995, %v2993
          %v3082 = vpack.c.b16 %v2996, %v2994
          %v3083 = vpack.c.b16 %v2999, %v2997
          %v3084 = vpack.c.b16 %v3000, %v2998
          %v3085 = vpack.c.b16 %v3003, %v3001
          %v3086 = vpack.c.b16 %v3004, %v3002
          %v3087 = vpack.c.b16 %v3007, %v3005
          %v3088 = vpack.c.b16 %v3008, %v3006
          %v3089 = vpack.c.b16 %v3011, %v3009
          %v3090 = vpack.c.b16 %v3012, %v3010
          %v3091 = vpack.c.b16 %v3015, %v3013
          %v3092 = vpack.c.b16 %v3016, %v3014
          %v3093 = vpack.c.b16 %v3019, %v3017
          %v3094 = vpack.c.b16 %v3020, %v3018
          %v3095 = vpack.c.b16 %v3023, %v3021
          %v3096 = vpack.c.b16 %v3024, %v3022
          %v3097 = vpack.c.b16 %v3027, %v3025
          %v3098 = vpack.c.b16 %v3028, %v3026
          %v3099 = vpack.c.b16 %v3031, %v3029
          %v3100 = vpack.c.b16 %v3032, %v3030
          %v3101 = vpack.c.b16 %v3035, %v3033
          %v3102 = vpack.c.b16 %v3036, %v3034
          %v3103 = vpack.c.b16 %v3039, %v3037
          %v3104 = vpack.c.b16 %v3040, %v3038
          %3169 = vmatprep.subr.bf16.mxu0 0
          %3170 = vmatpush1.bf16.msra.mxu0 %v2833
          %3171 = vmatprep.subr.bf16.mxu0 0
          %3172 = vmatpush1.bf16.msra.mxu0 %v2834
          %3173 = vmatprep.subr.bf16.mxu0 0
          %3174 = vmatpush1.bf16.msra.mxu0 %v2835
          %3175 = vmatprep.subr.bf16.mxu0 0
          %3176 = vmatpush1.bf16.msra.mxu0 %v2836
          %3177 = vmatprep.subr.bf16.mxu0 0
          %3178 = vmatpush1.bf16.msra.mxu0 %v2837
          %3179 = vmatprep.subr.bf16.mxu0 0
          %3180 = vmatpush1.bf16.msra.mxu0 %v2838
          %3181 = vmatprep.subr.bf16.mxu0 0
          %3182 = vmatpush1.bf16.msra.mxu0 %v2839
          %3183 = vmatprep.subr.bf16.mxu0 0
          %3184 = vmatpush1.bf16.msra.mxu0 %v2840
          %3185 = vmatprep.subr.bf16.mxu0 0
          %3186 = vmatpush1.bf16.msra.mxu0 %v2841
          %3187 = vmatprep.subr.bf16.mxu0 0
          %3188 = vmatpush1.bf16.msra.mxu0 %v2842
          %3189 = vmatprep.subr.bf16.mxu0 0
          %3190 = vmatpush1.bf16.msra.mxu0 %v2843
          %3191 = vmatprep.subr.bf16.mxu0 0
          %3192 = vmatpush1.bf16.msra.mxu0 %v2844
          %3193 = vmatprep.subr.bf16.mxu0 0
          %3194 = vmatpush1.bf16.msra.mxu0 %v2845
          %3195 = vmatprep.subr.bf16.mxu0 0
          %3196 = vmatpush1.bf16.msra.mxu0 %v2846
          %3197 = vmatprep.subr.bf16.mxu0 0
          %3198 = vmatpush1.bf16.msra.mxu0 %v2847
          %3199 = vmatprep.subr.bf16.mxu0 0
          %3200 = vmatpush1.bf16.msra.mxu0 %v2848
          %3201 = vmatprep.mubr.bf16.mxu0 %v3042
          %3202 = vmatmul.mubr.bf16.gmra.mrb[0].mxu0 %v3041
          %v3203 = vpop.f32.mrb[0].mxu0
          %v3204 = vadd.f32 0.0, %v3203
          %v3205 = vpop.f32.mrb[0].mxu0
          %v3206 = vpop.f32.mrb[0].mxu0
          %v3207 = vadd.f32 0.0, %v3206
          %v3208 = vpop.f32.mrb[0].mxu0
          %3209 = vmatprep.mubr.bf16.mxu0 %v3044
          %3210 = vmatmul.mubr.bf16.gmra.mrb[0].mxu0 %v3043
          %v3211 = vpop.f32.mrb[0].mxu0
          %v3212 = vadd.f32 0.0, %v3211
          %v3213 = vpop.f32.mrb[0].mxu0
          %v3214 = vpop.f32.mrb[0].mxu0
          %v3215 = vadd.f32 0.0, %v3214
          %v3216 = vpop.f32.mrb[0].mxu0
          %3217 = vmatprep.mubr.bf16.mxu0 %v3046
          %3218 = vmatmul.mubr.bf16.gmra.mrb[0].mxu0 %v3045
          %v3219 = vpop.f32.mrb[0].mxu0
          %v3220 = vadd.f32 0.0, %v3219
          %v3221 = vpop.f32.mrb[0].mxu0
          %v3222 = vpop.f32.mrb[0].mxu0
          %v3223 = vadd.f32 0.0, %v3222
          %v3224 = vpop.f32.mrb[0].mxu0
          %3225 = vmatprep.mubr.bf16.mxu0 %v3048
          %3226 = vmatmul.mubr.bf16.gmra.mrb[0].mxu0 %v3047
          %v3227 = vpop.f32.mrb[0].mxu0
          %v3228 = vadd.f32 0.0, %v3227
          %v3229 = vpop.f32.mrb[0].mxu0
          %v3230 = vpop.f32.mrb[0].mxu0
          %v3231 = vadd.f32 0.0, %v3230
          %v3232 = vpop.f32.mrb[0].mxu0
          %3233 = vmatprep.mubr.bf16.mxu0 %v3050
          %3234 = vmatmul.mubr.bf16.gmra.mrb[0].mxu0 %v3049
          %v3235 = vpop.f32.mrb[0].mxu0
          %v3236 = vadd.f32 0.0, %v3235
          %v3237 = vpop.f32.mrb[0].mxu0
          %v3238 = vpop.f32.mrb[0].mxu0
          %v3239 = vadd.f32 0.0, %v3238
          %v3240 = vpop.f32.mrb[0].mxu0
          %3241 = vmatprep.mubr.bf16.mxu0 %v3052
          %3242 = vmatmul.mubr.bf16.gmra.mrb[0].mxu0 %v3051
          %v3243 = vpop.f32.mrb[0].mxu0
          %v3244 = vadd.f32 0.0, %v3243
          %v3245 = vpop.f32.mrb[0].mxu0
          %v3246 = vpop.f32.mrb[0].mxu0
          %v3247 = vadd.f32 0.0, %v3246
          %v3248 = vpop.f32.mrb[0].mxu0
          %3249 = vmatprep.mubr.bf16.mxu0 %v3054
          %3250 = vmatmul.mubr.bf16.gmra.mrb[0].mxu0 %v3053
          %v3251 = vpop.f32.mrb[0].mxu0
          %v3252 = vadd.f32 0.0, %v3251
          %v3253 = vpop.f32.mrb[0].mxu0
          %v3254 = vpop.f32.mrb[0].mxu0
          %v3255 = vadd.f32 0.0, %v3254
          %v3256 = vpop.f32.mrb[0].mxu0
          %3257 = vmatprep.mubr.bf16.mxu0 %v3056
          %3258 = vmatmul.mubr.bf16.gmra.mrb[0].mxu0 %v3055
          %v3259 = vpop.f32.mrb[0].mxu0
          %v3260 = vadd.f32 0.0, %v3259
          %v3261 = vpop.f32.mrb[0].mxu0
          %v3262 = vpop.f32.mrb[0].mxu0
          %v3263 = vadd.f32 0.0, %v3262
          %v3264 = vpop.f32.mrb[0].mxu0
          %3265 = vmatprep.mubr.bf16.mxu0 %v3058
          %3266 = vmatmul.mubr.bf16.gmra.mrb[0].mxu0 %v3057
          %v3267 = vpop.f32.mrb[0].mxu0
          %v3268 = vadd.f32 0.0, %v3267
          %v3269 = vpop.f32.mrb[0].mxu0
          %v3270 = vpop.f32.mrb[0].mxu0
          %v3271 = vadd.f32 0.0, %v3270
          %v3272 = vpop.f32.mrb[0].mxu0
          %3273 = vmatprep.mubr.bf16.mxu0 %v3060
          %3274 = vmatmul.mubr.bf16.gmra.mrb[0].mxu0 %v3059
          %v3275 = vpop.f32.mrb[0].mxu0
          %v3276 = vadd.f32 0.0, %v3275
          %v3277 = vpop.f32.mrb[0].mxu0
          %v3278 = vpop.f32.mrb[0].mxu0
          %v3279 = vadd.f32 0.0, %v3278
          %v3280 = vpop.f32.mrb[0].mxu0
          %3281 = vmatprep.mubr.bf16.mxu0 %v3062
          %3282 = vmatmul.mubr.bf16.gmra.mrb[0].mxu0 %v3061
          %v3283 = vpop.f32.mrb[0].mxu0
          %v3284 = vadd.f32 0.0, %v3283
          %v3285 = vpop.f32.mrb[0].mxu0
          %v3286 = vpop.f32.mrb[0].mxu0
          %v3287 = vadd.f32 0.0, %v3286
          %v3288 = vpop.f32.mrb[0].mxu0
          %3289 = vmatprep.mubr.bf16.mxu0 %v3064
          %3290 = vmatmul.mubr.bf16.gmra.mrb[0].mxu0 %v3063
          %v3291 = vpop.f32.mrb[0].mxu0
          %v3292 = vadd.f32 0.0, %v3291
          %v3293 = vpop.f32.mrb[0].mxu0
          %v3294 = vpop.f32.mrb[0].mxu0
          %v3295 = vadd.f32 0.0, %v3294
          %v3296 = vpop.f32.mrb[0].mxu0
          %3297 = vmatprep.mubr.bf16.mxu0 %v3066
          %3298 = vmatmul.mubr.bf16.gmra.mrb[0].mxu0 %v3065
          %v3299 = vpop.f32.mrb[0].mxu0
          %v3300 = vadd.f32 0.0, %v3299
          %v3301 = vpop.f32.mrb[0].mxu0
          %v3302 = vpop.f32.mrb[0].mxu0
          %v3303 = vadd.f32 0.0, %v3302
          %v3304 = vpop.f32.mrb[0].mxu0
          %3305 = vmatprep.mubr.bf16.mxu0 %v3068
          %3306 = vmatmul.mubr.bf16.gmra.mrb[0].mxu0 %v3067
          %v3307 = vpop.f32.mrb[0].mxu0
          %v3308 = vadd.f32 0.0, %v3307
          %v3309 = vpop.f32.mrb[0].mxu0
          %v3310 = vpop.f32.mrb[0].mxu0
          %v3311 = vadd.f32 0.0, %v3310
          %v3312 = vpop.f32.mrb[0].mxu0
          %3313 = vmatprep.mubr.bf16.mxu0 %v3070
          %3314 = vmatmul.mubr.bf16.gmra.mrb[0].mxu0 %v3069
          %v3315 = vpop.f32.mrb[0].mxu0
          %v3316 = vadd.f32 0.0, %v3315
          %v3317 = vpop.f32.mrb[0].mxu0
          %v3318 = vpop.f32.mrb[0].mxu0
          %v3319 = vadd.f32 0.0, %v3318
          %v3320 = vpop.f32.mrb[0].mxu0
          %3321 = vmatprep.mubr.bf16.mxu0 %v3072
          %3322 = vmatmul.mubr.bf16.gmra.mrb[0].mxu0 %v3071
          %v3323 = vpop.f32.mrb[0].mxu0
          %v3324 = vadd.f32 0.0, %v3323
          %v3325 = vpop.f32.mrb[0].mxu0
          %v3326 = vpop.f32.mrb[0].mxu0
          %v3327 = vadd.f32 0.0, %v3326
          %v3328 = vpop.f32.mrb[0].mxu0
          %3329 = vmatprep.mubr.bf16.mxu0 %v3074
          %3330 = vmatmul.mubr.bf16.gmra.mrb[0].mxu0 %v3073
          %v3331 = vpop.f32.mrb[0].mxu0
          %v3332 = vadd.f32 0.0, %v3331
          %v3333 = vpop.f32.mrb[0].mxu0
          %v3334 = vpop.f32.mrb[0].mxu0
          %v3335 = vadd.f32 0.0, %v3334
          %v3336 = vpop.f32.mrb[0].mxu0
          %3337 = vmatprep.mubr.bf16.mxu0 %v3076
          %3338 = vmatmul.mubr.bf16.gmra.mrb[0].mxu0 %v3075
          %v3339 = vpop.f32.mrb[0].mxu0
          %v3340 = vadd.f32 0.0, %v3339
          %v3341 = vpop.f32.mrb[0].mxu0
          %v3342 = vpop.f32.mrb[0].mxu0
          %v3343 = vadd.f32 0.0, %v3342
          %v3344 = vpop.f32.mrb[0].mxu0
          %3345 = vmatprep.mubr.bf16.mxu0 %v3078
          %3346 = vmatmul.mubr.bf16.gmra.mrb[0].mxu0 %v3077
          %v3347 = vpop.f32.mrb[0].mxu0
          %v3348 = vadd.f32 0.0, %v3347
          %v3349 = vpop.f32.mrb[0].mxu0
          %v3350 = vpop.f32.mrb[0].mxu0
          %v3351 = vadd.f32 0.0, %v3350
          %v3352 = vpop.f32.mrb[0].mxu0
          %3353 = vmatprep.mubr.bf16.mxu0 %v3080
          %3354 = vmatmul.mubr.bf16.gmra.mrb[0].mxu0 %v3079
          %v3355 = vpop.f32.mrb[0].mxu0
          %v3356 = vadd.f32 0.0, %v3355
          %v3357 = vpop.f32.mrb[0].mxu0
          %v3358 = vpop.f32.mrb[0].mxu0
          %v3359 = vadd.f32 0.0, %v3358
          %v3360 = vpop.f32.mrb[0].mxu0
          %3361 = vmatprep.mubr.bf16.mxu0 %v3082
          %3362 = vmatmul.mubr.bf16.gmra.mrb[0].mxu0 %v3081
          %v3363 = vpop.f32.mrb[0].mxu0
          %v3364 = vadd.f32 0.0, %v3363
          %v3365 = vpop.f32.mrb[0].mxu0
          %v3366 = vpop.f32.mrb[0].mxu0
          %v3367 = vadd.f32 0.0, %v3366
          %v3368 = vpop.f32.mrb[0].mxu0
          %3369 = vmatprep.mubr.bf16.mxu0 %v3084
          %3370 = vmatmul.mubr.bf16.gmra.mrb[0].mxu0 %v3083
          %v3371 = vpop.f32.mrb[0].mxu0
          %v3372 = vadd.f32 0.0, %v3371
          %v3373 = vpop.f32.mrb[0].mxu0
          %v3374 = vpop.f32.mrb[0].mxu0
          %v3375 = vadd.f32 0.0, %v3374
          %v3376 = vpop.f32.mrb[0].mxu0
          %3377 = vmatprep.mubr.bf16.mxu0 %v3086
          %3378 = vmatmul.mubr.bf16.gmra.mrb[0].mxu0 %v3085
          %v3379 = vpop.f32.mrb[0].mxu0
          %v3380 = vadd.f32 0.0, %v3379
          %v3381 = vpop.f32.mrb[0].mxu0
          %v3382 = vpop.f32.mrb[0].mxu0
          %v3383 = vadd.f32 0.0, %v3382
          %v3384 = vpop.f32.mrb[0].mxu0
          %3385 = vmatprep.mubr.bf16.mxu0 %v3088
          %3386 = vmatmul.mubr.bf16.gmra.mrb[0].mxu0 %v3087
          %v3387 = vpop.f32.mrb[0].mxu0
          %v3388 = vadd.f32 0.0, %v3387
          %v3389 = vpop.f32.mrb[0].mxu0
          %v3390 = vpop.f32.mrb[0].mxu0
          %v3391 = vadd.f32 0.0, %v3390
          %v3392 = vpop.f32.mrb[0].mxu0
          %3393 = vmatprep.mubr.bf16.mxu0 %v3090
          %3394 = vmatmul.mubr.bf16.gmra.mrb[0].mxu0 %v3089
          %v3395 = vpop.f32.mrb[0].mxu0
          %v3396 = vadd.f32 0.0, %v3395
          %v3397 = vpop.f32.mrb[0].mxu0
          %v3398 = vpop.f32.mrb[0].mxu0
          %v3399 = vadd.f32 0.0, %v3398
          %v3400 = vpop.f32.mrb[0].mxu0
          %3401 = vmatprep.mubr.bf16.mxu0 %v3092
          %3402 = vmatmul.mubr.bf16.gmra.mrb[0].mxu0 %v3091
          %v3403 = vpop.f32.mrb[0].mxu0
          %v3404 = vadd.f32 0.0, %v3403
          %v3405 = vpop.f32.mrb[0].mxu0
          %v3406 = vpop.f32.mrb[0].mxu0
          %v3407 = vadd.f32 0.0, %v3406
          %v3408 = vpop.f32.mrb[0].mxu0
          %3409 = vmatprep.mubr.bf16.mxu0 %v3094
          %3410 = vmatmul.mubr.bf16.gmra.mrb[0].mxu0 %v3093
          %v3411 = vpop.f32.mrb[0].mxu0
          %v3412 = vadd.f32 0.0, %v3411
          %v3413 = vpop.f32.mrb[0].mxu0
          %v3414 = vpop.f32.mrb[0].mxu0
          %v3415 = vadd.f32 0.0, %v3414
          %v3416 = vpop.f32.mrb[0].mxu0
          %3417 = vmatprep.mubr.bf16.mxu0 %v3096
          %3418 = vmatmul.mubr.bf16.gmra.mrb[0].mxu0 %v3095
          %v3419 = vpop.f32.mrb[0].mxu0
          %v3420 = vadd.f32 0.0, %v3419
          %v3421 = vpop.f32.mrb[0].mxu0
          %v3422 = vpop.f32.mrb[0].mxu0
          %v3423 = vadd.f32 0.0, %v3422
          %v3424 = vpop.f32.mrb[0].mxu0
          %3425 = vmatprep.mubr.bf16.mxu0 %v3098
          %3426 = vmatmul.mubr.bf16.gmra.mrb[0].mxu0 %v3097
          %v3427 = vpop.f32.mrb[0].mxu0
          %v3428 = vadd.f32 0.0, %v3427
          %v3429 = vpop.f32.mrb[0].mxu0
          %v3430 = vpop.f32.mrb[0].mxu0
          %v3431 = vadd.f32 0.0, %v3430
          %v3432 = vpop.f32.mrb[0].mxu0
          %3433 = vmatprep.mubr.bf16.mxu0 %v3100
          %3434 = vmatmul.mubr.bf16.gmra.mrb[0].mxu0 %v3099
          %v3435 = vpop.f32.mrb[0].mxu0
          %v3436 = vadd.f32 0.0, %v3435
          %v3437 = vpop.f32.mrb[0].mxu0
          %v3438 = vpop.f32.mrb[0].mxu0
          %v3439 = vadd.f32 0.0, %v3438
          %v3440 = vpop.f32.mrb[0].mxu0
          %3441 = vmatprep.mubr.bf16.mxu0 %v3102
          %3442 = vmatmul.mubr.bf16.gmra.mrb[0].mxu0 %v3101
          %v3443 = vpop.f32.mrb[0].mxu0
          %v3444 = vadd.f32 0.0, %v3443
          %v3445 = vpop.f32.mrb[0].mxu0
          %v3446 = vpop.f32.mrb[0].mxu0
          %v3447 = vadd.f32 0.0, %v3446
          %v3448 = vpop.f32.mrb[0].mxu0
          %3449 = vmatprep.mubr.bf16.mxu0 %v3104
          %3450 = vmatmul.mubr.bf16.gmra.mrb[0].mxu0 %v3103
          %v3451 = vpop.f32.mrb[0].mxu0
          %v3452 = vadd.f32 0.0, %v3451
          %v3453 = vpop.f32.mrb[0].mxu0
          %v3454 = vpop.f32.mrb[0].mxu0
          %v3455 = vadd.f32 0.0, %v3454
          %v3456 = vpop.f32.mrb[0].mxu0
          %3457 = vdwg.mxu0
          %v3458 = vadd.f32 %v2705, %v3204
          %v3459 = vadd.f32 %v2706, %v3207
          %v3460 = vadd.f32 %v2707, %v3212
          %v3461 = vadd.f32 %v2708, %v3215
          %v3462 = vadd.f32 %v2709, %v3220
          %v3463 = vadd.f32 %v2710, %v3223
          %v3464 = vadd.f32 %v2711, %v3228
          %v3465 = vadd.f32 %v2712, %v3231
          %v3466 = vadd.f32 %v2713, %v3236
          %v3467 = vadd.f32 %v2714, %v3239
          %v3468 = vadd.f32 %v2715, %v3244
          %v3469 = vadd.f32 %v2716, %v3247
          %v3470 = vadd.f32 %v2717, %v3252
          %v3471 = vadd.f32 %v2718, %v3255
          %v3472 = vadd.f32 %v2719, %v3260
          %v3473 = vadd.f32 %v2720, %v3263
          %v3474 = vadd.f32 %v2721, %v3268
          %v3475 = vadd.f32 %v2722, %v3271
          %v3476 = vadd.f32 %v2723, %v3276
          %v3477 = vadd.f32 %v2724, %v3279
          %v3478 = vadd.f32 %v2725, %v3284
          %v3479 = vadd.f32 %v2726, %v3287
          %v3480 = vadd.f32 %v2727, %v3292
          %v3481 = vadd.f32 %v2728, %v3295
          %v3482 = vadd.f32 %v2729, %v3300
          %v3483 = vadd.f32 %v2730, %v3303
          %v3484 = vadd.f32 %v2731, %v3308
          %v3485 = vadd.f32 %v2732, %v3311
          %v3486 = vadd.f32 %v2733, %v3316
          %v3487 = vadd.f32 %v2734, %v3319
          %v3488 = vadd.f32 %v2735, %v3324
          %v3489 = vadd.f32 %v2736, %v3327
          %v3490 = vadd.f32 %v2737, %v3332
          %v3491 = vadd.f32 %v2738, %v3335
          %v3492 = vadd.f32 %v2739, %v3340
          %v3493 = vadd.f32 %v2740, %v3343
          %v3494 = vadd.f32 %v2741, %v3348
          %v3495 = vadd.f32 %v2742, %v3351
          %v3496 = vadd.f32 %v2743, %v3356
          %v3497 = vadd.f32 %v2744, %v3359
          %v3498 = vadd.f32 %v2745, %v3364
          %v3499 = vadd.f32 %v2746, %v3367
          %v3500 = vadd.f32 %v2747, %v3372
          %v3501 = vadd.f32 %v2748, %v3375
          %v3502 = vadd.f32 %v2749, %v3380
          %v3503 = vadd.f32 %v2750, %v3383
          %v3504 = vadd.f32 %v2751, %v3388
          %v3505 = vadd.f32 %v2752, %v3391
          %v3506 = vadd.f32 %v2753, %v3396
          %v3507 = vadd.f32 %v2754, %v3399
          %v3508 = vadd.f32 %v2755, %v3404
          %v3509 = vadd.f32 %v2756, %v3407
          %v3510 = vadd.f32 %v2757, %v3412
          %v3511 = vadd.f32 %v2758, %v3415
          %v3512 = vadd.f32 %v2759, %v3420
          %v3513 = vadd.f32 %v2760, %v3423
          %v3514 = vadd.f32 %v2761, %v3428
          %v3515 = vadd.f32 %v2762, %v3431
          %v3516 = vadd.f32 %v2763, %v3436
          %v3517 = vadd.f32 %v2764, %v3439
          %v3518 = vadd.f32 %v2765, %v3444
          %v3519 = vadd.f32 %v2766, %v3447
          %v3520 = vadd.f32 %v2767, %v3452
          %v3521 = vadd.f32 %v2768, %v3455
          %3522 = vst [vmem:[#allocation8] sm:$0xff] %v3458
          %3523 = vst [vmem:[#allocation8 + $0x8] sm:$0xff] %v3459
          %3524 = vst [vmem:[#allocation8 + $0x10] sm:$0xff] %v3460
          %3525 = vst [vmem:[#allocation8 + $0x18] sm:$0xff] %v3461
          %3526 = vst [vmem:[#allocation8 + $0x20] sm:$0xff] %v3462
          %3527 = vst [vmem:[#allocation8 + $0x28] sm:$0xff] %v3463
          %3528 = vst [vmem:[#allocation8 + $0x30] sm:$0xff] %v3464
          %3529 = vst [vmem:[#allocation8 + $0x38] sm:$0xff] %v3465
          %3530 = vst [vmem:[#allocation8 + $0x40] sm:$0xff] %v3466
          %3531 = vst [vmem:[#allocation8 + $0x48] sm:$0xff] %v3467
          %3532 = vst [vmem:[#allocation8 + $0x50] sm:$0xff] %v3468
          %3533 = vst [vmem:[#allocation8 + $0x58] sm:$0xff] %v3469
          %3534 = vst [vmem:[#allocation8 + $0x60] sm:$0xff] %v3470
          %3535 = vst [vmem:[#allocation8 + $0x68] sm:$0xff] %v3471
          %3536 = vst [vmem:[#allocation8 + $0x70] sm:$0xff] %v3472
          %3537 = vst [vmem:[#allocation8 + $0x78] sm:$0xff] %v3473
          %3538 = vst [vmem:[#allocation8 + $0x80] sm:$0xff] %v3474
          %3539 = vst [vmem:[#allocation8 + $0x88] sm:$0xff] %v3475
          %3540 = vst [vmem:[#allocation8 + $0x90] sm:$0xff] %v3476
          %3541 = vst [vmem:[#allocation8 + $0x98] sm:$0xff] %v3477
          %3542 = vst [vmem:[#allocation8 + $0xa0] sm:$0xff] %v3478
          %3543 = vst [vmem:[#allocation8 + $0xa8] sm:$0xff] %v3479
          %3544 = vst [vmem:[#allocation8 + $0xb0] sm:$0xff] %v3480
          %3545 = vst [vmem:[#allocation8 + $0xb8] sm:$0xff] %v3481
          %3546 = vst [vmem:[#allocation8 + $0xc0] sm:$0xff] %v3482
          %3547 = vst [vmem:[#allocation8 + $0xc8] sm:$0xff] %v3483
          %3548 = vst [vmem:[#allocation8 + $0xd0] sm:$0xff] %v3484
          %3549 = vst [vmem:[#allocation8 + $0xd8] sm:$0xff] %v3485
          %3550 = vst [vmem:[#allocation8 + $0xe0] sm:$0xff] %v3486
          %3551 = vst [vmem:[#allocation8 + $0xe8] sm:$0xff] %v3487
          %3552 = vst [vmem:[#allocation8 + $0xf0] sm:$0xff] %v3488
          %3553 = vst [vmem:[#allocation8 + $0xf8] sm:$0xff] %v3489
          %3554 = vst [vmem:[#allocation8 + $0x100] sm:$0xff] %v3490
          %3555 = vst [vmem:[#allocation8 + $0x108] sm:$0xff] %v3491
          %3556 = vst [vmem:[#allocation8 + $0x110] sm:$0xff] %v3492
          %3557 = vst [vmem:[#allocation8 + $0x118] sm:$0xff] %v3493
          %3558 = vst [vmem:[#allocation8 + $0x120] sm:$0xff] %v3494
          %3559 = vst [vmem:[#allocation8 + $0x128] sm:$0xff] %v3495
          %3560 = vst [vmem:[#allocation8 + $0x130] sm:$0xff] %v3496
          %3561 = vst [vmem:[#allocation8 + $0x138] sm:$0xff] %v3497
          %3562 = vst [vmem:[#allocation8 + $0x140] sm:$0xff] %v3498
          %3563 = vst [vmem:[#allocation8 + $0x148] sm:$0xff] %v3499
          %3564 = vst [vmem:[#allocation8 + $0x150] sm:$0xff] %v3500
          %3565 = vst [vmem:[#allocation8 + $0x158] sm:$0xff] %v3501
          %3566 = vst [vmem:[#allocation8 + $0x160] sm:$0xff] %v3502
          %3567 = vst [vmem:[#allocation8 + $0x168] sm:$0xff] %v3503
          %3568 = vst [vmem:[#allocation8 + $0x170] sm:$0xff] %v3504
          %3569 = vst [vmem:[#allocation8 + $0x178] sm:$0xff] %v3505
          %3570 = vst [vmem:[#allocation8 + $0x180] sm:$0xff] %v3506
          %3571 = vst [vmem:[#allocation8 + $0x188] sm:$0xff] %v3507
          %3572 = vst [vmem:[#allocation8 + $0x190] sm:$0xff] %v3508
          %3573 = vst [vmem:[#allocation8 + $0x198] sm:$0xff] %v3509
          %3574 = vst [vmem:[#allocation8 + $0x1a0] sm:$0xff] %v3510
          %3575 = vst [vmem:[#allocation8 + $0x1a8] sm:$0xff] %v3511
          %3576 = vst [vmem:[#allocation8 + $0x1b0] sm:$0xff] %v3512
          %3577 = vst [vmem:[#allocation8 + $0x1b8] sm:$0xff] %v3513
          %3578 = vst [vmem:[#allocation8 + $0x1c0] sm:$0xff] %v3514
          %3579 = vst [vmem:[#allocation8 + $0x1c8] sm:$0xff] %v3515
          %3580 = vst [vmem:[#allocation8 + $0x1d0] sm:$0xff] %v3516
          %3581 = vst [vmem:[#allocation8 + $0x1d8] sm:$0xff] %v3517
          %3582 = vst [vmem:[#allocation8 + $0x1e0] sm:$0xff] %v3518
          %3583 = vst [vmem:[#allocation8 + $0x1e8] sm:$0xff] %v3519
          %3584 = vst [vmem:[#allocation8 + $0x1f0] sm:$0xff] %v3520
          %3585 = vst [vmem:[#allocation8 + $0x1f8] sm:$0xff] %v3521
          %p3586 = scmp.eq.s32.totalorder %s28, 1
          // Predicated region
          $region88: #{tpu_custom_call.1} parent=86 // pred_check
            %p3587 = pneg %p3586
          $region89: #{tpu_custom_call.1} parent=86 // pred_check_branch
            %3589 = sbr.rel (%p3587) target = $region91
          $region90: #{tpu_custom_call.1} parent=86 // pred_region
            loop: start=0, step=1, limit=4
            $region92: #{tpu_custom_call.1} parent=90 // loop_pre_header
              _
            $region93: #{tpu_custom_call.1} parent=90 // loop_header
              %s3591 = sphi 0, %s3595
              %p3592 = scmp.ge.s32.totalorder %s3591, 4
            $region94: #{tpu_custom_call.1} parent=90 // loop_header_branch
              %3594 = sbr.rel (%p3592) target = $region98
            $region95: #{tpu_custom_call.1} parent=90 // loop_body
              %s3596 = smul.u32 %s3591, 128
              %s3597 = scalar_lea.vmem [#allocation8], %s3596
              %v3598 = vld [vmem:[%s3597] sm:$0xff]
              %v3599 = vld [vmem:[%s3597 + $0x8] sm:$0xff]
              %v3600 = vld [vmem:[%s3597 + $0x10] sm:$0xff]
              %v3601 = vld [vmem:[%s3597 + $0x18] sm:$0xff]
              %v3602 = vld [vmem:[%s3597 + $0x20] sm:$0xff]
              %v3603 = vld [vmem:[%s3597 + $0x28] sm:$0xff]
              %v3604 = vld [vmem:[%s3597 + $0x30] sm:$0xff]
              %v3605 = vld [vmem:[%s3597 + $0x38] sm:$0xff]
              %v3606 = vld [vmem:[%s3597 + $0x40] sm:$0xff]
              %v3607 = vld [vmem:[%s3597 + $0x48] sm:$0xff]
              %v3608 = vld [vmem:[%s3597 + $0x50] sm:$0xff]
              %v3609 = vld [vmem:[%s3597 + $0x58] sm:$0xff]
              %v3610 = vld [vmem:[%s3597 + $0x60] sm:$0xff]
              %v3611 = vld [vmem:[%s3597 + $0x68] sm:$0xff]
              %v3612 = vld [vmem:[%s3597 + $0x70] sm:$0xff]
              %v3613 = vld [vmem:[%s3597 + $0x78] sm:$0xff]
              %s3614 = scalar_lea.vmem %s8, %s3596
              %v3615 = vld [vmem:[%s3614] sm:$0xff]
              %v3616 = vld [vmem:[%s3614 + $0x8] sm:$0xff]
              %v3617 = vld [vmem:[%s3614 + $0x10] sm:$0xff]
              %v3618 = vld [vmem:[%s3614 + $0x18] sm:$0xff]
              %v3619 = vld [vmem:[%s3614 + $0x20] sm:$0xff]
              %v3620 = vld [vmem:[%s3614 + $0x28] sm:$0xff]
              %v3621 = vld [vmem:[%s3614 + $0x30] sm:$0xff]
              %v3622 = vld [vmem:[%s3614 + $0x38] sm:$0xff]
              %v3623 = vld [vmem:[%s3614 + $0x40] sm:$0xff]
              %v3624 = vld [vmem:[%s3614 + $0x48] sm:$0xff]
              %v3625 = vld [vmem:[%s3614 + $0x50] sm:$0xff]
              %v3626 = vld [vmem:[%s3614 + $0x58] sm:$0xff]
              %v3627 = vld [vmem:[%s3614 + $0x60] sm:$0xff]
              %v3628 = vld [vmem:[%s3614 + $0x68] sm:$0xff]
              %v3629 = vld [vmem:[%s3614 + $0x70] sm:$0xff]
              %v3630 = vld [vmem:[%s3614 + $0x78] sm:$0xff]
              %v3631 = vrcp.pop %v3615
              %v3632 = vmul.f32 1.0, %v3631
              %v3633 = vrcp.pop %v3616
              %v3634 = vmul.f32 1.0, %v3633
              %v3635 = vrcp.pop %v3617
              %v3636 = vmul.f32 1.0, %v3635
              %v3637 = vrcp.pop %v3618
              %v3638 = vmul.f32 1.0, %v3637
              %v3639 = vrcp.pop %v3619
              %v3640 = vmul.f32 1.0, %v3639
              %v3641 = vrcp.pop %v3620
              %v3642 = vmul.f32 1.0, %v3641
              %v3643 = vrcp.pop %v3621
              %v3644 = vmul.f32 1.0, %v3643
              %v3645 = vrcp.pop %v3622
              %v3646 = vmul.f32 1.0, %v3645
              %v3647 = vrcp.pop %v3623
              %v3648 = vmul.f32 1.0, %v3647
              %v3649 = vrcp.pop %v3624
              %v3650 = vmul.f32 1.0, %v3649
              %v3651 = vrcp.pop %v3625
              %v3652 = vmul.f32 1.0, %v3651
              %v3653 = vrcp.pop %v3626
              %v3654 = vmul.f32 1.0, %v3653
              %v3655 = vrcp.pop %v3627
              %v3656 = vmul.f32 1.0, %v3655
              %v3657 = vrcp.pop %v3628
              %v3658 = vmul.f32 1.0, %v3657
              %v3659 = vrcp.pop %v3629
              %v3660 = vmul.f32 1.0, %v3659
              %v3661 = vrcp.pop %v3630
              %v3662 = vmul.f32 1.0, %v3661
              %3664 = vset.pattern.permute.xlu0 0
              %3665 = vperm.xlu0 %3664, %v3632
              %v3666 = vpop.permute.xlu0 %3665
              %3669 = vset.pattern.permute.xlu0 0
              %3670 = vperm.xlu0 %3669, %v3634
              %v3671 = vpop.permute.xlu0 %3670
              %3674 = vset.pattern.permute.xlu0 0
              %3675 = vperm.xlu0 %3674, %v3636
              %v3676 = vpop.permute.xlu0 %3675
              %3679 = vset.pattern.permute.xlu0 0
              %3680 = vperm.xlu0 %3679, %v3638
              %v3681 = vpop.permute.xlu0 %3680
              %3684 = vset.pattern.permute.xlu0 0
              %3685 = vperm.xlu0 %3684, %v3640
              %v3686 = vpop.permute.xlu0 %3685
              %3689 = vset.pattern.permute.xlu0 0
              %3690 = vperm.xlu0 %3689, %v3642
              %v3691 = vpop.permute.xlu0 %3690
              %3694 = vset.pattern.permute.xlu0 0
              %3695 = vperm.xlu0 %3694, %v3644
              %v3696 = vpop.permute.xlu0 %3695
              %3699 = vset.pattern.permute.xlu0 0
              %3700 = vperm.xlu0 %3699, %v3646
              %v3701 = vpop.permute.xlu0 %3700
              %3704 = vset.pattern.permute.xlu0 0
              %3705 = vperm.xlu0 %3704, %v3648
              %v3706 = vpop.permute.xlu0 %3705
              %3709 = vset.pattern.permute.xlu0 0
              %3710 = vperm.xlu0 %3709, %v3650
              %v3711 = vpop.permute.xlu0 %3710
              %3714 = vset.pattern.permute.xlu0 0
              %3715 = vperm.xlu0 %3714, %v3652
              %v3716 = vpop.permute.xlu0 %3715
              %3719 = vset.pattern.permute.xlu0 0
              %3720 = vperm.xlu0 %3719, %v3654
              %v3721 = vpop.permute.xlu0 %3720
              %3724 = vset.pattern.permute.xlu0 0
              %3725 = vperm.xlu0 %3724, %v3656
              %v3726 = vpop.permute.xlu0 %3725
              %3729 = vset.pattern.permute.xlu0 0
              %3730 = vperm.xlu0 %3729, %v3658
              %v3731 = vpop.permute.xlu0 %3730
              %3734 = vset.pattern.permute.xlu0 0
              %3735 = vperm.xlu0 %3734, %v3660
              %v3736 = vpop.permute.xlu0 %3735
              %3739 = vset.pattern.permute.xlu0 0
              %3740 = vperm.xlu0 %3739, %v3662
              %v3741 = vpop.permute.xlu0 %3740
              %v3743 = vmul.f32 %v3598, %v3666
              %v3744 = vmul.f32 %v3599, %v3671
              %v3745 = vmul.f32 %v3600, %v3676
              %v3746 = vmul.f32 %v3601, %v3681
              %v3747 = vmul.f32 %v3602, %v3686
              %v3748 = vmul.f32 %v3603, %v3691
              %v3749 = vmul.f32 %v3604, %v3696
              %v3750 = vmul.f32 %v3605, %v3701
              %v3751 = vmul.f32 %v3606, %v3706
              %v3752 = vmul.f32 %v3607, %v3711
              %v3753 = vmul.f32 %v3608, %v3716
              %v3754 = vmul.f32 %v3609, %v3721
              %v3755 = vmul.f32 %v3610, %v3726
              %v3756 = vmul.f32 %v3611, %v3731
              %v3757 = vmul.f32 %v3612, %v3736
              %v3758 = vmul.f32 %v3613, %v3741
              %3759 = vst [vmem:[%s3597] sm:$0xff] %v3743
              %3760 = vst [vmem:[%s3597 + $0x8] sm:$0xff] %v3744
              %3761 = vst [vmem:[%s3597 + $0x10] sm:$0xff] %v3745
              %3762 = vst [vmem:[%s3597 + $0x18] sm:$0xff] %v3746
              %3763 = vst [vmem:[%s3597 + $0x20] sm:$0xff] %v3747
              %3764 = vst [vmem:[%s3597 + $0x28] sm:$0xff] %v3748
              %3765 = vst [vmem:[%s3597 + $0x30] sm:$0xff] %v3749
              %3766 = vst [vmem:[%s3597 + $0x38] sm:$0xff] %v3750
              %3767 = vst [vmem:[%s3597 + $0x40] sm:$0xff] %v3751
              %3768 = vst [vmem:[%s3597 + $0x48] sm:$0xff] %v3752
              %3769 = vst [vmem:[%s3597 + $0x50] sm:$0xff] %v3753
              %3770 = vst [vmem:[%s3597 + $0x58] sm:$0xff] %v3754
              %3771 = vst [vmem:[%s3597 + $0x60] sm:$0xff] %v3755
              %3772 = vst [vmem:[%s3597 + $0x68] sm:$0xff] %v3756
              %3773 = vst [vmem:[%s3597 + $0x70] sm:$0xff] %v3757
              %3774 = vst [vmem:[%s3597 + $0x78] sm:$0xff] %v3758
            $region96: #{tpu_custom_call.1} parent=90 // loop_footer
              %s3595 = sadd.s32 1, %s3591
            $region97: #{tpu_custom_call.1} parent=90 // loop_footer_branch
              %3590 = sbr.rel target = $region93
            $region98: #{tpu_custom_call.1} parent=90 // loop_exit
              _
          $region91: #{tpu_custom_call.1} parent=86 // pred_fallthru
            _
        $region87: #{tpu_custom_call.1} parent=55 // pred_fallthru
          _
        // Predicated region
        $region99: #{tpu_custom_call.1} parent=55 // pred_check
          %p3775 = pneg %p251
        $region100: #{tpu_custom_call.1} parent=55 // pred_check_branch
          %3777 = sbr.rel (%p3775) target = $region102
        $region101: #{tpu_custom_call.1} parent=55 // pred_region
          %s3779 = ssub.s32 8192, 8192
          %3780 = vsyncadd [#allocation5], %s3779
          %s3781 = sshll.u32 [#allocation8], 4
          %s3782 = int_to_ptr.vmem [resolvable:$true] %s3781
          %3787 = dma.vmem_to_hbm [thread:$0]  %s3782, 8192, %s9, [#allocation5], 128, 128, 8
        $region102: #{tpu_custom_call.1} parent=55 // pred_fallthru
          _
        // Predicated region
        $region103: #{tpu_custom_call.1} parent=55 // pred_check
          %p3788 = pneg %p251
        $region104: #{tpu_custom_call.1} parent=55 // pred_check_branch
          %3790 = sbr.rel (%p3788) target = $region106
        $region105: #{tpu_custom_call.1} parent=55 // pred_region
          %3791 = dma.done [#allocation5], 8192
        $region106: #{tpu_custom_call.1} parent=55 // pred_fallthru
          _
      $region56: #{tpu_custom_call.1} parent=5 // pred_fallthru
        _
      %p3792 = scmp.le.s32.totalorder 2, %s18
      // Predicated region
      $region107: #{tpu_custom_call.1} parent=5 // pred_check
        %p3793 = pneg %p3792
      $region108: #{tpu_custom_call.1} parent=5 // pred_check_branch
        %3795 = sbr.rel (%p3793) target = $region110
      $region109: #{tpu_custom_call.1} parent=5 // pred_region
        %s3796 = ssub.s32 %s18, 2
      $region110: #{tpu_custom_call.1} parent=5 // pred_fallthru
        _
    $region6: #{tpu_custom_call.1} parent=1 // loop_footer
      %s22 = sadd.s32 1, %s18
    $region7: #{tpu_custom_call.1} parent=1 // loop_footer_branch
      %17 = sbr.rel target = $region3
    $region8: #{tpu_custom_call.1} parent=1 // loop_exit
      _
    %3797 = vsyncpa [#allocation4], 1
    %s3798 = scalar_lea.sflag [#allocation4], 1
    %3799 = vsyncpa %s3798, 1
    %3800 = vsyncpa [#allocation7], 1
    %3801 = vsyncpa [#allocation5], 1
    %s3802 = scalar_lea.sflag [#allocation5], 1
    %3803 = vsyncpa %s3802, 1

</llo_original>
